<compile_context>
chip_gen: v7x
topology: tpu7x:2x2x1
jax: 0.10.0
libtpu: 0.0.40
codegen_flags: <defaults>
</compile_context>

<pallas_src>
import functools

import jax
import jax.numpy as jnp
from jax.experimental import pallas as pl
from jax.experimental.pallas import tpu as pltpu


def _embed_gather_kernel(tokens_per_step,
                         ids_ref,      # SMEM (Np,) int32   (scalar prefetch)
                         table_hbm,    # HBM  (V, H)        (pl.ANY, manual DMA)
                         o_ref,        # VMEM (tokens_per_step, H) output block
                         row_buf,      # VMEM (2, tokens_per_step, H) double buffer
                         sems):        # DMA semaphores (2, tokens_per_step)
    i = pl.program_id(0)
    j = pl.program_id(1)
    nj = pl.num_programs(1)
    slot = j % 2

    def start_block(jj, s):
        # Issue one row-gather DMA per token of inner block `jj` into slot `s`.
        base = (i * nj + jj) * tokens_per_step
        for t in range(tokens_per_step):          # static, fully unrolled
            tok = ids_ref[base + t]               # dynamic scalar read (SMEM)
            pltpu.make_async_copy(table_hbm.at[tok],     # (H,) row in HBM
                                  row_buf.at[s, t],      # (H,) row in VMEM
                                  sems.at[s, t]).start()

    # Prime the pipeline at the start of every inner pass.  Megacore-safe:
    # whichever core picks up an `i` always starts its inner loop at j == 0.
    @pl.when(j == 0)
    def _():
        start_block(0, 0)

    # Prefetch the next inner block into the other slot while the current one
    # is waited on / stored (hides DMA completion latency).
    @pl.when(j + 1 < nj)
    def _():
        start_block(j + 1, 1 - slot)

    # Wait for all rows of the current block (descriptor only needs shapes).
    for t in range(tokens_per_step):
        pltpu.make_async_copy(table_hbm.at[0],
                              row_buf.at[slot, t],
                              sems.at[slot, t]).wait()

    # Single lane-dense (tokens_per_step, H) store into the pipelined output.
    o_ref[...] = row_buf[slot]


def token_embedding(token_ids, embed_table, *, tokens_per_step=32, inner_steps=8):
    """token_ids: (B, S) int.  embed_table: (V, H) float.  Returns (B, S, H)."""
    B, S = token_ids.shape
    V, H = embed_table.shape
    N = B * S

    n_blocks = (N + tokens_per_step - 1) // tokens_per_step
    n_inner = min(inner_steps, n_blocks)
    n_outer = (n_blocks + n_inner - 1) // n_inner
    total_blocks = n_outer * n_inner
    Np = total_blocks * tokens_per_step

    flat_ids = token_ids.reshape(N).astype(jnp.int32)
    if Np != N:
        # Pad with token 0 (a valid row); padded rows are sliced away below.
        flat_ids = jnp.pad(flat_ids, (0, Np - N))

    kernel = functools.partial(_embed_gather_kernel, tokens_per_step)

    out_flat = pl.pallas_call(
        kernel,
        out_shape=jax.ShapeDtypeStruct((Np, H), embed_table.dtype),
        grid_spec=pltpu.PrefetchScalarGridSpec(
            num_scalar_prefetch=1,                        # flat_ids -> SMEM
            grid=(n_outer, n_inner),
            in_specs=[pl.BlockSpec(memory_space=pl.ANY)],  # table stays in HBM
            out_specs=pl.BlockSpec(
                (tokens_per_step, H),
                lambda i, j, ids: (i * n_inner + j, 0)),
            scratch_shapes=[
                pltpu.VMEM((2, tokens_per_step, H), embed_table.dtype),
                pltpu.SemaphoreType.DMA((2, tokens_per_step)),
            ]),
        compiler_params=pltpu.CompilerParams(
            dimension_semantics=("parallel", "arbitrary")),
    )(flat_ids, embed_table)

    return out_flat[:N].reshape(B, S, H)


def reference_token_embedding(token_ids, embed_table):
    """Pure-JAX mirror of nn.Embedding lookup."""
    return embed_table[token_ids]


if __name__ == "__main__":
    # Small shapes consistent with the module's (batch, sentence) forward.
    # H=128 keeps the output lane-dense; S=40 exercises both multiple inner
    # pipeline steps (j = 0..2) and the tail-padding path.
    B, S = 2, 40
    vocab_size, hidden_size = 1000, 128

    key = jax.random.PRNGKey(0)
    k_tab, k_ids = jax.random.split(key)

    embed_table = 0.02 * jax.random.normal(k_tab, (vocab_size, hidden_size),
                                           jnp.float32)
    token_ids = jax.random.randint(k_ids, (B, S), 0, vocab_size,
                                   dtype=jnp.int32)

    out = token_embedding(token_ids, embed_table)
    out = jax.block_until_ready(out)

    ref = reference_token_embedding(token_ids, embed_table)
    assert out.shape == (B, S, hidden_size)
    assert jnp.allclose(out, ref), (
        f"max abs err = {jnp.max(jnp.abs(out - ref))}")

    print("KERNEL_OK")
</pallas_src>

<mosaic_0001>
module attributes {stable_mosaic.version = 11 : i64} {
  func.func @_embed_gather_kernel(%arg0: i32, %arg1: i32, %arg2: memref<96xi32, #tpu.memory_space<smem>>, %arg3: memref<1000x128xf32, #tpu.memory_space<any>>, %arg4: memref<32x128xf32, #tpu.memory_space<vmem>>, %arg5: memref<2x32x128xf32, #tpu.memory_space<vmem>>, %arg6: memref<2x32x!tpu.dma_semaphore, #tpu.memory_space<semaphore_mem>>) attributes {dimension_semantics = [#tpu.dimension_semantics<parallel>, #tpu.dimension_semantics<arbitrary>], iteration_bounds = array<i64: 1, 3>, scalar_prefetch = 1 : i64, scratch_operands = 2 : i64, tpu.core_type = #tpu.core_type<tc>, window_params = [{}, {transform_indices = @transform_1, window_bounds = array<i64: 32, 128>}]} {
    %c2_i32 = arith.constant 2 : i32
    %c0_i32 = arith.constant 0 : i32
    %0 = arith.cmpi eq, %c2_i32, %c0_i32 : i32
    %c1_i32 = arith.constant 1 : i32
    %1 = arith.select %0, %c1_i32, %c2_i32 : i32
    %2 = arith.remsi %arg1, %1 : i32
    %c0_i32_0 = arith.constant 0 : i32
    %3 = arith.cmpi ne, %2, %c0_i32_0 : i32
    %c0_i32_1 = arith.constant 0 : i32
    %4 = arith.cmpi slt, %2, %c0_i32_1 : i32
    %c0_i32_2 = arith.constant 0 : i32
    %5 = arith.cmpi slt, %1, %c0_i32_2 : i32
    %6 = arith.xori %4, %5 : i1
    %7 = arith.andi %6, %3 : i1
    %8 = arith.addi %2, %1 : i32
    %9 = arith.select %7, %8, %2 : i32
    %c0_i32_3 = arith.constant 0 : i32
    %10 = arith.cmpi eq, %arg1, %c0_i32_3 : i32
    %11 = arith.extui %10 : i1 to i32
    %c0_i32_4 = arith.constant 0 : i32
    %12 = arith.cmpi ne, %11, %c0_i32_4 : i32
    scf.if %12 {
      %c3_i32_142 = arith.constant 3 : i32
      %213 = arith.muli %arg0, %c3_i32_142 : i32
      %c0_i32_143 = arith.constant 0 : i32
      %214 = arith.addi %213, %c0_i32_143 : i32
      %c32_i32 = arith.constant 32 : i32
      %215 = arith.muli %214, %c32_i32 : i32
      %c0_i32_144 = arith.constant 0 : i32
      %216 = arith.addi %215, %c0_i32_144 : i32
      %217 = arith.index_cast %216 : i32 to index
      %218 = memref.load %arg2[%217] : memref<96xi32, #tpu.memory_space<smem>>
      %c0_i32_145 = arith.constant 0 : i32
      %c0_i32_146 = arith.constant 0 : i32
      %c0_i32_147 = arith.constant 0 : i32
      %c0_i32_148 = arith.constant 0 : i32
      %c0_i32_149 = arith.constant 0 : i32
      %219 = tpu.memref_slice %arg3[%218, %c0_i32_149] : memref<1000x128xf32, #tpu.memory_space<any>> -> memref<1x128xf32, #tpu.memory_space<any>>
      %220 = tpu.memref_squeeze %219 : memref<1x128xf32, #tpu.memory_space<any>> -> memref<128xf32, #tpu.memory_space<any>>
      %c0_i32_150 = arith.constant 0 : i32
      %221 = tpu.memref_slice %arg5[%c0_i32_145, %c0_i32_146, %c0_i32_150] : memref<2x32x128xf32, #tpu.memory_space<vmem>> -> memref<1x1x128xf32, #tpu.memory_space<vmem>>
      %222 = tpu.memref_squeeze %221 : memref<1x1x128xf32, #tpu.memory_space<vmem>> -> memref<128xf32, #tpu.memory_space<vmem>>
      %223 = tpu.memref_slice %arg6[%c0_i32_147, %c0_i32_148] : memref<2x32x!tpu.dma_semaphore, #tpu.memory_space<semaphore_mem>> -> memref<1x1x!tpu.dma_semaphore, #tpu.memory_space<semaphore_mem>>
      %224 = tpu.memref_squeeze %223 : memref<1x1x!tpu.dma_semaphore, #tpu.memory_space<semaphore_mem>> -> memref<!tpu.dma_semaphore, #tpu.memory_space<semaphore_mem>>
      tpu.enqueue_dma source(%220 : memref<128xf32, #tpu.memory_space<any>>) target(%222 : memref<128xf32, #tpu.memory_space<vmem>>) target_semaphore(%224 : memref<!tpu.dma_semaphore, #tpu.memory_space<semaphore_mem>>)
      %c1_i32_151 = arith.constant 1 : i32
      %225 = arith.addi %215, %c1_i32_151 : i32
      %226 = arith.index_cast %225 : i32 to index
      %227 = memref.load %arg2[%226] : memref<96xi32, #tpu.memory_space<smem>>
      %c0_i32_152 = arith.constant 0 : i32
      %c1_i32_153 = arith.constant 1 : i32
      %c0_i32_154 = arith.constant 0 : i32
      %c1_i32_155 = arith.constant 1 : i32
      %c0_i32_156 = arith.constant 0 : i32
      %228 = tpu.memref_slice %arg3[%227, %c0_i32_156] : memref<1000x128xf32, #tpu.memory_space<any>> -> memref<1x128xf32, #tpu.memory_space<any>>
      %229 = tpu.memref_squeeze %228 : memref<1x128xf32, #tpu.memory_space<any>> -> memref<128xf32, #tpu.memory_space<any>>
      %c0_i32_157 = arith.constant 0 : i32
      %230 = tpu.memref_slice %arg5[%c0_i32_152, %c1_i32_153, %c0_i32_157] : memref<2x32x128xf32, #tpu.memory_space<vmem>> -> memref<1x1x128xf32, #tpu.memory_space<vmem>>
      %231 = tpu.memref_squeeze %230 : memref<1x1x128xf32, #tpu.memory_space<vmem>> -> memref<128xf32, #tpu.memory_space<vmem>>
      %232 = tpu.memref_slice %arg6[%c0_i32_154, %c1_i32_155] : memref<2x32x!tpu.dma_semaphore, #tpu.memory_space<semaphore_mem>> -> memref<1x1x!tpu.dma_semaphore, #tpu.memory_space<semaphore_mem>>
      %233 = tpu.memref_squeeze %232 : memref<1x1x!tpu.dma_semaphore, #tpu.memory_space<semaphore_mem>> -> memref<!tpu.dma_semaphore, #tpu.memory_space<semaphore_mem>>
      tpu.enqueue_dma source(%229 : memref<128xf32, #tpu.memory_space<any>>) target(%231 : memref<128xf32, #tpu.memory_space<vmem>>) target_semaphore(%233 : memref<!tpu.dma_semaphore, #tpu.memory_space<semaphore_mem>>)
      %c2_i32_158 = arith.constant 2 : i32
      %234 = arith.addi %215, %c2_i32_158 : i32
      %235 = arith.index_cast %234 : i32 to index
      %236 = memref.load %arg2[%235] : memref<96xi32, #tpu.memory_space<smem>>
      %c0_i32_159 = arith.constant 0 : i32
      %c2_i32_160 = arith.constant 2 : i32
      %c0_i32_161 = arith.constant 0 : i32
      %c2_i32_162 = arith.constant 2 : i32
      %c0_i32_163 = arith.constant 0 : i32
      %237 = tpu.memref_slice %arg3[%236, %c0_i32_163] : memref<1000x128xf32, #tpu.memory_space<any>> -> memref<1x128xf32, #tpu.memory_space<any>>
      %238 = tpu.memref_squeeze %237 : memref<1x128xf32, #tpu.memory_space<any>> -> memref<128xf32, #tpu.memory_space<any>>
      %c0_i32_164 = arith.constant 0 : i32
      %239 = tpu.memref_slice %arg5[%c0_i32_159, %c2_i32_160, %c0_i32_164] : memref<2x32x128xf32, #tpu.memory_space<vmem>> -> memref<1x1x128xf32, #tpu.memory_space<vmem>>
      %240 = tpu.memref_squeeze %239 : memref<1x1x128xf32, #tpu.memory_space<vmem>> -> memref<128xf32, #tpu.memory_space<vmem>>
      %241 = tpu.memref_slice %arg6[%c0_i32_161, %c2_i32_162] : memref<2x32x!tpu.dma_semaphore, #tpu.memory_space<semaphore_mem>> -> memref<1x1x!tpu.dma_semaphore, #tpu.memory_space<semaphore_mem>>
      %242 = tpu.memref_squeeze %241 : memref<1x1x!tpu.dma_semaphore, #tpu.memory_space<semaphore_mem>> -> memref<!tpu.dma_semaphore, #tpu.memory_space<semaphore_mem>>
      tpu.enqueue_dma source(%238 : memref<128xf32, #tpu.memory_space<any>>) target(%240 : memref<128xf32, #tpu.memory_space<vmem>>) target_semaphore(%242 : memref<!tpu.dma_semaphore, #tpu.memory_space<semaphore_mem>>)
      %c3_i32_165 = arith.constant 3 : i32
      %243 = arith.addi %215, %c3_i32_165 : i32
      %244 = arith.index_cast %243 : i32 to index
      %245 = memref.load %arg2[%244] : memref<96xi32, #tpu.memory_space<smem>>
      %c0_i32_166 = arith.constant 0 : i32
      %c3_i32_167 = arith.constant 3 : i32
      %c0_i32_168 = arith.constant 0 : i32
      %c3_i32_169 = arith.constant 3 : i32
      %c0_i32_170 = arith.constant 0 : i32
      %246 = tpu.memref_slice %arg3[%245, %c0_i32_170] : memref<1000x128xf32, #tpu.memory_space<any>> -> memref<1x128xf32, #tpu.memory_space<any>>
      %247 = tpu.memref_squeeze %246 : memref<1x128xf32, #tpu.memory_space<any>> -> memref<128xf32, #tpu.memory_space<any>>
      %c0_i32_171 = arith.constant 0 : i32
      %248 = tpu.memref_slice %arg5[%c0_i32_166, %c3_i32_167, %c0_i32_171] : memref<2x32x128xf32, #tpu.memory_space<vmem>> -> memref<1x1x128xf32, #tpu.memory_space<vmem>>
      %249 = tpu.memref_squeeze %248 : memref<1x1x128xf32, #tpu.memory_space<vmem>> -> memref<128xf32, #tpu.memory_space<vmem>>
      %250 = tpu.memref_slice %arg6[%c0_i32_168, %c3_i32_169] : memref<2x32x!tpu.dma_semaphore, #tpu.memory_space<semaphore_mem>> -> memref<1x1x!tpu.dma_semaphore, #tpu.memory_space<semaphore_mem>>
      %251 = tpu.memref_squeeze %250 : memref<1x1x!tpu.dma_semaphore, #tpu.memory_space<semaphore_mem>> -> memref<!tpu.dma_semaphore, #tpu.memory_space<semaphore_mem>>
      tpu.enqueue_dma source(%247 : memref<128xf32, #tpu.memory_space<any>>) target(%249 : memref<128xf32, #tpu.memory_space<vmem>>) target_semaphore(%251 : memref<!tpu.dma_semaphore, #tpu.memory_space<semaphore_mem>>)
      %c4_i32_172 = arith.constant 4 : i32
      %252 = arith.addi %215, %c4_i32_172 : i32
      %253 = arith.index_cast %252 : i32 to index
      %254 = memref.load %arg2[%253] : memref<96xi32, #tpu.memory_space<smem>>
      %c0_i32_173 = arith.constant 0 : i32
      %c4_i32_174 = arith.constant 4 : i32
      %c0_i32_175 = arith.constant 0 : i32
      %c4_i32_176 = arith.constant 4 : i32
      %c0_i32_177 = arith.constant 0 : i32
      %255 = tpu.memref_slice %arg3[%254, %c0_i32_177] : memref<1000x128xf32, #tpu.memory_space<any>> -> memref<1x128xf32, #tpu.memory_space<any>>
      %256 = tpu.memref_squeeze %255 : memref<1x128xf32, #tpu.memory_space<any>> -> memref<128xf32, #tpu.memory_space<any>>
      %c0_i32_178 = arith.constant 0 : i32
      %257 = tpu.memref_slice %arg5[%c0_i32_173, %c4_i32_174, %c0_i32_178] : memref<2x32x128xf32, #tpu.memory_space<vmem>> -> memref<1x1x128xf32, #tpu.memory_space<vmem>>
      %258 = tpu.memref_squeeze %257 : memref<1x1x128xf32, #tpu.memory_space<vmem>> -> memref<128xf32, #tpu.memory_space<vmem>>
      %259 = tpu.memref_slice %arg6[%c0_i32_175, %c4_i32_176] : memref<2x32x!tpu.dma_semaphore, #tpu.memory_space<semaphore_mem>> -> memref<1x1x!tpu.dma_semaphore, #tpu.memory_space<semaphore_mem>>
      %260 = tpu.memref_squeeze %259 : memref<1x1x!tpu.dma_semaphore, #tpu.memory_space<semaphore_mem>> -> memref<!tpu.dma_semaphore, #tpu.memory_space<semaphore_mem>>
      tpu.enqueue_dma source(%256 : memref<128xf32, #tpu.memory_space<any>>) target(%258 : memref<128xf32, #tpu.memory_space<vmem>>) target_semaphore(%260 : memref<!tpu.dma_semaphore, #tpu.memory_space<semaphore_mem>>)
      %c5_i32_179 = arith.constant 5 : i32
      %261 = arith.addi %215, %c5_i32_179 : i32
      %262 = arith.index_cast %261 : i32 to index
      %263 = memref.load %arg2[%262] : memref<96xi32, #tpu.memory_space<smem>>
      %c0_i32_180 = arith.constant 0 : i32
      %c5_i32_181 = arith.constant 5 : i32
      %c0_i32_182 = arith.constant 0 : i32
      %c5_i32_183 = arith.constant 5 : i32
      %c0_i32_184 = arith.constant 0 : i32
      %264 = tpu.memref_slice %arg3[%263, %c0_i32_184] : memref<1000x128xf32, #tpu.memory_space<any>> -> memref<1x128xf32, #tpu.memory_space<any>>
      %265 = tpu.memref_squeeze %264 : memref<1x128xf32, #tpu.memory_space<any>> -> memref<128xf32, #tpu.memory_space<any>>
      %c0_i32_185 = arith.constant 0 : i32
      %266 = tpu.memref_slice %arg5[%c0_i32_180, %c5_i32_181, %c0_i32_185] : memref<2x32x128xf32, #tpu.memory_space<vmem>> -> memref<1x1x128xf32, #tpu.memory_space<vmem>>
      %267 = tpu.memref_squeeze %266 : memref<1x1x128xf32, #tpu.memory_space<vmem>> -> memref<128xf32, #tpu.memory_space<vmem>>
      %268 = tpu.memref_slice %arg6[%c0_i32_182, %c5_i32_183] : memref<2x32x!tpu.dma_semaphore, #tpu.memory_space<semaphore_mem>> -> memref<1x1x!tpu.dma_semaphore, #tpu.memory_space<semaphore_mem>>
      %269 = tpu.memref_squeeze %268 : memref<1x1x!tpu.dma_semaphore, #tpu.memory_space<semaphore_mem>> -> memref<!tpu.dma_semaphore, #tpu.memory_space<semaphore_mem>>
      tpu.enqueue_dma source(%265 : memref<128xf32, #tpu.memory_space<any>>) target(%267 : memref<128xf32, #tpu.memory_space<vmem>>) target_semaphore(%269 : memref<!tpu.dma_semaphore, #tpu.memory_space<semaphore_mem>>)
      %c6_i32_186 = arith.constant 6 : i32
      %270 = arith.addi %215, %c6_i32_186 : i32
      %271 = arith.index_cast %270 : i32 to index
      %272 = memref.load %arg2[%271] : memref<96xi32, #tpu.memory_space<smem>>
      %c0_i32_187 = arith.constant 0 : i32
      %c6_i32_188 = arith.constant 6 : i32
      %c0_i32_189 = arith.constant 0 : i32
      %c6_i32_190 = arith.constant 6 : i32
      %c0_i32_191 = arith.constant 0 : i32
      %273 = tpu.memref_slice %arg3[%272, %c0_i32_191] : memref<1000x128xf32, #tpu.memory_space<any>> -> memref<1x128xf32, #tpu.memory_space<any>>
      %274 = tpu.memref_squeeze %273 : memref<1x128xf32, #tpu.memory_space<any>> -> memref<128xf32, #tpu.memory_space<any>>
      %c0_i32_192 = arith.constant 0 : i32
      %275 = tpu.memref_slice %arg5[%c0_i32_187, %c6_i32_188, %c0_i32_192] : memref<2x32x128xf32, #tpu.memory_space<vmem>> -> memref<1x1x128xf32, #tpu.memory_space<vmem>>
      %276 = tpu.memref_squeeze %275 : memref<1x1x128xf32, #tpu.memory_space<vmem>> -> memref<128xf32, #tpu.memory_space<vmem>>
      %277 = tpu.memref_slice %arg6[%c0_i32_189, %c6_i32_190] : memref<2x32x!tpu.dma_semaphore, #tpu.memory_space<semaphore_mem>> -> memref<1x1x!tpu.dma_semaphore, #tpu.memory_space<semaphore_mem>>
      %278 = tpu.memref_squeeze %277 : memref<1x1x!tpu.dma_semaphore, #tpu.memory_space<semaphore_mem>> -> memref<!tpu.dma_semaphore, #tpu.memory_space<semaphore_mem>>
      tpu.enqueue_dma source(%274 : memref<128xf32, #tpu.memory_space<any>>) target(%276 : memref<128xf32, #tpu.memory_space<vmem>>) target_semaphore(%278 : memref<!tpu.dma_semaphore, #tpu.memory_space<semaphore_mem>>)
      %c7_i32_193 = arith.constant 7 : i32
      %279 = arith.addi %215, %c7_i32_193 : i32
      %280 = arith.index_cast %279 : i32 to index
      %281 = memref.load %arg2[%280] : memref<96xi32, #tpu.memory_space<smem>>
      %c0_i32_194 = arith.constant 0 : i32
      %c7_i32_195 = arith.constant 7 : i32
      %c0_i32_196 = arith.constant 0 : i32
      %c7_i32_197 = arith.constant 7 : i32
      %c0_i32_198 = arith.constant 0 : i32
      %282 = tpu.memref_slice %arg3[%281, %c0_i32_198] : memref<1000x128xf32, #tpu.memory_space<any>> -> memref<1x128xf32, #tpu.memory_space<any>>
      %283 = tpu.memref_squeeze %282 : memref<1x128xf32, #tpu.memory_space<any>> -> memref<128xf32, #tpu.memory_space<any>>
      %c0_i32_199 = arith.constant 0 : i32
      %284 = tpu.memref_slice %arg5[%c0_i32_194, %c7_i32_195, %c0_i32_199] : memref<2x32x128xf32, #tpu.memory_space<vmem>> -> memref<1x1x128xf32, #tpu.memory_space<vmem>>
      %285 = tpu.memref_squeeze %284 : memref<1x1x128xf32, #tpu.memory_space<vmem>> -> memref<128xf32, #tpu.memory_space<vmem>>
      %286 = tpu.memref_slice %arg6[%c0_i32_196, %c7_i32_197] : memref<2x32x!tpu.dma_semaphore, #tpu.memory_space<semaphore_mem>> -> memref<1x1x!tpu.dma_semaphore, #tpu.memory_space<semaphore_mem>>
      %287 = tpu.memref_squeeze %286 : memref<1x1x!tpu.dma_semaphore, #tpu.memory_space<semaphore_mem>> -> memref<!tpu.dma_semaphore, #tpu.memory_space<semaphore_mem>>
      tpu.enqueue_dma source(%283 : memref<128xf32, #tpu.memory_space<any>>) target(%285 : memref<128xf32, #tpu.memory_space<vmem>>) target_semaphore(%287 : memref<!tpu.dma_semaphore, #tpu.memory_space<semaphore_mem>>)
      %c8_i32_200 = arith.constant 8 : i32
      %288 = arith.addi %215, %c8_i32_200 : i32
      %289 = arith.index_cast %288 : i32 to index
      %290 = memref.load %arg2[%289] : memref<96xi32, #tpu.memory_space<smem>>
      %c0_i32_201 = arith.constant 0 : i32
      %c8_i32_202 = arith.constant 8 : i32
      %c0_i32_203 = arith.constant 0 : i32
      %c8_i32_204 = arith.constant 8 : i32
      %c0_i32_205 = arith.constant 0 : i32
      %291 = tpu.memref_slice %arg3[%290, %c0_i32_205] : memref<1000x128xf32, #tpu.memory_space<any>> -> memref<1x128xf32, #tpu.memory_space<any>>
      %292 = tpu.memref_squeeze %291 : memref<1x128xf32, #tpu.memory_space<any>> -> memref<128xf32, #tpu.memory_space<any>>
      %c0_i32_206 = arith.constant 0 : i32
      %293 = tpu.memref_slice %arg5[%c0_i32_201, %c8_i32_202, %c0_i32_206] : memref<2x32x128xf32, #tpu.memory_space<vmem>> -> memref<1x1x128xf32, #tpu.memory_space<vmem>>
      %294 = tpu.memref_squeeze %293 : memref<1x1x128xf32, #tpu.memory_space<vmem>> -> memref<128xf32, #tpu.memory_space<vmem>>
      %295 = tpu.memref_slice %arg6[%c0_i32_203, %c8_i32_204] : memref<2x32x!tpu.dma_semaphore, #tpu.memory_space<semaphore_mem>> -> memref<1x1x!tpu.dma_semaphore, #tpu.memory_space<semaphore_mem>>
      %296 = tpu.memref_squeeze %295 : memref<1x1x!tpu.dma_semaphore, #tpu.memory_space<semaphore_mem>> -> memref<!tpu.dma_semaphore, #tpu.memory_space<semaphore_mem>>
      tpu.enqueue_dma source(%292 : memref<128xf32, #tpu.memory_space<any>>) target(%294 : memref<128xf32, #tpu.memory_space<vmem>>) target_semaphore(%296 : memref<!tpu.dma_semaphore, #tpu.memory_space<semaphore_mem>>)
      %c9_i32_207 = arith.constant 9 : i32
      %297 = arith.addi %215, %c9_i32_207 : i32
      %298 = arith.index_cast %297 : i32 to index
      %299 = memref.load %arg2[%298] : memref<96xi32, #tpu.memory_space<smem>>
      %c0_i32_208 = arith.constant 0 : i32
      %c9_i32_209 = arith.constant 9 : i32
      %c0_i32_210 = arith.constant 0 : i32
      %c9_i32_211 = arith.constant 9 : i32
      %c0_i32_212 = arith.constant 0 : i32
      %300 = tpu.memref_slice %arg3[%299, %c0_i32_212] : memref<1000x128xf32, #tpu.memory_space<any>> -> memref<1x128xf32, #tpu.memory_space<any>>
      %301 = tpu.memref_squeeze %300 : memref<1x128xf32, #tpu.memory_space<any>> -> memref<128xf32, #tpu.memory_space<any>>
      %c0_i32_213 = arith.constant 0 : i32
      %302 = tpu.memref_slice %arg5[%c0_i32_208, %c9_i32_209, %c0_i32_213] : memref<2x32x128xf32, #tpu.memory_space<vmem>> -> memref<1x1x128xf32, #tpu.memory_space<vmem>>
      %303 = tpu.memref_squeeze %302 : memref<1x1x128xf32, #tpu.memory_space<vmem>> -> memref<128xf32, #tpu.memory_space<vmem>>
      %304 = tpu.memref_slice %arg6[%c0_i32_210, %c9_i32_211] : memref<2x32x!tpu.dma_semaphore, #tpu.memory_space<semaphore_mem>> -> memref<1x1x!tpu.dma_semaphore, #tpu.memory_space<semaphore_mem>>
      %305 = tpu.memref_squeeze %304 : memref<1x1x!tpu.dma_semaphore, #tpu.memory_space<semaphore_mem>> -> memref<!tpu.dma_semaphore, #tpu.memory_space<semaphore_mem>>
      tpu.enqueue_dma source(%301 : memref<128xf32, #tpu.memory_space<any>>) target(%303 : memref<128xf32, #tpu.memory_space<vmem>>) target_semaphore(%305 : memref<!tpu.dma_semaphore, #tpu.memory_space<semaphore_mem>>)
      %c10_i32_214 = arith.constant 10 : i32
      %306 = arith.addi %215, %c10_i32_214 : i32
      %307 = arith.index_cast %306 : i32 to index
      %308 = memref.load %arg2[%307] : memref<96xi32, #tpu.memory_space<smem>>
      %c0_i32_215 = arith.constant 0 : i32
      %c10_i32_216 = arith.constant 10 : i32
      %c0_i32_217 = arith.constant 0 : i32
      %c10_i32_218 = arith.constant 10 : i32
      %c0_i32_219 = arith.constant 0 : i32
      %309 = tpu.memref_slice %arg3[%308, %c0_i32_219] : memref<1000x128xf32, #tpu.memory_space<any>> -> memref<1x128xf32, #tpu.memory_space<any>>
      %310 = tpu.memref_squeeze %309 : memref<1x128xf32, #tpu.memory_space<any>> -> memref<128xf32, #tpu.memory_space<any>>
      %c0_i32_220 = arith.constant 0 : i32
      %311 = tpu.memref_slice %arg5[%c0_i32_215, %c10_i32_216, %c0_i32_220] : memref<2x32x128xf32, #tpu.memory_space<vmem>> -> memref<1x1x128xf32, #tpu.memory_space<vmem>>
      %312 = tpu.memref_squeeze %311 : memref<1x1x128xf32, #tpu.memory_space<vmem>> -> memref<128xf32, #tpu.memory_space<vmem>>
      %313 = tpu.memref_slice %arg6[%c0_i32_217, %c10_i32_218] : memref<2x32x!tpu.dma_semaphore, #tpu.memory_space<semaphore_mem>> -> memref<1x1x!tpu.dma_semaphore, #tpu.memory_space<semaphore_mem>>
      %314 = tpu.memref_squeeze %313 : memref<1x1x!tpu.dma_semaphore, #tpu.memory_space<semaphore_mem>> -> memref<!tpu.dma_semaphore, #tpu.memory_space<semaphore_mem>>
      tpu.enqueue_dma source(%310 : memref<128xf32, #tpu.memory_space<any>>) target(%312 : memref<128xf32, #tpu.memory_space<vmem>>) target_semaphore(%314 : memref<!tpu.dma_semaphore, #tpu.memory_space<semaphore_mem>>)
      %c11_i32_221 = arith.constant 11 : i32
      %315 = arith.addi %215, %c11_i32_221 : i32
      %316 = arith.index_cast %315 : i32 to index
      %317 = memref.load %arg2[%316] : memref<96xi32, #tpu.memory_space<smem>>
      %c0_i32_222 = arith.constant 0 : i32
      %c11_i32_223 = arith.constant 11 : i32
      %c0_i32_224 = arith.constant 0 : i32
      %c11_i32_225 = arith.constant 11 : i32
      %c0_i32_226 = arith.constant 0 : i32
      %318 = tpu.memref_slice %arg3[%317, %c0_i32_226] : memref<1000x128xf32, #tpu.memory_space<any>> -> memref<1x128xf32, #tpu.memory_space<any>>
      %319 = tpu.memref_squeeze %318 : memref<1x128xf32, #tpu.memory_space<any>> -> memref<128xf32, #tpu.memory_space<any>>
      %c0_i32_227 = arith.constant 0 : i32
      %320 = tpu.memref_slice %arg5[%c0_i32_222, %c11_i32_223, %c0_i32_227] : memref<2x32x128xf32, #tpu.memory_space<vmem>> -> memref<1x1x128xf32, #tpu.memory_space<vmem>>
      %321 = tpu.memref_squeeze %320 : memref<1x1x128xf32, #tpu.memory_space<vmem>> -> memref<128xf32, #tpu.memory_space<vmem>>
      %322 = tpu.memref_slice %arg6[%c0_i32_224, %c11_i32_225] : memref<2x32x!tpu.dma_semaphore, #tpu.memory_space<semaphore_mem>> -> memref<1x1x!tpu.dma_semaphore, #tpu.memory_space<semaphore_mem>>
      %323 = tpu.memref_squeeze %322 : memref<1x1x!tpu.dma_semaphore, #tpu.memory_space<semaphore_mem>> -> memref<!tpu.dma_semaphore, #tpu.memory_space<semaphore_mem>>
      tpu.enqueue_dma source(%319 : memref<128xf32, #tpu.memory_space<any>>) target(%321 : memref<128xf32, #tpu.memory_space<vmem>>) target_semaphore(%323 : memref<!tpu.dma_semaphore, #tpu.memory_space<semaphore_mem>>)
      %c12_i32_228 = arith.constant 12 : i32
      %324 = arith.addi %215, %c12_i32_228 : i32
      %325 = arith.index_cast %324 : i32 to index
      %326 = memref.load %arg2[%325] : memref<96xi32, #tpu.memory_space<smem>>
      %c0_i32_229 = arith.constant 0 : i32
      %c12_i32_230 = arith.constant 12 : i32
      %c0_i32_231 = arith.constant 0 : i32
      %c12_i32_232 = arith.constant 12 : i32
      %c0_i32_233 = arith.constant 0 : i32
      %327 = tpu.memref_slice %arg3[%326, %c0_i32_233] : memref<1000x128xf32, #tpu.memory_space<any>> -> memref<1x128xf32, #tpu.memory_space<any>>
      %328 = tpu.memref_squeeze %327 : memref<1x128xf32, #tpu.memory_space<any>> -> memref<128xf32, #tpu.memory_space<any>>
      %c0_i32_234 = arith.constant 0 : i32
      %329 = tpu.memref_slice %arg5[%c0_i32_229, %c12_i32_230, %c0_i32_234] : memref<2x32x128xf32, #tpu.memory_space<vmem>> -> memref<1x1x128xf32, #tpu.memory_space<vmem>>
      %330 = tpu.memref_squeeze %329 : memref<1x1x128xf32, #tpu.memory_space<vmem>> -> memref<128xf32, #tpu.memory_space<vmem>>
      %331 = tpu.memref_slice %arg6[%c0_i32_231, %c12_i32_232] : memref<2x32x!tpu.dma_semaphore, #tpu.memory_space<semaphore_mem>> -> memref<1x1x!tpu.dma_semaphore, #tpu.memory_space<semaphore_mem>>
      %332 = tpu.memref_squeeze %331 : memref<1x1x!tpu.dma_semaphore, #tpu.memory_space<semaphore_mem>> -> memref<!tpu.dma_semaphore, #tpu.memory_space<semaphore_mem>>
      tpu.enqueue_dma source(%328 : memref<128xf32, #tpu.memory_space<any>>) target(%330 : memref<128xf32, #tpu.memory_space<vmem>>) target_semaphore(%332 : memref<!tpu.dma_semaphore, #tpu.memory_space<semaphore_mem>>)
      %c13_i32_235 = arith.constant 13 : i32
      %333 = arith.addi %215, %c13_i32_235 : i32
      %334 = arith.index_cast %333 : i32 to index
      %335 = memref.load %arg2[%334] : memref<96xi32, #tpu.memory_space<smem>>
      %c0_i32_236 = arith.constant 0 : i32
      %c13_i32_237 = arith.constant 13 : i32
      %c0_i32_238 = arith.constant 0 : i32
      %c13_i32_239 = arith.constant 13 : i32
      %c0_i32_240 = arith.constant 0 : i32
      %336 = tpu.memref_slice %arg3[%335, %c0_i32_240] : memref<1000x128xf32, #tpu.memory_space<any>> -> memref<1x128xf32, #tpu.memory_space<any>>
      %337 = tpu.memref_squeeze %336 : memref<1x128xf32, #tpu.memory_space<any>> -> memref<128xf32, #tpu.memory_space<any>>
      %c0_i32_241 = arith.constant 0 : i32
      %338 = tpu.memref_slice %arg5[%c0_i32_236, %c13_i32_237, %c0_i32_241] : memref<2x32x128xf32, #tpu.memory_space<vmem>> -> memref<1x1x128xf32, #tpu.memory_space<vmem>>
      %339 = tpu.memref_squeeze %338 : memref<1x1x128xf32, #tpu.memory_space<vmem>> -> memref<128xf32, #tpu.memory_space<vmem>>
      %340 = tpu.memref_slice %arg6[%c0_i32_238, %c13_i32_239] : memref<2x32x!tpu.dma_semaphore, #tpu.memory_space<semaphore_mem>> -> memref<1x1x!tpu.dma_semaphore, #tpu.memory_space<semaphore_mem>>
      %341 = tpu.memref_squeeze %340 : memref<1x1x!tpu.dma_semaphore, #tpu.memory_space<semaphore_mem>> -> memref<!tpu.dma_semaphore, #tpu.memory_space<semaphore_mem>>
      tpu.enqueue_dma source(%337 : memref<128xf32, #tpu.memory_space<any>>) target(%339 : memref<128xf32, #tpu.memory_space<vmem>>) target_semaphore(%341 : memref<!tpu.dma_semaphore, #tpu.memory_space<semaphore_mem>>)
      %c14_i32_242 = arith.constant 14 : i32
      %342 = arith.addi %215, %c14_i32_242 : i32
      %343 = arith.index_cast %342 : i32 to index
      %344 = memref.load %arg2[%343] : memref<96xi32, #tpu.memory_space<smem>>
      %c0_i32_243 = arith.constant 0 : i32
      %c14_i32_244 = arith.constant 14 : i32
      %c0_i32_245 = arith.constant 0 : i32
      %c14_i32_246 = arith.constant 14 : i32
      %c0_i32_247 = arith.constant 0 : i32
      %345 = tpu.memref_slice %arg3[%344, %c0_i32_247] : memref<1000x128xf32, #tpu.memory_space<any>> -> memref<1x128xf32, #tpu.memory_space<any>>
      %346 = tpu.memref_squeeze %345 : memref<1x128xf32, #tpu.memory_space<any>> -> memref<128xf32, #tpu.memory_space<any>>
      %c0_i32_248 = arith.constant 0 : i32
      %347 = tpu.memref_slice %arg5[%c0_i32_243, %c14_i32_244, %c0_i32_248] : memref<2x32x128xf32, #tpu.memory_space<vmem>> -> memref<1x1x128xf32, #tpu.memory_space<vmem>>
      %348 = tpu.memref_squeeze %347 : memref<1x1x128xf32, #tpu.memory_space<vmem>> -> memref<128xf32, #tpu.memory_space<vmem>>
      %349 = tpu.memref_slice %arg6[%c0_i32_245, %c14_i32_246] : memref<2x32x!tpu.dma_semaphore, #tpu.memory_space<semaphore_mem>> -> memref<1x1x!tpu.dma_semaphore, #tpu.memory_space<semaphore_mem>>
      %350 = tpu.memref_squeeze %349 : memref<1x1x!tpu.dma_semaphore, #tpu.memory_space<semaphore_mem>> -> memref<!tpu.dma_semaphore, #tpu.memory_space<semaphore_mem>>
      tpu.enqueue_dma source(%346 : memref<128xf32, #tpu.memory_space<any>>) target(%348 : memref<128xf32, #tpu.memory_space<vmem>>) target_semaphore(%350 : memref<!tpu.dma_semaphore, #tpu.memory_space<semaphore_mem>>)
      %c15_i32_249 = arith.constant 15 : i32
      %351 = arith.addi %215, %c15_i32_249 : i32
      %352 = arith.index_cast %351 : i32 to index
      %353 = memref.load %arg2[%352] : memref<96xi32, #tpu.memory_space<smem>>
      %c0_i32_250 = arith.constant 0 : i32
      %c15_i32_251 = arith.constant 15 : i32
      %c0_i32_252 = arith.constant 0 : i32
      %c15_i32_253 = arith.constant 15 : i32
      %c0_i32_254 = arith.constant 0 : i32
      %354 = tpu.memref_slice %arg3[%353, %c0_i32_254] : memref<1000x128xf32, #tpu.memory_space<any>> -> memref<1x128xf32, #tpu.memory_space<any>>
      %355 = tpu.memref_squeeze %354 : memref<1x128xf32, #tpu.memory_space<any>> -> memref<128xf32, #tpu.memory_space<any>>
      %c0_i32_255 = arith.constant 0 : i32
      %356 = tpu.memref_slice %arg5[%c0_i32_250, %c15_i32_251, %c0_i32_255] : memref<2x32x128xf32, #tpu.memory_space<vmem>> -> memref<1x1x128xf32, #tpu.memory_space<vmem>>
      %357 = tpu.memref_squeeze %356 : memref<1x1x128xf32, #tpu.memory_space<vmem>> -> memref<128xf32, #tpu.memory_space<vmem>>
      %358 = tpu.memref_slice %arg6[%c0_i32_252, %c15_i32_253] : memref<2x32x!tpu.dma_semaphore, #tpu.memory_space<semaphore_mem>> -> memref<1x1x!tpu.dma_semaphore, #tpu.memory_space<semaphore_mem>>
      %359 = tpu.memref_squeeze %358 : memref<1x1x!tpu.dma_semaphore, #tpu.memory_space<semaphore_mem>> -> memref<!tpu.dma_semaphore, #tpu.memory_space<semaphore_mem>>
      tpu.enqueue_dma source(%355 : memref<128xf32, #tpu.memory_space<any>>) target(%357 : memref<128xf32, #tpu.memory_space<vmem>>) target_semaphore(%359 : memref<!tpu.dma_semaphore, #tpu.memory_space<semaphore_mem>>)
      %c16_i32_256 = arith.constant 16 : i32
      %360 = arith.addi %215, %c16_i32_256 : i32
      %361 = arith.index_cast %360 : i32 to index
      %362 = memref.load %arg2[%361] : memref<96xi32, #tpu.memory_space<smem>>
      %c0_i32_257 = arith.constant 0 : i32
      %c16_i32_258 = arith.constant 16 : i32
      %c0_i32_259 = arith.constant 0 : i32
      %c16_i32_260 = arith.constant 16 : i32
      %c0_i32_261 = arith.constant 0 : i32
      %363 = tpu.memref_slice %arg3[%362, %c0_i32_261] : memref<1000x128xf32, #tpu.memory_space<any>> -> memref<1x128xf32, #tpu.memory_space<any>>
      %364 = tpu.memref_squeeze %363 : memref<1x128xf32, #tpu.memory_space<any>> -> memref<128xf32, #tpu.memory_space<any>>
      %c0_i32_262 = arith.constant 0 : i32
      %365 = tpu.memref_slice %arg5[%c0_i32_257, %c16_i32_258, %c0_i32_262] : memref<2x32x128xf32, #tpu.memory_space<vmem>> -> memref<1x1x128xf32, #tpu.memory_space<vmem>>
      %366 = tpu.memref_squeeze %365 : memref<1x1x128xf32, #tpu.memory_space<vmem>> -> memref<128xf32, #tpu.memory_space<vmem>>
      %367 = tpu.memref_slice %arg6[%c0_i32_259, %c16_i32_260] : memref<2x32x!tpu.dma_semaphore, #tpu.memory_space<semaphore_mem>> -> memref<1x1x!tpu.dma_semaphore, #tpu.memory_space<semaphore_mem>>
      %368 = tpu.memref_squeeze %367 : memref<1x1x!tpu.dma_semaphore, #tpu.memory_space<semaphore_mem>> -> memref<!tpu.dma_semaphore, #tpu.memory_space<semaphore_mem>>
      tpu.enqueue_dma source(%364 : memref<128xf32, #tpu.memory_space<any>>) target(%366 : memref<128xf32, #tpu.memory_space<vmem>>) target_semaphore(%368 : memref<!tpu.dma_semaphore, #tpu.memory_space<semaphore_mem>>)
      %c17_i32_263 = arith.constant 17 : i32
      %369 = arith.addi %215, %c17_i32_263 : i32
      %370 = arith.index_cast %369 : i32 to index
      %371 = memref.load %arg2[%370] : memref<96xi32, #tpu.memory_space<smem>>
      %c0_i32_264 = arith.constant 0 : i32
      %c17_i32_265 = arith.constant 17 : i32
      %c0_i32_266 = arith.constant 0 : i32
      %c17_i32_267 = arith.constant 17 : i32
      %c0_i32_268 = arith.constant 0 : i32
      %372 = tpu.memref_slice %arg3[%371, %c0_i32_268] : memref<1000x128xf32, #tpu.memory_space<any>> -> memref<1x128xf32, #tpu.memory_space<any>>
      %373 = tpu.memref_squeeze %372 : memref<1x128xf32, #tpu.memory_space<any>> -> memref<128xf32, #tpu.memory_space<any>>
      %c0_i32_269 = arith.constant 0 : i32
      %374 = tpu.memref_slice %arg5[%c0_i32_264, %c17_i32_265, %c0_i32_269] : memref<2x32x128xf32, #tpu.memory_space<vmem>> -> memref<1x1x128xf32, #tpu.memory_space<vmem>>
      %375 = tpu.memref_squeeze %374 : memref<1x1x128xf32, #tpu.memory_space<vmem>> -> memref<128xf32, #tpu.memory_space<vmem>>
      %376 = tpu.memref_slice %arg6[%c0_i32_266, %c17_i32_267] : memref<2x32x!tpu.dma_semaphore, #tpu.memory_space<semaphore_mem>> -> memref<1x1x!tpu.dma_semaphore, #tpu.memory_space<semaphore_mem>>
      %377 = tpu.memref_squeeze %376 : memref<1x1x!tpu.dma_semaphore, #tpu.memory_space<semaphore_mem>> -> memref<!tpu.dma_semaphore, #tpu.memory_space<semaphore_mem>>
      tpu.enqueue_dma source(%373 : memref<128xf32, #tpu.memory_space<any>>) target(%375 : memref<128xf32, #tpu.memory_space<vmem>>) target_semaphore(%377 : memref<!tpu.dma_semaphore, #tpu.memory_space<semaphore_mem>>)
      %c18_i32_270 = arith.constant 18 : i32
      %378 = arith.addi %215, %c18_i32_270 : i32
      %379 = arith.index_cast %378 : i32 to index
      %380 = memref.load %arg2[%379] : memref<96xi32, #tpu.memory_space<smem>>
      %c0_i32_271 = arith.constant 0 : i32
      %c18_i32_272 = arith.constant 18 : i32
      %c0_i32_273 = arith.constant 0 : i32
      %c18_i32_274 = arith.constant 18 : i32
      %c0_i32_275 = arith.constant 0 : i32
      %381 = tpu.memref_slice %arg3[%380, %c0_i32_275] : memref<1000x128xf32, #tpu.memory_space<any>> -> memref<1x128xf32, #tpu.memory_space<any>>
      %382 = tpu.memref_squeeze %381 : memref<1x128xf32, #tpu.memory_space<any>> -> memref<128xf32, #tpu.memory_space<any>>
      %c0_i32_276 = arith.constant 0 : i32
      %383 = tpu.memref_slice %arg5[%c0_i32_271, %c18_i32_272, %c0_i32_276] : memref<2x32x128xf32, #tpu.memory_space<vmem>> -> memref<1x1x128xf32, #tpu.memory_space<vmem>>
      %384 = tpu.memref_squeeze %383 : memref<1x1x128xf32, #tpu.memory_space<vmem>> -> memref<128xf32, #tpu.memory_space<vmem>>
      %385 = tpu.memref_slice %arg6[%c0_i32_273, %c18_i32_274] : memref<2x32x!tpu.dma_semaphore, #tpu.memory_space<semaphore_mem>> -> memref<1x1x!tpu.dma_semaphore, #tpu.memory_space<semaphore_mem>>
      %386 = tpu.memref_squeeze %385 : memref<1x1x!tpu.dma_semaphore, #tpu.memory_space<semaphore_mem>> -> memref<!tpu.dma_semaphore, #tpu.memory_space<semaphore_mem>>
      tpu.enqueue_dma source(%382 : memref<128xf32, #tpu.memory_space<any>>) target(%384 : memref<128xf32, #tpu.memory_space<vmem>>) target_semaphore(%386 : memref<!tpu.dma_semaphore, #tpu.memory_space<semaphore_mem>>)
      %c19_i32_277 = arith.constant 19 : i32
      %387 = arith.addi %215, %c19_i32_277 : i32
      %388 = arith.index_cast %387 : i32 to index
      %389 = memref.load %arg2[%388] : memref<96xi32, #tpu.memory_space<smem>>
      %c0_i32_278 = arith.constant 0 : i32
      %c19_i32_279 = arith.constant 19 : i32
      %c0_i32_280 = arith.constant 0 : i32
      %c19_i32_281 = arith.constant 19 : i32
      %c0_i32_282 = arith.constant 0 : i32
      %390 = tpu.memref_slice %arg3[%389, %c0_i32_282] : memref<1000x128xf32, #tpu.memory_space<any>> -> memref<1x128xf32, #tpu.memory_space<any>>
      %391 = tpu.memref_squeeze %390 : memref<1x128xf32, #tpu.memory_space<any>> -> memref<128xf32, #tpu.memory_space<any>>
      %c0_i32_283 = arith.constant 0 : i32
      %392 = tpu.memref_slice %arg5[%c0_i32_278, %c19_i32_279, %c0_i32_283] : memref<2x32x128xf32, #tpu.memory_space<vmem>> -> memref<1x1x128xf32, #tpu.memory_space<vmem>>
      %393 = tpu.memref_squeeze %392 : memref<1x1x128xf32, #tpu.memory_space<vmem>> -> memref<128xf32, #tpu.memory_space<vmem>>
      %394 = tpu.memref_slice %arg6[%c0_i32_280, %c19_i32_281] : memref<2x32x!tpu.dma_semaphore, #tpu.memory_space<semaphore_mem>> -> memref<1x1x!tpu.dma_semaphore, #tpu.memory_space<semaphore_mem>>
      %395 = tpu.memref_squeeze %394 : memref<1x1x!tpu.dma_semaphore, #tpu.memory_space<semaphore_mem>> -> memref<!tpu.dma_semaphore, #tpu.memory_space<semaphore_mem>>
      tpu.enqueue_dma source(%391 : memref<128xf32, #tpu.memory_space<any>>) target(%393 : memref<128xf32, #tpu.memory_space<vmem>>) target_semaphore(%395 : memref<!tpu.dma_semaphore, #tpu.memory_space<semaphore_mem>>)
      %c20_i32_284 = arith.constant 20 : i32
      %396 = arith.addi %215, %c20_i32_284 : i32
      %397 = arith.index_cast %396 : i32 to index
      %398 = memref.load %arg2[%397] : memref<96xi32, #tpu.memory_space<smem>>
      %c0_i32_285 = arith.constant 0 : i32
      %c20_i32_286 = arith.constant 20 : i32
      %c0_i32_287 = arith.constant 0 : i32
      %c20_i32_288 = arith.constant 20 : i32
      %c0_i32_289 = arith.constant 0 : i32
      %399 = tpu.memref_slice %arg3[%398, %c0_i32_289] : memref<1000x128xf32, #tpu.memory_space<any>> -> memref<1x128xf32, #tpu.memory_space<any>>
      %400 = tpu.memref_squeeze %399 : memref<1x128xf32, #tpu.memory_space<any>> -> memref<128xf32, #tpu.memory_space<any>>
      %c0_i32_290 = arith.constant 0 : i32
      %401 = tpu.memref_slice %arg5[%c0_i32_285, %c20_i32_286, %c0_i32_290] : memref<2x32x128xf32, #tpu.memory_space<vmem>> -> memref<1x1x128xf32, #tpu.memory_space<vmem>>
      %402 = tpu.memref_squeeze %401 : memref<1x1x128xf32, #tpu.memory_space<vmem>> -> memref<128xf32, #tpu.memory_space<vmem>>
      %403 = tpu.memref_slice %arg6[%c0_i32_287, %c20_i32_288] : memref<2x32x!tpu.dma_semaphore, #tpu.memory_space<semaphore_mem>> -> memref<1x1x!tpu.dma_semaphore, #tpu.memory_space<semaphore_mem>>
      %404 = tpu.memref_squeeze %403 : memref<1x1x!tpu.dma_semaphore, #tpu.memory_space<semaphore_mem>> -> memref<!tpu.dma_semaphore, #tpu.memory_space<semaphore_mem>>
      tpu.enqueue_dma source(%400 : memref<128xf32, #tpu.memory_space<any>>) target(%402 : memref<128xf32, #tpu.memory_space<vmem>>) target_semaphore(%404 : memref<!tpu.dma_semaphore, #tpu.memory_space<semaphore_mem>>)
      %c21_i32_291 = arith.constant 21 : i32
      %405 = arith.addi %215, %c21_i32_291 : i32
      %406 = arith.index_cast %405 : i32 to index
      %407 = memref.load %arg2[%406] : memref<96xi32, #tpu.memory_space<smem>>
      %c0_i32_292 = arith.constant 0 : i32
      %c21_i32_293 = arith.constant 21 : i32
      %c0_i32_294 = arith.constant 0 : i32
      %c21_i32_295 = arith.constant 21 : i32
      %c0_i32_296 = arith.constant 0 : i32
      %408 = tpu.memref_slice %arg3[%407, %c0_i32_296] : memref<1000x128xf32, #tpu.memory_space<any>> -> memref<1x128xf32, #tpu.memory_space<any>>
      %409 = tpu.memref_squeeze %408 : memref<1x128xf32, #tpu.memory_space<any>> -> memref<128xf32, #tpu.memory_space<any>>
      %c0_i32_297 = arith.constant 0 : i32
      %410 = tpu.memref_slice %arg5[%c0_i32_292, %c21_i32_293, %c0_i32_297] : memref<2x32x128xf32, #tpu.memory_space<vmem>> -> memref<1x1x128xf32, #tpu.memory_space<vmem>>
      %411 = tpu.memref_squeeze %410 : memref<1x1x128xf32, #tpu.memory_space<vmem>> -> memref<128xf32, #tpu.memory_space<vmem>>
      %412 = tpu.memref_slice %arg6[%c0_i32_294, %c21_i32_295] : memref<2x32x!tpu.dma_semaphore, #tpu.memory_space<semaphore_mem>> -> memref<1x1x!tpu.dma_semaphore, #tpu.memory_space<semaphore_mem>>
      %413 = tpu.memref_squeeze %412 : memref<1x1x!tpu.dma_semaphore, #tpu.memory_space<semaphore_mem>> -> memref<!tpu.dma_semaphore, #tpu.memory_space<semaphore_mem>>
      tpu.enqueue_dma source(%409 : memref<128xf32, #tpu.memory_space<any>>) target(%411 : memref<128xf32, #tpu.memory_space<vmem>>) target_semaphore(%413 : memref<!tpu.dma_semaphore, #tpu.memory_space<semaphore_mem>>)
      %c22_i32_298 = arith.constant 22 : i32
      %414 = arith.addi %215, %c22_i32_298 : i32
      %415 = arith.index_cast %414 : i32 to index
      %416 = memref.load %arg2[%415] : memref<96xi32, #tpu.memory_space<smem>>
      %c0_i32_299 = arith.constant 0 : i32
      %c22_i32_300 = arith.constant 22 : i32
      %c0_i32_301 = arith.constant 0 : i32
      %c22_i32_302 = arith.constant 22 : i32
      %c0_i32_303 = arith.constant 0 : i32
      %417 = tpu.memref_slice %arg3[%416, %c0_i32_303] : memref<1000x128xf32, #tpu.memory_space<any>> -> memref<1x128xf32, #tpu.memory_space<any>>
      %418 = tpu.memref_squeeze %417 : memref<1x128xf32, #tpu.memory_space<any>> -> memref<128xf32, #tpu.memory_space<any>>
      %c0_i32_304 = arith.constant 0 : i32
      %419 = tpu.memref_slice %arg5[%c0_i32_299, %c22_i32_300, %c0_i32_304] : memref<2x32x128xf32, #tpu.memory_space<vmem>> -> memref<1x1x128xf32, #tpu.memory_space<vmem>>
      %420 = tpu.memref_squeeze %419 : memref<1x1x128xf32, #tpu.memory_space<vmem>> -> memref<128xf32, #tpu.memory_space<vmem>>
      %421 = tpu.memref_slice %arg6[%c0_i32_301, %c22_i32_302] : memref<2x32x!tpu.dma_semaphore, #tpu.memory_space<semaphore_mem>> -> memref<1x1x!tpu.dma_semaphore, #tpu.memory_space<semaphore_mem>>
      %422 = tpu.memref_squeeze %421 : memref<1x1x!tpu.dma_semaphore, #tpu.memory_space<semaphore_mem>> -> memref<!tpu.dma_semaphore, #tpu.memory_space<semaphore_mem>>
      tpu.enqueue_dma source(%418 : memref<128xf32, #tpu.memory_space<any>>) target(%420 : memref<128xf32, #tpu.memory_space<vmem>>) target_semaphore(%422 : memref<!tpu.dma_semaphore, #tpu.memory_space<semaphore_mem>>)
      %c23_i32_305 = arith.constant 23 : i32
      %423 = arith.addi %215, %c23_i32_305 : i32
      %424 = arith.index_cast %423 : i32 to index
      %425 = memref.load %arg2[%424] : memref<96xi32, #tpu.memory_space<smem>>
      %c0_i32_306 = arith.constant 0 : i32
      %c23_i32_307 = arith.constant 23 : i32
      %c0_i32_308 = arith.constant 0 : i32
      %c23_i32_309 = arith.constant 23 : i32
      %c0_i32_310 = arith.constant 0 : i32
      %426 = tpu.memref_slice %arg3[%425, %c0_i32_310] : memref<1000x128xf32, #tpu.memory_space<any>> -> memref<1x128xf32, #tpu.memory_space<any>>
      %427 = tpu.memref_squeeze %426 : memref<1x128xf32, #tpu.memory_space<any>> -> memref<128xf32, #tpu.memory_space<any>>
      %c0_i32_311 = arith.constant 0 : i32
      %428 = tpu.memref_slice %arg5[%c0_i32_306, %c23_i32_307, %c0_i32_311] : memref<2x32x128xf32, #tpu.memory_space<vmem>> -> memref<1x1x128xf32, #tpu.memory_space<vmem>>
      %429 = tpu.memref_squeeze %428 : memref<1x1x128xf32, #tpu.memory_space<vmem>> -> memref<128xf32, #tpu.memory_space<vmem>>
      %430 = tpu.memref_slice %arg6[%c0_i32_308, %c23_i32_309] : memref<2x32x!tpu.dma_semaphore, #tpu.memory_space<semaphore_mem>> -> memref<1x1x!tpu.dma_semaphore, #tpu.memory_space<semaphore_mem>>
      %431 = tpu.memref_squeeze %430 : memref<1x1x!tpu.dma_semaphore, #tpu.memory_space<semaphore_mem>> -> memref<!tpu.dma_semaphore, #tpu.memory_space<semaphore_mem>>
      tpu.enqueue_dma source(%427 : memref<128xf32, #tpu.memory_space<any>>) target(%429 : memref<128xf32, #tpu.memory_space<vmem>>) target_semaphore(%431 : memref<!tpu.dma_semaphore, #tpu.memory_space<semaphore_mem>>)
      %c24_i32_312 = arith.constant 24 : i32
      %432 = arith.addi %215, %c24_i32_312 : i32
      %433 = arith.index_cast %432 : i32 to index
      %434 = memref.load %arg2[%433] : memref<96xi32, #tpu.memory_space<smem>>
      %c0_i32_313 = arith.constant 0 : i32
      %c24_i32_314 = arith.constant 24 : i32
      %c0_i32_315 = arith.constant 0 : i32
      %c24_i32_316 = arith.constant 24 : i32
      %c0_i32_317 = arith.constant 0 : i32
      %435 = tpu.memref_slice %arg3[%434, %c0_i32_317] : memref<1000x128xf32, #tpu.memory_space<any>> -> memref<1x128xf32, #tpu.memory_space<any>>
      %436 = tpu.memref_squeeze %435 : memref<1x128xf32, #tpu.memory_space<any>> -> memref<128xf32, #tpu.memory_space<any>>
      %c0_i32_318 = arith.constant 0 : i32
      %437 = tpu.memref_slice %arg5[%c0_i32_313, %c24_i32_314, %c0_i32_318] : memref<2x32x128xf32, #tpu.memory_space<vmem>> -> memref<1x1x128xf32, #tpu.memory_space<vmem>>
      %438 = tpu.memref_squeeze %437 : memref<1x1x128xf32, #tpu.memory_space<vmem>> -> memref<128xf32, #tpu.memory_space<vmem>>
      %439 = tpu.memref_slice %arg6[%c0_i32_315, %c24_i32_316] : memref<2x32x!tpu.dma_semaphore, #tpu.memory_space<semaphore_mem>> -> memref<1x1x!tpu.dma_semaphore, #tpu.memory_space<semaphore_mem>>
      %440 = tpu.memref_squeeze %439 : memref<1x1x!tpu.dma_semaphore, #tpu.memory_space<semaphore_mem>> -> memref<!tpu.dma_semaphore, #tpu.memory_space<semaphore_mem>>
      tpu.enqueue_dma source(%436 : memref<128xf32, #tpu.memory_space<any>>) target(%438 : memref<128xf32, #tpu.memory_space<vmem>>) target_semaphore(%440 : memref<!tpu.dma_semaphore, #tpu.memory_space<semaphore_mem>>)
      %c25_i32_319 = arith.constant 25 : i32
      %441 = arith.addi %215, %c25_i32_319 : i32
      %442 = arith.index_cast %441 : i32 to index
      %443 = memref.load %arg2[%442] : memref<96xi32, #tpu.memory_space<smem>>
      %c0_i32_320 = arith.constant 0 : i32
      %c25_i32_321 = arith.constant 25 : i32
      %c0_i32_322 = arith.constant 0 : i32
      %c25_i32_323 = arith.constant 25 : i32
      %c0_i32_324 = arith.constant 0 : i32
      %444 = tpu.memref_slice %arg3[%443, %c0_i32_324] : memref<1000x128xf32, #tpu.memory_space<any>> -> memref<1x128xf32, #tpu.memory_space<any>>
      %445 = tpu.memref_squeeze %444 : memref<1x128xf32, #tpu.memory_space<any>> -> memref<128xf32, #tpu.memory_space<any>>
      %c0_i32_325 = arith.constant 0 : i32
      %446 = tpu.memref_slice %arg5[%c0_i32_320, %c25_i32_321, %c0_i32_325] : memref<2x32x128xf32, #tpu.memory_space<vmem>> -> memref<1x1x128xf32, #tpu.memory_space<vmem>>
      %447 = tpu.memref_squeeze %446 : memref<1x1x128xf32, #tpu.memory_space<vmem>> -> memref<128xf32, #tpu.memory_space<vmem>>
      %448 = tpu.memref_slice %arg6[%c0_i32_322, %c25_i32_323] : memref<2x32x!tpu.dma_semaphore, #tpu.memory_space<semaphore_mem>> -> memref<1x1x!tpu.dma_semaphore, #tpu.memory_space<semaphore_mem>>
      %449 = tpu.memref_squeeze %448 : memref<1x1x!tpu.dma_semaphore, #tpu.memory_space<semaphore_mem>> -> memref<!tpu.dma_semaphore, #tpu.memory_space<semaphore_mem>>
      tpu.enqueue_dma source(%445 : memref<128xf32, #tpu.memory_space<any>>) target(%447 : memref<128xf32, #tpu.memory_space<vmem>>) target_semaphore(%449 : memref<!tpu.dma_semaphore, #tpu.memory_space<semaphore_mem>>)
      %c26_i32_326 = arith.constant 26 : i32
      %450 = arith.addi %215, %c26_i32_326 : i32
      %451 = arith.index_cast %450 : i32 to index
      %452 = memref.load %arg2[%451] : memref<96xi32, #tpu.memory_space<smem>>
      %c0_i32_327 = arith.constant 0 : i32
      %c26_i32_328 = arith.constant 26 : i32
      %c0_i32_329 = arith.constant 0 : i32
      %c26_i32_330 = arith.constant 26 : i32
      %c0_i32_331 = arith.constant 0 : i32
      %453 = tpu.memref_slice %arg3[%452, %c0_i32_331] : memref<1000x128xf32, #tpu.memory_space<any>> -> memref<1x128xf32, #tpu.memory_space<any>>
      %454 = tpu.memref_squeeze %453 : memref<1x128xf32, #tpu.memory_space<any>> -> memref<128xf32, #tpu.memory_space<any>>
      %c0_i32_332 = arith.constant 0 : i32
      %455 = tpu.memref_slice %arg5[%c0_i32_327, %c26_i32_328, %c0_i32_332] : memref<2x32x128xf32, #tpu.memory_space<vmem>> -> memref<1x1x128xf32, #tpu.memory_space<vmem>>
      %456 = tpu.memref_squeeze %455 : memref<1x1x128xf32, #tpu.memory_space<vmem>> -> memref<128xf32, #tpu.memory_space<vmem>>
      %457 = tpu.memref_slice %arg6[%c0_i32_329, %c26_i32_330] : memref<2x32x!tpu.dma_semaphore, #tpu.memory_space<semaphore_mem>> -> memref<1x1x!tpu.dma_semaphore, #tpu.memory_space<semaphore_mem>>
      %458 = tpu.memref_squeeze %457 : memref<1x1x!tpu.dma_semaphore, #tpu.memory_space<semaphore_mem>> -> memref<!tpu.dma_semaphore, #tpu.memory_space<semaphore_mem>>
      tpu.enqueue_dma source(%454 : memref<128xf32, #tpu.memory_space<any>>) target(%456 : memref<128xf32, #tpu.memory_space<vmem>>) target_semaphore(%458 : memref<!tpu.dma_semaphore, #tpu.memory_space<semaphore_mem>>)
      %c27_i32_333 = arith.constant 27 : i32
      %459 = arith.addi %215, %c27_i32_333 : i32
      %460 = arith.index_cast %459 : i32 to index
      %461 = memref.load %arg2[%460] : memref<96xi32, #tpu.memory_space<smem>>
      %c0_i32_334 = arith.constant 0 : i32
      %c27_i32_335 = arith.constant 27 : i32
      %c0_i32_336 = arith.constant 0 : i32
      %c27_i32_337 = arith.constant 27 : i32
      %c0_i32_338 = arith.constant 0 : i32
      %462 = tpu.memref_slice %arg3[%461, %c0_i32_338] : memref<1000x128xf32, #tpu.memory_space<any>> -> memref<1x128xf32, #tpu.memory_space<any>>
      %463 = tpu.memref_squeeze %462 : memref<1x128xf32, #tpu.memory_space<any>> -> memref<128xf32, #tpu.memory_space<any>>
      %c0_i32_339 = arith.constant 0 : i32
      %464 = tpu.memref_slice %arg5[%c0_i32_334, %c27_i32_335, %c0_i32_339] : memref<2x32x128xf32, #tpu.memory_space<vmem>> -> memref<1x1x128xf32, #tpu.memory_space<vmem>>
      %465 = tpu.memref_squeeze %464 : memref<1x1x128xf32, #tpu.memory_space<vmem>> -> memref<128xf32, #tpu.memory_space<vmem>>
      %466 = tpu.memref_slice %arg6[%c0_i32_336, %c27_i32_337] : memref<2x32x!tpu.dma_semaphore, #tpu.memory_space<semaphore_mem>> -> memref<1x1x!tpu.dma_semaphore, #tpu.memory_space<semaphore_mem>>
      %467 = tpu.memref_squeeze %466 : memref<1x1x!tpu.dma_semaphore, #tpu.memory_space<semaphore_mem>> -> memref<!tpu.dma_semaphore, #tpu.memory_space<semaphore_mem>>
      tpu.enqueue_dma source(%463 : memref<128xf32, #tpu.memory_space<any>>) target(%465 : memref<128xf32, #tpu.memory_space<vmem>>) target_semaphore(%467 : memref<!tpu.dma_semaphore, #tpu.memory_space<semaphore_mem>>)
      %c28_i32_340 = arith.constant 28 : i32
      %468 = arith.addi %215, %c28_i32_340 : i32
      %469 = arith.index_cast %468 : i32 to index
      %470 = memref.load %arg2[%469] : memref<96xi32, #tpu.memory_space<smem>>
      %c0_i32_341 = arith.constant 0 : i32
      %c28_i32_342 = arith.constant 28 : i32
      %c0_i32_343 = arith.constant 0 : i32
      %c28_i32_344 = arith.constant 28 : i32
      %c0_i32_345 = arith.constant 0 : i32
      %471 = tpu.memref_slice %arg3[%470, %c0_i32_345] : memref<1000x128xf32, #tpu.memory_space<any>> -> memref<1x128xf32, #tpu.memory_space<any>>
      %472 = tpu.memref_squeeze %471 : memref<1x128xf32, #tpu.memory_space<any>> -> memref<128xf32, #tpu.memory_space<any>>
      %c0_i32_346 = arith.constant 0 : i32
      %473 = tpu.memref_slice %arg5[%c0_i32_341, %c28_i32_342, %c0_i32_346] : memref<2x32x128xf32, #tpu.memory_space<vmem>> -> memref<1x1x128xf32, #tpu.memory_space<vmem>>
      %474 = tpu.memref_squeeze %473 : memref<1x1x128xf32, #tpu.memory_space<vmem>> -> memref<128xf32, #tpu.memory_space<vmem>>
      %475 = tpu.memref_slice %arg6[%c0_i32_343, %c28_i32_344] : memref<2x32x!tpu.dma_semaphore, #tpu.memory_space<semaphore_mem>> -> memref<1x1x!tpu.dma_semaphore, #tpu.memory_space<semaphore_mem>>
      %476 = tpu.memref_squeeze %475 : memref<1x1x!tpu.dma_semaphore, #tpu.memory_space<semaphore_mem>> -> memref<!tpu.dma_semaphore, #tpu.memory_space<semaphore_mem>>
      tpu.enqueue_dma source(%472 : memref<128xf32, #tpu.memory_space<any>>) target(%474 : memref<128xf32, #tpu.memory_space<vmem>>) target_semaphore(%476 : memref<!tpu.dma_semaphore, #tpu.memory_space<semaphore_mem>>)
      %c29_i32_347 = arith.constant 29 : i32
      %477 = arith.addi %215, %c29_i32_347 : i32
      %478 = arith.index_cast %477 : i32 to index
      %479 = memref.load %arg2[%478] : memref<96xi32, #tpu.memory_space<smem>>
      %c0_i32_348 = arith.constant 0 : i32
      %c29_i32_349 = arith.constant 29 : i32
      %c0_i32_350 = arith.constant 0 : i32
      %c29_i32_351 = arith.constant 29 : i32
      %c0_i32_352 = arith.constant 0 : i32
      %480 = tpu.memref_slice %arg3[%479, %c0_i32_352] : memref<1000x128xf32, #tpu.memory_space<any>> -> memref<1x128xf32, #tpu.memory_space<any>>
      %481 = tpu.memref_squeeze %480 : memref<1x128xf32, #tpu.memory_space<any>> -> memref<128xf32, #tpu.memory_space<any>>
      %c0_i32_353 = arith.constant 0 : i32
      %482 = tpu.memref_slice %arg5[%c0_i32_348, %c29_i32_349, %c0_i32_353] : memref<2x32x128xf32, #tpu.memory_space<vmem>> -> memref<1x1x128xf32, #tpu.memory_space<vmem>>
      %483 = tpu.memref_squeeze %482 : memref<1x1x128xf32, #tpu.memory_space<vmem>> -> memref<128xf32, #tpu.memory_space<vmem>>
      %484 = tpu.memref_slice %arg6[%c0_i32_350, %c29_i32_351] : memref<2x32x!tpu.dma_semaphore, #tpu.memory_space<semaphore_mem>> -> memref<1x1x!tpu.dma_semaphore, #tpu.memory_space<semaphore_mem>>
      %485 = tpu.memref_squeeze %484 : memref<1x1x!tpu.dma_semaphore, #tpu.memory_space<semaphore_mem>> -> memref<!tpu.dma_semaphore, #tpu.memory_space<semaphore_mem>>
      tpu.enqueue_dma source(%481 : memref<128xf32, #tpu.memory_space<any>>) target(%483 : memref<128xf32, #tpu.memory_space<vmem>>) target_semaphore(%485 : memref<!tpu.dma_semaphore, #tpu.memory_space<semaphore_mem>>)
      %c30_i32_354 = arith.constant 30 : i32
      %486 = arith.addi %215, %c30_i32_354 : i32
      %487 = arith.index_cast %486 : i32 to index
      %488 = memref.load %arg2[%487] : memref<96xi32, #tpu.memory_space<smem>>
      %c0_i32_355 = arith.constant 0 : i32
      %c30_i32_356 = arith.constant 30 : i32
      %c0_i32_357 = arith.constant 0 : i32
      %c30_i32_358 = arith.constant 30 : i32
      %c0_i32_359 = arith.constant 0 : i32
      %489 = tpu.memref_slice %arg3[%488, %c0_i32_359] : memref<1000x128xf32, #tpu.memory_space<any>> -> memref<1x128xf32, #tpu.memory_space<any>>
      %490 = tpu.memref_squeeze %489 : memref<1x128xf32, #tpu.memory_space<any>> -> memref<128xf32, #tpu.memory_space<any>>
      %c0_i32_360 = arith.constant 0 : i32
      %491 = tpu.memref_slice %arg5[%c0_i32_355, %c30_i32_356, %c0_i32_360] : memref<2x32x128xf32, #tpu.memory_space<vmem>> -> memref<1x1x128xf32, #tpu.memory_space<vmem>>
      %492 = tpu.memref_squeeze %491 : memref<1x1x128xf32, #tpu.memory_space<vmem>> -> memref<128xf32, #tpu.memory_space<vmem>>
      %493 = tpu.memref_slice %arg6[%c0_i32_357, %c30_i32_358] : memref<2x32x!tpu.dma_semaphore, #tpu.memory_space<semaphore_mem>> -> memref<1x1x!tpu.dma_semaphore, #tpu.memory_space<semaphore_mem>>
      %494 = tpu.memref_squeeze %493 : memref<1x1x!tpu.dma_semaphore, #tpu.memory_space<semaphore_mem>> -> memref<!tpu.dma_semaphore, #tpu.memory_space<semaphore_mem>>
      tpu.enqueue_dma source(%490 : memref<128xf32, #tpu.memory_space<any>>) target(%492 : memref<128xf32, #tpu.memory_space<vmem>>) target_semaphore(%494 : memref<!tpu.dma_semaphore, #tpu.memory_space<semaphore_mem>>)
      %c31_i32_361 = arith.constant 31 : i32
      %495 = arith.addi %215, %c31_i32_361 : i32
      %496 = arith.index_cast %495 : i32 to index
      %497 = memref.load %arg2[%496] : memref<96xi32, #tpu.memory_space<smem>>
      %c0_i32_362 = arith.constant 0 : i32
      %c31_i32_363 = arith.constant 31 : i32
      %c0_i32_364 = arith.constant 0 : i32
      %c31_i32_365 = arith.constant 31 : i32
      %c0_i32_366 = arith.constant 0 : i32
      %498 = tpu.memref_slice %arg3[%497, %c0_i32_366] : memref<1000x128xf32, #tpu.memory_space<any>> -> memref<1x128xf32, #tpu.memory_space<any>>
      %499 = tpu.memref_squeeze %498 : memref<1x128xf32, #tpu.memory_space<any>> -> memref<128xf32, #tpu.memory_space<any>>
      %c0_i32_367 = arith.constant 0 : i32
      %500 = tpu.memref_slice %arg5[%c0_i32_362, %c31_i32_363, %c0_i32_367] : memref<2x32x128xf32, #tpu.memory_space<vmem>> -> memref<1x1x128xf32, #tpu.memory_space<vmem>>
      %501 = tpu.memref_squeeze %500 : memref<1x1x128xf32, #tpu.memory_space<vmem>> -> memref<128xf32, #tpu.memory_space<vmem>>
      %502 = tpu.memref_slice %arg6[%c0_i32_364, %c31_i32_365] : memref<2x32x!tpu.dma_semaphore, #tpu.memory_space<semaphore_mem>> -> memref<1x1x!tpu.dma_semaphore, #tpu.memory_space<semaphore_mem>>
      %503 = tpu.memref_squeeze %502 : memref<1x1x!tpu.dma_semaphore, #tpu.memory_space<semaphore_mem>> -> memref<!tpu.dma_semaphore, #tpu.memory_space<semaphore_mem>>
      tpu.enqueue_dma source(%499 : memref<128xf32, #tpu.memory_space<any>>) target(%501 : memref<128xf32, #tpu.memory_space<vmem>>) target_semaphore(%503 : memref<!tpu.dma_semaphore, #tpu.memory_space<semaphore_mem>>)
    } else {
    }
    %c1_i32_5 = arith.constant 1 : i32
    %13 = arith.addi %arg1, %c1_i32_5 : i32
    %c3_i32 = arith.constant 3 : i32
    %14 = arith.cmpi slt, %13, %c3_i32 : i32
    %15 = arith.extui %14 : i1 to i32
    %c0_i32_6 = arith.constant 0 : i32
    %16 = arith.cmpi ne, %15, %c0_i32_6 : i32
    scf.if %16 {
      %c1_i32_142 = arith.constant 1 : i32
      %213 = arith.addi %arg1, %c1_i32_142 : i32
      %c1_i32_143 = arith.constant 1 : i32
      %214 = arith.subi %c1_i32_143, %9 : i32
      %c3_i32_144 = arith.constant 3 : i32
      %215 = arith.muli %arg0, %c3_i32_144 : i32
      %216 = arith.addi %215, %213 : i32
      %c32_i32 = arith.constant 32 : i32
      %217 = arith.muli %216, %c32_i32 : i32
      %c0_i32_145 = arith.constant 0 : i32
      %218 = arith.addi %217, %c0_i32_145 : i32
      %219 = arith.index_cast %218 : i32 to index
      %220 = memref.load %arg2[%219] : memref<96xi32, #tpu.memory_space<smem>>
      %c0_i32_146 = arith.constant 0 : i32
      %c0_i32_147 = arith.constant 0 : i32
      %c0_i32_148 = arith.constant 0 : i32
      %221 = tpu.memref_slice %arg3[%220, %c0_i32_148] : memref<1000x128xf32, #tpu.memory_space<any>> -> memref<1x128xf32, #tpu.memory_space<any>>
      %222 = tpu.memref_squeeze %221 : memref<1x128xf32, #tpu.memory_space<any>> -> memref<128xf32, #tpu.memory_space<any>>
      %c0_i32_149 = arith.constant 0 : i32
      %223 = tpu.memref_slice %arg5[%214, %c0_i32_146, %c0_i32_149] : memref<2x32x128xf32, #tpu.memory_space<vmem>> -> memref<1x1x128xf32, #tpu.memory_space<vmem>>
      %224 = tpu.memref_squeeze %223 : memref<1x1x128xf32, #tpu.memory_space<vmem>> -> memref<128xf32, #tpu.memory_space<vmem>>
      %225 = tpu.memref_slice %arg6[%214, %c0_i32_147] : memref<2x32x!tpu.dma_semaphore, #tpu.memory_space<semaphore_mem>> -> memref<1x1x!tpu.dma_semaphore, #tpu.memory_space<semaphore_mem>>
      %226 = tpu.memref_squeeze %225 : memref<1x1x!tpu.dma_semaphore, #tpu.memory_space<semaphore_mem>> -> memref<!tpu.dma_semaphore, #tpu.memory_space<semaphore_mem>>
      tpu.enqueue_dma source(%222 : memref<128xf32, #tpu.memory_space<any>>) target(%224 : memref<128xf32, #tpu.memory_space<vmem>>) target_semaphore(%226 : memref<!tpu.dma_semaphore, #tpu.memory_space<semaphore_mem>>)
      %c1_i32_150 = arith.constant 1 : i32
      %227 = arith.addi %217, %c1_i32_150 : i32
      %228 = arith.index_cast %227 : i32 to index
      %229 = memref.load %arg2[%228] : memref<96xi32, #tpu.memory_space<smem>>
      %c1_i32_151 = arith.constant 1 : i32
      %c1_i32_152 = arith.constant 1 : i32
      %c0_i32_153 = arith.constant 0 : i32
      %230 = tpu.memref_slice %arg3[%229, %c0_i32_153] : memref<1000x128xf32, #tpu.memory_space<any>> -> memref<1x128xf32, #tpu.memory_space<any>>
      %231 = tpu.memref_squeeze %230 : memref<1x128xf32, #tpu.memory_space<any>> -> memref<128xf32, #tpu.memory_space<any>>
      %c0_i32_154 = arith.constant 0 : i32
      %232 = tpu.memref_slice %arg5[%214, %c1_i32_151, %c0_i32_154] : memref<2x32x128xf32, #tpu.memory_space<vmem>> -> memref<1x1x128xf32, #tpu.memory_space<vmem>>
      %233 = tpu.memref_squeeze %232 : memref<1x1x128xf32, #tpu.memory_space<vmem>> -> memref<128xf32, #tpu.memory_space<vmem>>
      %234 = tpu.memref_slice %arg6[%214, %c1_i32_152] : memref<2x32x!tpu.dma_semaphore, #tpu.memory_space<semaphore_mem>> -> memref<1x1x!tpu.dma_semaphore, #tpu.memory_space<semaphore_mem>>
      %235 = tpu.memref_squeeze %234 : memref<1x1x!tpu.dma_semaphore, #tpu.memory_space<semaphore_mem>> -> memref<!tpu.dma_semaphore, #tpu.memory_space<semaphore_mem>>
      tpu.enqueue_dma source(%231 : memref<128xf32, #tpu.memory_space<any>>) target(%233 : memref<128xf32, #tpu.memory_space<vmem>>) target_semaphore(%235 : memref<!tpu.dma_semaphore, #tpu.memory_space<semaphore_mem>>)
      %c2_i32_155 = arith.constant 2 : i32
      %236 = arith.addi %217, %c2_i32_155 : i32
      %237 = arith.index_cast %236 : i32 to index
      %238 = memref.load %arg2[%237] : memref<96xi32, #tpu.memory_space<smem>>
      %c2_i32_156 = arith.constant 2 : i32
      %c2_i32_157 = arith.constant 2 : i32
      %c0_i32_158 = arith.constant 0 : i32
      %239 = tpu.memref_slice %arg3[%238, %c0_i32_158] : memref<1000x128xf32, #tpu.memory_space<any>> -> memref<1x128xf32, #tpu.memory_space<any>>
      %240 = tpu.memref_squeeze %239 : memref<1x128xf32, #tpu.memory_space<any>> -> memref<128xf32, #tpu.memory_space<any>>
      %c0_i32_159 = arith.constant 0 : i32
      %241 = tpu.memref_slice %arg5[%214, %c2_i32_156, %c0_i32_159] : memref<2x32x128xf32, #tpu.memory_space<vmem>> -> memref<1x1x128xf32, #tpu.memory_space<vmem>>
      %242 = tpu.memref_squeeze %241 : memref<1x1x128xf32, #tpu.memory_space<vmem>> -> memref<128xf32, #tpu.memory_space<vmem>>
      %243 = tpu.memref_slice %arg6[%214, %c2_i32_157] : memref<2x32x!tpu.dma_semaphore, #tpu.memory_space<semaphore_mem>> -> memref<1x1x!tpu.dma_semaphore, #tpu.memory_space<semaphore_mem>>
      %244 = tpu.memref_squeeze %243 : memref<1x1x!tpu.dma_semaphore, #tpu.memory_space<semaphore_mem>> -> memref<!tpu.dma_semaphore, #tpu.memory_space<semaphore_mem>>
      tpu.enqueue_dma source(%240 : memref<128xf32, #tpu.memory_space<any>>) target(%242 : memref<128xf32, #tpu.memory_space<vmem>>) target_semaphore(%244 : memref<!tpu.dma_semaphore, #tpu.memory_space<semaphore_mem>>)
      %c3_i32_160 = arith.constant 3 : i32
      %245 = arith.addi %217, %c3_i32_160 : i32
      %246 = arith.index_cast %245 : i32 to index
      %247 = memref.load %arg2[%246] : memref<96xi32, #tpu.memory_space<smem>>
      %c3_i32_161 = arith.constant 3 : i32
      %c3_i32_162 = arith.constant 3 : i32
      %c0_i32_163 = arith.constant 0 : i32
      %248 = tpu.memref_slice %arg3[%247, %c0_i32_163] : memref<1000x128xf32, #tpu.memory_space<any>> -> memref<1x128xf32, #tpu.memory_space<any>>
      %249 = tpu.memref_squeeze %248 : memref<1x128xf32, #tpu.memory_space<any>> -> memref<128xf32, #tpu.memory_space<any>>
      %c0_i32_164 = arith.constant 0 : i32
      %250 = tpu.memref_slice %arg5[%214, %c3_i32_161, %c0_i32_164] : memref<2x32x128xf32, #tpu.memory_space<vmem>> -> memref<1x1x128xf32, #tpu.memory_space<vmem>>
      %251 = tpu.memref_squeeze %250 : memref<1x1x128xf32, #tpu.memory_space<vmem>> -> memref<128xf32, #tpu.memory_space<vmem>>
      %252 = tpu.memref_slice %arg6[%214, %c3_i32_162] : memref<2x32x!tpu.dma_semaphore, #tpu.memory_space<semaphore_mem>> -> memref<1x1x!tpu.dma_semaphore, #tpu.memory_space<semaphore_mem>>
      %253 = tpu.memref_squeeze %252 : memref<1x1x!tpu.dma_semaphore, #tpu.memory_space<semaphore_mem>> -> memref<!tpu.dma_semaphore, #tpu.memory_space<semaphore_mem>>
      tpu.enqueue_dma source(%249 : memref<128xf32, #tpu.memory_space<any>>) target(%251 : memref<128xf32, #tpu.memory_space<vmem>>) target_semaphore(%253 : memref<!tpu.dma_semaphore, #tpu.memory_space<semaphore_mem>>)
      %c4_i32_165 = arith.constant 4 : i32
      %254 = arith.addi %217, %c4_i32_165 : i32
      %255 = arith.index_cast %254 : i32 to index
      %256 = memref.load %arg2[%255] : memref<96xi32, #tpu.memory_space<smem>>
      %c4_i32_166 = arith.constant 4 : i32
      %c4_i32_167 = arith.constant 4 : i32
      %c0_i32_168 = arith.constant 0 : i32
      %257 = tpu.memref_slice %arg3[%256, %c0_i32_168] : memref<1000x128xf32, #tpu.memory_space<any>> -> memref<1x128xf32, #tpu.memory_space<any>>
      %258 = tpu.memref_squeeze %257 : memref<1x128xf32, #tpu.memory_space<any>> -> memref<128xf32, #tpu.memory_space<any>>
      %c0_i32_169 = arith.constant 0 : i32
      %259 = tpu.memref_slice %arg5[%214, %c4_i32_166, %c0_i32_169] : memref<2x32x128xf32, #tpu.memory_space<vmem>> -> memref<1x1x128xf32, #tpu.memory_space<vmem>>
      %260 = tpu.memref_squeeze %259 : memref<1x1x128xf32, #tpu.memory_space<vmem>> -> memref<128xf32, #tpu.memory_space<vmem>>
      %261 = tpu.memref_slice %arg6[%214, %c4_i32_167] : memref<2x32x!tpu.dma_semaphore, #tpu.memory_space<semaphore_mem>> -> memref<1x1x!tpu.dma_semaphore, #tpu.memory_space<semaphore_mem>>
      %262 = tpu.memref_squeeze %261 : memref<1x1x!tpu.dma_semaphore, #tpu.memory_space<semaphore_mem>> -> memref<!tpu.dma_semaphore, #tpu.memory_space<semaphore_mem>>
      tpu.enqueue_dma source(%258 : memref<128xf32, #tpu.memory_space<any>>) target(%260 : memref<128xf32, #tpu.memory_space<vmem>>) target_semaphore(%262 : memref<!tpu.dma_semaphore, #tpu.memory_space<semaphore_mem>>)
      %c5_i32_170 = arith.constant 5 : i32
      %263 = arith.addi %217, %c5_i32_170 : i32
      %264 = arith.index_cast %263 : i32 to index
      %265 = memref.load %arg2[%264] : memref<96xi32, #tpu.memory_space<smem>>
      %c5_i32_171 = arith.constant 5 : i32
      %c5_i32_172 = arith.constant 5 : i32
      %c0_i32_173 = arith.constant 0 : i32
      %266 = tpu.memref_slice %arg3[%265, %c0_i32_173] : memref<1000x128xf32, #tpu.memory_space<any>> -> memref<1x128xf32, #tpu.memory_space<any>>
      %267 = tpu.memref_squeeze %266 : memref<1x128xf32, #tpu.memory_space<any>> -> memref<128xf32, #tpu.memory_space<any>>
      %c0_i32_174 = arith.constant 0 : i32
      %268 = tpu.memref_slice %arg5[%214, %c5_i32_171, %c0_i32_174] : memref<2x32x128xf32, #tpu.memory_space<vmem>> -> memref<1x1x128xf32, #tpu.memory_space<vmem>>
      %269 = tpu.memref_squeeze %268 : memref<1x1x128xf32, #tpu.memory_space<vmem>> -> memref<128xf32, #tpu.memory_space<vmem>>
      %270 = tpu.memref_slice %arg6[%214, %c5_i32_172] : memref<2x32x!tpu.dma_semaphore, #tpu.memory_space<semaphore_mem>> -> memref<1x1x!tpu.dma_semaphore, #tpu.memory_space<semaphore_mem>>
      %271 = tpu.memref_squeeze %270 : memref<1x1x!tpu.dma_semaphore, #tpu.memory_space<semaphore_mem>> -> memref<!tpu.dma_semaphore, #tpu.memory_space<semaphore_mem>>
      tpu.enqueue_dma source(%267 : memref<128xf32, #tpu.memory_space<any>>) target(%269 : memref<128xf32, #tpu.memory_space<vmem>>) target_semaphore(%271 : memref<!tpu.dma_semaphore, #tpu.memory_space<semaphore_mem>>)
      %c6_i32_175 = arith.constant 6 : i32
      %272 = arith.addi %217, %c6_i32_175 : i32
      %273 = arith.index_cast %272 : i32 to index
      %274 = memref.load %arg2[%273] : memref<96xi32, #tpu.memory_space<smem>>
      %c6_i32_176 = arith.constant 6 : i32
      %c6_i32_177 = arith.constant 6 : i32
      %c0_i32_178 = arith.constant 0 : i32
      %275 = tpu.memref_slice %arg3[%274, %c0_i32_178] : memref<1000x128xf32, #tpu.memory_space<any>> -> memref<1x128xf32, #tpu.memory_space<any>>
      %276 = tpu.memref_squeeze %275 : memref<1x128xf32, #tpu.memory_space<any>> -> memref<128xf32, #tpu.memory_space<any>>
      %c0_i32_179 = arith.constant 0 : i32
      %277 = tpu.memref_slice %arg5[%214, %c6_i32_176, %c0_i32_179] : memref<2x32x128xf32, #tpu.memory_space<vmem>> -> memref<1x1x128xf32, #tpu.memory_space<vmem>>
      %278 = tpu.memref_squeeze %277 : memref<1x1x128xf32, #tpu.memory_space<vmem>> -> memref<128xf32, #tpu.memory_space<vmem>>
      %279 = tpu.memref_slice %arg6[%214, %c6_i32_177] : memref<2x32x!tpu.dma_semaphore, #tpu.memory_space<semaphore_mem>> -> memref<1x1x!tpu.dma_semaphore, #tpu.memory_space<semaphore_mem>>
      %280 = tpu.memref_squeeze %279 : memref<1x1x!tpu.dma_semaphore, #tpu.memory_space<semaphore_mem>> -> memref<!tpu.dma_semaphore, #tpu.memory_space<semaphore_mem>>
      tpu.enqueue_dma source(%276 : memref<128xf32, #tpu.memory_space<any>>) target(%278 : memref<128xf32, #tpu.memory_space<vmem>>) target_semaphore(%280 : memref<!tpu.dma_semaphore, #tpu.memory_space<semaphore_mem>>)
      %c7_i32_180 = arith.constant 7 : i32
      %281 = arith.addi %217, %c7_i32_180 : i32
      %282 = arith.index_cast %281 : i32 to index
      %283 = memref.load %arg2[%282] : memref<96xi32, #tpu.memory_space<smem>>
      %c7_i32_181 = arith.constant 7 : i32
      %c7_i32_182 = arith.constant 7 : i32
      %c0_i32_183 = arith.constant 0 : i32
      %284 = tpu.memref_slice %arg3[%283, %c0_i32_183] : memref<1000x128xf32, #tpu.memory_space<any>> -> memref<1x128xf32, #tpu.memory_space<any>>
      %285 = tpu.memref_squeeze %284 : memref<1x128xf32, #tpu.memory_space<any>> -> memref<128xf32, #tpu.memory_space<any>>
      %c0_i32_184 = arith.constant 0 : i32
      %286 = tpu.memref_slice %arg5[%214, %c7_i32_181, %c0_i32_184] : memref<2x32x128xf32, #tpu.memory_space<vmem>> -> memref<1x1x128xf32, #tpu.memory_space<vmem>>
      %287 = tpu.memref_squeeze %286 : memref<1x1x128xf32, #tpu.memory_space<vmem>> -> memref<128xf32, #tpu.memory_space<vmem>>
      %288 = tpu.memref_slice %arg6[%214, %c7_i32_182] : memref<2x32x!tpu.dma_semaphore, #tpu.memory_space<semaphore_mem>> -> memref<1x1x!tpu.dma_semaphore, #tpu.memory_space<semaphore_mem>>
      %289 = tpu.memref_squeeze %288 : memref<1x1x!tpu.dma_semaphore, #tpu.memory_space<semaphore_mem>> -> memref<!tpu.dma_semaphore, #tpu.memory_space<semaphore_mem>>
      tpu.enqueue_dma source(%285 : memref<128xf32, #tpu.memory_space<any>>) target(%287 : memref<128xf32, #tpu.memory_space<vmem>>) target_semaphore(%289 : memref<!tpu.dma_semaphore, #tpu.memory_space<semaphore_mem>>)
      %c8_i32_185 = arith.constant 8 : i32
      %290 = arith.addi %217, %c8_i32_185 : i32
      %291 = arith.index_cast %290 : i32 to index
      %292 = memref.load %arg2[%291] : memref<96xi32, #tpu.memory_space<smem>>
      %c8_i32_186 = arith.constant 8 : i32
      %c8_i32_187 = arith.constant 8 : i32
      %c0_i32_188 = arith.constant 0 : i32
      %293 = tpu.memref_slice %arg3[%292, %c0_i32_188] : memref<1000x128xf32, #tpu.memory_space<any>> -> memref<1x128xf32, #tpu.memory_space<any>>
      %294 = tpu.memref_squeeze %293 : memref<1x128xf32, #tpu.memory_space<any>> -> memref<128xf32, #tpu.memory_space<any>>
      %c0_i32_189 = arith.constant 0 : i32
      %295 = tpu.memref_slice %arg5[%214, %c8_i32_186, %c0_i32_189] : memref<2x32x128xf32, #tpu.memory_space<vmem>> -> memref<1x1x128xf32, #tpu.memory_space<vmem>>
      %296 = tpu.memref_squeeze %295 : memref<1x1x128xf32, #tpu.memory_space<vmem>> -> memref<128xf32, #tpu.memory_space<vmem>>
      %297 = tpu.memref_slice %arg6[%214, %c8_i32_187] : memref<2x32x!tpu.dma_semaphore, #tpu.memory_space<semaphore_mem>> -> memref<1x1x!tpu.dma_semaphore, #tpu.memory_space<semaphore_mem>>
      %298 = tpu.memref_squeeze %297 : memref<1x1x!tpu.dma_semaphore, #tpu.memory_space<semaphore_mem>> -> memref<!tpu.dma_semaphore, #tpu.memory_space<semaphore_mem>>
      tpu.enqueue_dma source(%294 : memref<128xf32, #tpu.memory_space<any>>) target(%296 : memref<128xf32, #tpu.memory_space<vmem>>) target_semaphore(%298 : memref<!tpu.dma_semaphore, #tpu.memory_space<semaphore_mem>>)
      %c9_i32_190 = arith.constant 9 : i32
      %299 = arith.addi %217, %c9_i32_190 : i32
      %300 = arith.index_cast %299 : i32 to index
      %301 = memref.load %arg2[%300] : memref<96xi32, #tpu.memory_space<smem>>
      %c9_i32_191 = arith.constant 9 : i32
      %c9_i32_192 = arith.constant 9 : i32
      %c0_i32_193 = arith.constant 0 : i32
      %302 = tpu.memref_slice %arg3[%301, %c0_i32_193] : memref<1000x128xf32, #tpu.memory_space<any>> -> memref<1x128xf32, #tpu.memory_space<any>>
      %303 = tpu.memref_squeeze %302 : memref<1x128xf32, #tpu.memory_space<any>> -> memref<128xf32, #tpu.memory_space<any>>
      %c0_i32_194 = arith.constant 0 : i32
      %304 = tpu.memref_slice %arg5[%214, %c9_i32_191, %c0_i32_194] : memref<2x32x128xf32, #tpu.memory_space<vmem>> -> memref<1x1x128xf32, #tpu.memory_space<vmem>>
      %305 = tpu.memref_squeeze %304 : memref<1x1x128xf32, #tpu.memory_space<vmem>> -> memref<128xf32, #tpu.memory_space<vmem>>
      %306 = tpu.memref_slice %arg6[%214, %c9_i32_192] : memref<2x32x!tpu.dma_semaphore, #tpu.memory_space<semaphore_mem>> -> memref<1x1x!tpu.dma_semaphore, #tpu.memory_space<semaphore_mem>>
      %307 = tpu.memref_squeeze %306 : memref<1x1x!tpu.dma_semaphore, #tpu.memory_space<semaphore_mem>> -> memref<!tpu.dma_semaphore, #tpu.memory_space<semaphore_mem>>
      tpu.enqueue_dma source(%303 : memref<128xf32, #tpu.memory_space<any>>) target(%305 : memref<128xf32, #tpu.memory_space<vmem>>) target_semaphore(%307 : memref<!tpu.dma_semaphore, #tpu.memory_space<semaphore_mem>>)
      %c10_i32_195 = arith.constant 10 : i32
      %308 = arith.addi %217, %c10_i32_195 : i32
      %309 = arith.index_cast %308 : i32 to index
      %310 = memref.load %arg2[%309] : memref<96xi32, #tpu.memory_space<smem>>
      %c10_i32_196 = arith.constant 10 : i32
      %c10_i32_197 = arith.constant 10 : i32
      %c0_i32_198 = arith.constant 0 : i32
      %311 = tpu.memref_slice %arg3[%310, %c0_i32_198] : memref<1000x128xf32, #tpu.memory_space<any>> -> memref<1x128xf32, #tpu.memory_space<any>>
      %312 = tpu.memref_squeeze %311 : memref<1x128xf32, #tpu.memory_space<any>> -> memref<128xf32, #tpu.memory_space<any>>
      %c0_i32_199 = arith.constant 0 : i32
      %313 = tpu.memref_slice %arg5[%214, %c10_i32_196, %c0_i32_199] : memref<2x32x128xf32, #tpu.memory_space<vmem>> -> memref<1x1x128xf32, #tpu.memory_space<vmem>>
      %314 = tpu.memref_squeeze %313 : memref<1x1x128xf32, #tpu.memory_space<vmem>> -> memref<128xf32, #tpu.memory_space<vmem>>
      %315 = tpu.memref_slice %arg6[%214, %c10_i32_197] : memref<2x32x!tpu.dma_semaphore, #tpu.memory_space<semaphore_mem>> -> memref<1x1x!tpu.dma_semaphore, #tpu.memory_space<semaphore_mem>>
      %316 = tpu.memref_squeeze %315 : memref<1x1x!tpu.dma_semaphore, #tpu.memory_space<semaphore_mem>> -> memref<!tpu.dma_semaphore, #tpu.memory_space<semaphore_mem>>
      tpu.enqueue_dma source(%312 : memref<128xf32, #tpu.memory_space<any>>) target(%314 : memref<128xf32, #tpu.memory_space<vmem>>) target_semaphore(%316 : memref<!tpu.dma_semaphore, #tpu.memory_space<semaphore_mem>>)
      %c11_i32_200 = arith.constant 11 : i32
      %317 = arith.addi %217, %c11_i32_200 : i32
      %318 = arith.index_cast %317 : i32 to index
      %319 = memref.load %arg2[%318] : memref<96xi32, #tpu.memory_space<smem>>
      %c11_i32_201 = arith.constant 11 : i32
      %c11_i32_202 = arith.constant 11 : i32
      %c0_i32_203 = arith.constant 0 : i32
      %320 = tpu.memref_slice %arg3[%319, %c0_i32_203] : memref<1000x128xf32, #tpu.memory_space<any>> -> memref<1x128xf32, #tpu.memory_space<any>>
      %321 = tpu.memref_squeeze %320 : memref<1x128xf32, #tpu.memory_space<any>> -> memref<128xf32, #tpu.memory_space<any>>
      %c0_i32_204 = arith.constant 0 : i32
      %322 = tpu.memref_slice %arg5[%214, %c11_i32_201, %c0_i32_204] : memref<2x32x128xf32, #tpu.memory_space<vmem>> -> memref<1x1x128xf32, #tpu.memory_space<vmem>>
      %323 = tpu.memref_squeeze %322 : memref<1x1x128xf32, #tpu.memory_space<vmem>> -> memref<128xf32, #tpu.memory_space<vmem>>
      %324 = tpu.memref_slice %arg6[%214, %c11_i32_202] : memref<2x32x!tpu.dma_semaphore, #tpu.memory_space<semaphore_mem>> -> memref<1x1x!tpu.dma_semaphore, #tpu.memory_space<semaphore_mem>>
      %325 = tpu.memref_squeeze %324 : memref<1x1x!tpu.dma_semaphore, #tpu.memory_space<semaphore_mem>> -> memref<!tpu.dma_semaphore, #tpu.memory_space<semaphore_mem>>
      tpu.enqueue_dma source(%321 : memref<128xf32, #tpu.memory_space<any>>) target(%323 : memref<128xf32, #tpu.memory_space<vmem>>) target_semaphore(%325 : memref<!tpu.dma_semaphore, #tpu.memory_space<semaphore_mem>>)
      %c12_i32_205 = arith.constant 12 : i32
      %326 = arith.addi %217, %c12_i32_205 : i32
      %327 = arith.index_cast %326 : i32 to index
      %328 = memref.load %arg2[%327] : memref<96xi32, #tpu.memory_space<smem>>
      %c12_i32_206 = arith.constant 12 : i32
      %c12_i32_207 = arith.constant 12 : i32
      %c0_i32_208 = arith.constant 0 : i32
      %329 = tpu.memref_slice %arg3[%328, %c0_i32_208] : memref<1000x128xf32, #tpu.memory_space<any>> -> memref<1x128xf32, #tpu.memory_space<any>>
      %330 = tpu.memref_squeeze %329 : memref<1x128xf32, #tpu.memory_space<any>> -> memref<128xf32, #tpu.memory_space<any>>
      %c0_i32_209 = arith.constant 0 : i32
      %331 = tpu.memref_slice %arg5[%214, %c12_i32_206, %c0_i32_209] : memref<2x32x128xf32, #tpu.memory_space<vmem>> -> memref<1x1x128xf32, #tpu.memory_space<vmem>>
      %332 = tpu.memref_squeeze %331 : memref<1x1x128xf32, #tpu.memory_space<vmem>> -> memref<128xf32, #tpu.memory_space<vmem>>
      %333 = tpu.memref_slice %arg6[%214, %c12_i32_207] : memref<2x32x!tpu.dma_semaphore, #tpu.memory_space<semaphore_mem>> -> memref<1x1x!tpu.dma_semaphore, #tpu.memory_space<semaphore_mem>>
      %334 = tpu.memref_squeeze %333 : memref<1x1x!tpu.dma_semaphore, #tpu.memory_space<semaphore_mem>> -> memref<!tpu.dma_semaphore, #tpu.memory_space<semaphore_mem>>
      tpu.enqueue_dma source(%330 : memref<128xf32, #tpu.memory_space<any>>) target(%332 : memref<128xf32, #tpu.memory_space<vmem>>) target_semaphore(%334 : memref<!tpu.dma_semaphore, #tpu.memory_space<semaphore_mem>>)
      %c13_i32_210 = arith.constant 13 : i32
      %335 = arith.addi %217, %c13_i32_210 : i32
      %336 = arith.index_cast %335 : i32 to index
      %337 = memref.load %arg2[%336] : memref<96xi32, #tpu.memory_space<smem>>
      %c13_i32_211 = arith.constant 13 : i32
      %c13_i32_212 = arith.constant 13 : i32
      %c0_i32_213 = arith.constant 0 : i32
      %338 = tpu.memref_slice %arg3[%337, %c0_i32_213] : memref<1000x128xf32, #tpu.memory_space<any>> -> memref<1x128xf32, #tpu.memory_space<any>>
      %339 = tpu.memref_squeeze %338 : memref<1x128xf32, #tpu.memory_space<any>> -> memref<128xf32, #tpu.memory_space<any>>
      %c0_i32_214 = arith.constant 0 : i32
      %340 = tpu.memref_slice %arg5[%214, %c13_i32_211, %c0_i32_214] : memref<2x32x128xf32, #tpu.memory_space<vmem>> -> memref<1x1x128xf32, #tpu.memory_space<vmem>>
      %341 = tpu.memref_squeeze %340 : memref<1x1x128xf32, #tpu.memory_space<vmem>> -> memref<128xf32, #tpu.memory_space<vmem>>
      %342 = tpu.memref_slice %arg6[%214, %c13_i32_212] : memref<2x32x!tpu.dma_semaphore, #tpu.memory_space<semaphore_mem>> -> memref<1x1x!tpu.dma_semaphore, #tpu.memory_space<semaphore_mem>>
      %343 = tpu.memref_squeeze %342 : memref<1x1x!tpu.dma_semaphore, #tpu.memory_space<semaphore_mem>> -> memref<!tpu.dma_semaphore, #tpu.memory_space<semaphore_mem>>
      tpu.enqueue_dma source(%339 : memref<128xf32, #tpu.memory_space<any>>) target(%341 : memref<128xf32, #tpu.memory_space<vmem>>) target_semaphore(%343 : memref<!tpu.dma_semaphore, #tpu.memory_space<semaphore_mem>>)
      %c14_i32_215 = arith.constant 14 : i32
      %344 = arith.addi %217, %c14_i32_215 : i32
      %345 = arith.index_cast %344 : i32 to index
      %346 = memref.load %arg2[%345] : memref<96xi32, #tpu.memory_space<smem>>
      %c14_i32_216 = arith.constant 14 : i32
      %c14_i32_217 = arith.constant 14 : i32
      %c0_i32_218 = arith.constant 0 : i32
      %347 = tpu.memref_slice %arg3[%346, %c0_i32_218] : memref<1000x128xf32, #tpu.memory_space<any>> -> memref<1x128xf32, #tpu.memory_space<any>>
      %348 = tpu.memref_squeeze %347 : memref<1x128xf32, #tpu.memory_space<any>> -> memref<128xf32, #tpu.memory_space<any>>
      %c0_i32_219 = arith.constant 0 : i32
      %349 = tpu.memref_slice %arg5[%214, %c14_i32_216, %c0_i32_219] : memref<2x32x128xf32, #tpu.memory_space<vmem>> -> memref<1x1x128xf32, #tpu.memory_space<vmem>>
      %350 = tpu.memref_squeeze %349 : memref<1x1x128xf32, #tpu.memory_space<vmem>> -> memref<128xf32, #tpu.memory_space<vmem>>
      %351 = tpu.memref_slice %arg6[%214, %c14_i32_217] : memref<2x32x!tpu.dma_semaphore, #tpu.memory_space<semaphore_mem>> -> memref<1x1x!tpu.dma_semaphore, #tpu.memory_space<semaphore_mem>>
      %352 = tpu.memref_squeeze %351 : memref<1x1x!tpu.dma_semaphore, #tpu.memory_space<semaphore_mem>> -> memref<!tpu.dma_semaphore, #tpu.memory_space<semaphore_mem>>
      tpu.enqueue_dma source(%348 : memref<128xf32, #tpu.memory_space<any>>) target(%350 : memref<128xf32, #tpu.memory_space<vmem>>) target_semaphore(%352 : memref<!tpu.dma_semaphore, #tpu.memory_space<semaphore_mem>>)
      %c15_i32_220 = arith.constant 15 : i32
      %353 = arith.addi %217, %c15_i32_220 : i32
      %354 = arith.index_cast %353 : i32 to index
      %355 = memref.load %arg2[%354] : memref<96xi32, #tpu.memory_space<smem>>
      %c15_i32_221 = arith.constant 15 : i32
      %c15_i32_222 = arith.constant 15 : i32
      %c0_i32_223 = arith.constant 0 : i32
      %356 = tpu.memref_slice %arg3[%355, %c0_i32_223] : memref<1000x128xf32, #tpu.memory_space<any>> -> memref<1x128xf32, #tpu.memory_space<any>>
      %357 = tpu.memref_squeeze %356 : memref<1x128xf32, #tpu.memory_space<any>> -> memref<128xf32, #tpu.memory_space<any>>
      %c0_i32_224 = arith.constant 0 : i32
      %358 = tpu.memref_slice %arg5[%214, %c15_i32_221, %c0_i32_224] : memref<2x32x128xf32, #tpu.memory_space<vmem>> -> memref<1x1x128xf32, #tpu.memory_space<vmem>>
      %359 = tpu.memref_squeeze %358 : memref<1x1x128xf32, #tpu.memory_space<vmem>> -> memref<128xf32, #tpu.memory_space<vmem>>
      %360 = tpu.memref_slice %arg6[%214, %c15_i32_222] : memref<2x32x!tpu.dma_semaphore, #tpu.memory_space<semaphore_mem>> -> memref<1x1x!tpu.dma_semaphore, #tpu.memory_space<semaphore_mem>>
      %361 = tpu.memref_squeeze %360 : memref<1x1x!tpu.dma_semaphore, #tpu.memory_space<semaphore_mem>> -> memref<!tpu.dma_semaphore, #tpu.memory_space<semaphore_mem>>
      tpu.enqueue_dma source(%357 : memref<128xf32, #tpu.memory_space<any>>) target(%359 : memref<128xf32, #tpu.memory_space<vmem>>) target_semaphore(%361 : memref<!tpu.dma_semaphore, #tpu.memory_space<semaphore_mem>>)
      %c16_i32_225 = arith.constant 16 : i32
      %362 = arith.addi %217, %c16_i32_225 : i32
      %363 = arith.index_cast %362 : i32 to index
      %364 = memref.load %arg2[%363] : memref<96xi32, #tpu.memory_space<smem>>
      %c16_i32_226 = arith.constant 16 : i32
      %c16_i32_227 = arith.constant 16 : i32
      %c0_i32_228 = arith.constant 0 : i32
      %365 = tpu.memref_slice %arg3[%364, %c0_i32_228] : memref<1000x128xf32, #tpu.memory_space<any>> -> memref<1x128xf32, #tpu.memory_space<any>>
      %366 = tpu.memref_squeeze %365 : memref<1x128xf32, #tpu.memory_space<any>> -> memref<128xf32, #tpu.memory_space<any>>
      %c0_i32_229 = arith.constant 0 : i32
      %367 = tpu.memref_slice %arg5[%214, %c16_i32_226, %c0_i32_229] : memref<2x32x128xf32, #tpu.memory_space<vmem>> -> memref<1x1x128xf32, #tpu.memory_space<vmem>>
      %368 = tpu.memref_squeeze %367 : memref<1x1x128xf32, #tpu.memory_space<vmem>> -> memref<128xf32, #tpu.memory_space<vmem>>
      %369 = tpu.memref_slice %arg6[%214, %c16_i32_227] : memref<2x32x!tpu.dma_semaphore, #tpu.memory_space<semaphore_mem>> -> memref<1x1x!tpu.dma_semaphore, #tpu.memory_space<semaphore_mem>>
      %370 = tpu.memref_squeeze %369 : memref<1x1x!tpu.dma_semaphore, #tpu.memory_space<semaphore_mem>> -> memref<!tpu.dma_semaphore, #tpu.memory_space<semaphore_mem>>
      tpu.enqueue_dma source(%366 : memref<128xf32, #tpu.memory_space<any>>) target(%368 : memref<128xf32, #tpu.memory_space<vmem>>) target_semaphore(%370 : memref<!tpu.dma_semaphore, #tpu.memory_space<semaphore_mem>>)
      %c17_i32_230 = arith.constant 17 : i32
      %371 = arith.addi %217, %c17_i32_230 : i32
      %372 = arith.index_cast %371 : i32 to index
      %373 = memref.load %arg2[%372] : memref<96xi32, #tpu.memory_space<smem>>
      %c17_i32_231 = arith.constant 17 : i32
      %c17_i32_232 = arith.constant 17 : i32
      %c0_i32_233 = arith.constant 0 : i32
      %374 = tpu.memref_slice %arg3[%373, %c0_i32_233] : memref<1000x128xf32, #tpu.memory_space<any>> -> memref<1x128xf32, #tpu.memory_space<any>>
      %375 = tpu.memref_squeeze %374 : memref<1x128xf32, #tpu.memory_space<any>> -> memref<128xf32, #tpu.memory_space<any>>
      %c0_i32_234 = arith.constant 0 : i32
      %376 = tpu.memref_slice %arg5[%214, %c17_i32_231, %c0_i32_234] : memref<2x32x128xf32, #tpu.memory_space<vmem>> -> memref<1x1x128xf32, #tpu.memory_space<vmem>>
      %377 = tpu.memref_squeeze %376 : memref<1x1x128xf32, #tpu.memory_space<vmem>> -> memref<128xf32, #tpu.memory_space<vmem>>
      %378 = tpu.memref_slice %arg6[%214, %c17_i32_232] : memref<2x32x!tpu.dma_semaphore, #tpu.memory_space<semaphore_mem>> -> memref<1x1x!tpu.dma_semaphore, #tpu.memory_space<semaphore_mem>>
      %379 = tpu.memref_squeeze %378 : memref<1x1x!tpu.dma_semaphore, #tpu.memory_space<semaphore_mem>> -> memref<!tpu.dma_semaphore, #tpu.memory_space<semaphore_mem>>
      tpu.enqueue_dma source(%375 : memref<128xf32, #tpu.memory_space<any>>) target(%377 : memref<128xf32, #tpu.memory_space<vmem>>) target_semaphore(%379 : memref<!tpu.dma_semaphore, #tpu.memory_space<semaphore_mem>>)
      %c18_i32_235 = arith.constant 18 : i32
      %380 = arith.addi %217, %c18_i32_235 : i32
      %381 = arith.index_cast %380 : i32 to index
      %382 = memref.load %arg2[%381] : memref<96xi32, #tpu.memory_space<smem>>
      %c18_i32_236 = arith.constant 18 : i32
      %c18_i32_237 = arith.constant 18 : i32
      %c0_i32_238 = arith.constant 0 : i32
      %383 = tpu.memref_slice %arg3[%382, %c0_i32_238] : memref<1000x128xf32, #tpu.memory_space<any>> -> memref<1x128xf32, #tpu.memory_space<any>>
      %384 = tpu.memref_squeeze %383 : memref<1x128xf32, #tpu.memory_space<any>> -> memref<128xf32, #tpu.memory_space<any>>
      %c0_i32_239 = arith.constant 0 : i32
      %385 = tpu.memref_slice %arg5[%214, %c18_i32_236, %c0_i32_239] : memref<2x32x128xf32, #tpu.memory_space<vmem>> -> memref<1x1x128xf32, #tpu.memory_space<vmem>>
      %386 = tpu.memref_squeeze %385 : memref<1x1x128xf32, #tpu.memory_space<vmem>> -> memref<128xf32, #tpu.memory_space<vmem>>
      %387 = tpu.memref_slice %arg6[%214, %c18_i32_237] : memref<2x32x!tpu.dma_semaphore, #tpu.memory_space<semaphore_mem>> -> memref<1x1x!tpu.dma_semaphore, #tpu.memory_space<semaphore_mem>>
      %388 = tpu.memref_squeeze %387 : memref<1x1x!tpu.dma_semaphore, #tpu.memory_space<semaphore_mem>> -> memref<!tpu.dma_semaphore, #tpu.memory_space<semaphore_mem>>
      tpu.enqueue_dma source(%384 : memref<128xf32, #tpu.memory_space<any>>) target(%386 : memref<128xf32, #tpu.memory_space<vmem>>) target_semaphore(%388 : memref<!tpu.dma_semaphore, #tpu.memory_space<semaphore_mem>>)
      %c19_i32_240 = arith.constant 19 : i32
      %389 = arith.addi %217, %c19_i32_240 : i32
      %390 = arith.index_cast %389 : i32 to index
      %391 = memref.load %arg2[%390] : memref<96xi32, #tpu.memory_space<smem>>
      %c19_i32_241 = arith.constant 19 : i32
      %c19_i32_242 = arith.constant 19 : i32
      %c0_i32_243 = arith.constant 0 : i32
      %392 = tpu.memref_slice %arg3[%391, %c0_i32_243] : memref<1000x128xf32, #tpu.memory_space<any>> -> memref<1x128xf32, #tpu.memory_space<any>>
      %393 = tpu.memref_squeeze %392 : memref<1x128xf32, #tpu.memory_space<any>> -> memref<128xf32, #tpu.memory_space<any>>
      %c0_i32_244 = arith.constant 0 : i32
      %394 = tpu.memref_slice %arg5[%214, %c19_i32_241, %c0_i32_244] : memref<2x32x128xf32, #tpu.memory_space<vmem>> -> memref<1x1x128xf32, #tpu.memory_space<vmem>>
      %395 = tpu.memref_squeeze %394 : memref<1x1x128xf32, #tpu.memory_space<vmem>> -> memref<128xf32, #tpu.memory_space<vmem>>
      %396 = tpu.memref_slice %arg6[%214, %c19_i32_242] : memref<2x32x!tpu.dma_semaphore, #tpu.memory_space<semaphore_mem>> -> memref<1x1x!tpu.dma_semaphore, #tpu.memory_space<semaphore_mem>>
      %397 = tpu.memref_squeeze %396 : memref<1x1x!tpu.dma_semaphore, #tpu.memory_space<semaphore_mem>> -> memref<!tpu.dma_semaphore, #tpu.memory_space<semaphore_mem>>
      tpu.enqueue_dma source(%393 : memref<128xf32, #tpu.memory_space<any>>) target(%395 : memref<128xf32, #tpu.memory_space<vmem>>) target_semaphore(%397 : memref<!tpu.dma_semaphore, #tpu.memory_space<semaphore_mem>>)
      %c20_i32_245 = arith.constant 20 : i32
      %398 = arith.addi %217, %c20_i32_245 : i32
      %399 = arith.index_cast %398 : i32 to index
      %400 = memref.load %arg2[%399] : memref<96xi32, #tpu.memory_space<smem>>
      %c20_i32_246 = arith.constant 20 : i32
      %c20_i32_247 = arith.constant 20 : i32
      %c0_i32_248 = arith.constant 0 : i32
      %401 = tpu.memref_slice %arg3[%400, %c0_i32_248] : memref<1000x128xf32, #tpu.memory_space<any>> -> memref<1x128xf32, #tpu.memory_space<any>>
      %402 = tpu.memref_squeeze %401 : memref<1x128xf32, #tpu.memory_space<any>> -> memref<128xf32, #tpu.memory_space<any>>
      %c0_i32_249 = arith.constant 0 : i32
      %403 = tpu.memref_slice %arg5[%214, %c20_i32_246, %c0_i32_249] : memref<2x32x128xf32, #tpu.memory_space<vmem>> -> memref<1x1x128xf32, #tpu.memory_space<vmem>>
      %404 = tpu.memref_squeeze %403 : memref<1x1x128xf32, #tpu.memory_space<vmem>> -> memref<128xf32, #tpu.memory_space<vmem>>
      %405 = tpu.memref_slice %arg6[%214, %c20_i32_247] : memref<2x32x!tpu.dma_semaphore, #tpu.memory_space<semaphore_mem>> -> memref<1x1x!tpu.dma_semaphore, #tpu.memory_space<semaphore_mem>>
      %406 = tpu.memref_squeeze %405 : memref<1x1x!tpu.dma_semaphore, #tpu.memory_space<semaphore_mem>> -> memref<!tpu.dma_semaphore, #tpu.memory_space<semaphore_mem>>
      tpu.enqueue_dma source(%402 : memref<128xf32, #tpu.memory_space<any>>) target(%404 : memref<128xf32, #tpu.memory_space<vmem>>) target_semaphore(%406 : memref<!tpu.dma_semaphore, #tpu.memory_space<semaphore_mem>>)
      %c21_i32_250 = arith.constant 21 : i32
      %407 = arith.addi %217, %c21_i32_250 : i32
      %408 = arith.index_cast %407 : i32 to index
      %409 = memref.load %arg2[%408] : memref<96xi32, #tpu.memory_space<smem>>
      %c21_i32_251 = arith.constant 21 : i32
      %c21_i32_252 = arith.constant 21 : i32
      %c0_i32_253 = arith.constant 0 : i32
      %410 = tpu.memref_slice %arg3[%409, %c0_i32_253] : memref<1000x128xf32, #tpu.memory_space<any>> -> memref<1x128xf32, #tpu.memory_space<any>>
      %411 = tpu.memref_squeeze %410 : memref<1x128xf32, #tpu.memory_space<any>> -> memref<128xf32, #tpu.memory_space<any>>
      %c0_i32_254 = arith.constant 0 : i32
      %412 = tpu.memref_slice %arg5[%214, %c21_i32_251, %c0_i32_254] : memref<2x32x128xf32, #tpu.memory_space<vmem>> -> memref<1x1x128xf32, #tpu.memory_space<vmem>>
      %413 = tpu.memref_squeeze %412 : memref<1x1x128xf32, #tpu.memory_space<vmem>> -> memref<128xf32, #tpu.memory_space<vmem>>
      %414 = tpu.memref_slice %arg6[%214, %c21_i32_252] : memref<2x32x!tpu.dma_semaphore, #tpu.memory_space<semaphore_mem>> -> memref<1x1x!tpu.dma_semaphore, #tpu.memory_space<semaphore_mem>>
      %415 = tpu.memref_squeeze %414 : memref<1x1x!tpu.dma_semaphore, #tpu.memory_space<semaphore_mem>> -> memref<!tpu.dma_semaphore, #tpu.memory_space<semaphore_mem>>
      tpu.enqueue_dma source(%411 : memref<128xf32, #tpu.memory_space<any>>) target(%413 : memref<128xf32, #tpu.memory_space<vmem>>) target_semaphore(%415 : memref<!tpu.dma_semaphore, #tpu.memory_space<semaphore_mem>>)
      %c22_i32_255 = arith.constant 22 : i32
      %416 = arith.addi %217, %c22_i32_255 : i32
      %417 = arith.index_cast %416 : i32 to index
      %418 = memref.load %arg2[%417] : memref<96xi32, #tpu.memory_space<smem>>
      %c22_i32_256 = arith.constant 22 : i32
      %c22_i32_257 = arith.constant 22 : i32
      %c0_i32_258 = arith.constant 0 : i32
      %419 = tpu.memref_slice %arg3[%418, %c0_i32_258] : memref<1000x128xf32, #tpu.memory_space<any>> -> memref<1x128xf32, #tpu.memory_space<any>>
      %420 = tpu.memref_squeeze %419 : memref<1x128xf32, #tpu.memory_space<any>> -> memref<128xf32, #tpu.memory_space<any>>
      %c0_i32_259 = arith.constant 0 : i32
      %421 = tpu.memref_slice %arg5[%214, %c22_i32_256, %c0_i32_259] : memref<2x32x128xf32, #tpu.memory_space<vmem>> -> memref<1x1x128xf32, #tpu.memory_space<vmem>>
      %422 = tpu.memref_squeeze %421 : memref<1x1x128xf32, #tpu.memory_space<vmem>> -> memref<128xf32, #tpu.memory_space<vmem>>
      %423 = tpu.memref_slice %arg6[%214, %c22_i32_257] : memref<2x32x!tpu.dma_semaphore, #tpu.memory_space<semaphore_mem>> -> memref<1x1x!tpu.dma_semaphore, #tpu.memory_space<semaphore_mem>>
      %424 = tpu.memref_squeeze %423 : memref<1x1x!tpu.dma_semaphore, #tpu.memory_space<semaphore_mem>> -> memref<!tpu.dma_semaphore, #tpu.memory_space<semaphore_mem>>
      tpu.enqueue_dma source(%420 : memref<128xf32, #tpu.memory_space<any>>) target(%422 : memref<128xf32, #tpu.memory_space<vmem>>) target_semaphore(%424 : memref<!tpu.dma_semaphore, #tpu.memory_space<semaphore_mem>>)
      %c23_i32_260 = arith.constant 23 : i32
      %425 = arith.addi %217, %c23_i32_260 : i32
      %426 = arith.index_cast %425 : i32 to index
      %427 = memref.load %arg2[%426] : memref<96xi32, #tpu.memory_space<smem>>
      %c23_i32_261 = arith.constant 23 : i32
      %c23_i32_262 = arith.constant 23 : i32
      %c0_i32_263 = arith.constant 0 : i32
      %428 = tpu.memref_slice %arg3[%427, %c0_i32_263] : memref<1000x128xf32, #tpu.memory_space<any>> -> memref<1x128xf32, #tpu.memory_space<any>>
      %429 = tpu.memref_squeeze %428 : memref<1x128xf32, #tpu.memory_space<any>> -> memref<128xf32, #tpu.memory_space<any>>
      %c0_i32_264 = arith.constant 0 : i32
      %430 = tpu.memref_slice %arg5[%214, %c23_i32_261, %c0_i32_264] : memref<2x32x128xf32, #tpu.memory_space<vmem>> -> memref<1x1x128xf32, #tpu.memory_space<vmem>>
      %431 = tpu.memref_squeeze %430 : memref<1x1x128xf32, #tpu.memory_space<vmem>> -> memref<128xf32, #tpu.memory_space<vmem>>
      %432 = tpu.memref_slice %arg6[%214, %c23_i32_262] : memref<2x32x!tpu.dma_semaphore, #tpu.memory_space<semaphore_mem>> -> memref<1x1x!tpu.dma_semaphore, #tpu.memory_space<semaphore_mem>>
      %433 = tpu.memref_squeeze %432 : memref<1x1x!tpu.dma_semaphore, #tpu.memory_space<semaphore_mem>> -> memref<!tpu.dma_semaphore, #tpu.memory_space<semaphore_mem>>
      tpu.enqueue_dma source(%429 : memref<128xf32, #tpu.memory_space<any>>) target(%431 : memref<128xf32, #tpu.memory_space<vmem>>) target_semaphore(%433 : memref<!tpu.dma_semaphore, #tpu.memory_space<semaphore_mem>>)
      %c24_i32_265 = arith.constant 24 : i32
      %434 = arith.addi %217, %c24_i32_265 : i32
      %435 = arith.index_cast %434 : i32 to index
      %436 = memref.load %arg2[%435] : memref<96xi32, #tpu.memory_space<smem>>
      %c24_i32_266 = arith.constant 24 : i32
      %c24_i32_267 = arith.constant 24 : i32
      %c0_i32_268 = arith.constant 0 : i32
      %437 = tpu.memref_slice %arg3[%436, %c0_i32_268] : memref<1000x128xf32, #tpu.memory_space<any>> -> memref<1x128xf32, #tpu.memory_space<any>>
      %438 = tpu.memref_squeeze %437 : memref<1x128xf32, #tpu.memory_space<any>> -> memref<128xf32, #tpu.memory_space<any>>
      %c0_i32_269 = arith.constant 0 : i32
      %439 = tpu.memref_slice %arg5[%214, %c24_i32_266, %c0_i32_269] : memref<2x32x128xf32, #tpu.memory_space<vmem>> -> memref<1x1x128xf32, #tpu.memory_space<vmem>>
      %440 = tpu.memref_squeeze %439 : memref<1x1x128xf32, #tpu.memory_space<vmem>> -> memref<128xf32, #tpu.memory_space<vmem>>
      %441 = tpu.memref_slice %arg6[%214, %c24_i32_267] : memref<2x32x!tpu.dma_semaphore, #tpu.memory_space<semaphore_mem>> -> memref<1x1x!tpu.dma_semaphore, #tpu.memory_space<semaphore_mem>>
      %442 = tpu.memref_squeeze %441 : memref<1x1x!tpu.dma_semaphore, #tpu.memory_space<semaphore_mem>> -> memref<!tpu.dma_semaphore, #tpu.memory_space<semaphore_mem>>
      tpu.enqueue_dma source(%438 : memref<128xf32, #tpu.memory_space<any>>) target(%440 : memref<128xf32, #tpu.memory_space<vmem>>) target_semaphore(%442 : memref<!tpu.dma_semaphore, #tpu.memory_space<semaphore_mem>>)
      %c25_i32_270 = arith.constant 25 : i32
      %443 = arith.addi %217, %c25_i32_270 : i32
      %444 = arith.index_cast %443 : i32 to index
      %445 = memref.load %arg2[%444] : memref<96xi32, #tpu.memory_space<smem>>
      %c25_i32_271 = arith.constant 25 : i32
      %c25_i32_272 = arith.constant 25 : i32
      %c0_i32_273 = arith.constant 0 : i32
      %446 = tpu.memref_slice %arg3[%445, %c0_i32_273] : memref<1000x128xf32, #tpu.memory_space<any>> -> memref<1x128xf32, #tpu.memory_space<any>>
      %447 = tpu.memref_squeeze %446 : memref<1x128xf32, #tpu.memory_space<any>> -> memref<128xf32, #tpu.memory_space<any>>
      %c0_i32_274 = arith.constant 0 : i32
      %448 = tpu.memref_slice %arg5[%214, %c25_i32_271, %c0_i32_274] : memref<2x32x128xf32, #tpu.memory_space<vmem>> -> memref<1x1x128xf32, #tpu.memory_space<vmem>>
      %449 = tpu.memref_squeeze %448 : memref<1x1x128xf32, #tpu.memory_space<vmem>> -> memref<128xf32, #tpu.memory_space<vmem>>
      %450 = tpu.memref_slice %arg6[%214, %c25_i32_272] : memref<2x32x!tpu.dma_semaphore, #tpu.memory_space<semaphore_mem>> -> memref<1x1x!tpu.dma_semaphore, #tpu.memory_space<semaphore_mem>>
      %451 = tpu.memref_squeeze %450 : memref<1x1x!tpu.dma_semaphore, #tpu.memory_space<semaphore_mem>> -> memref<!tpu.dma_semaphore, #tpu.memory_space<semaphore_mem>>
      tpu.enqueue_dma source(%447 : memref<128xf32, #tpu.memory_space<any>>) target(%449 : memref<128xf32, #tpu.memory_space<vmem>>) target_semaphore(%451 : memref<!tpu.dma_semaphore, #tpu.memory_space<semaphore_mem>>)
      %c26_i32_275 = arith.constant 26 : i32
      %452 = arith.addi %217, %c26_i32_275 : i32
      %453 = arith.index_cast %452 : i32 to index
      %454 = memref.load %arg2[%453] : memref<96xi32, #tpu.memory_space<smem>>
      %c26_i32_276 = arith.constant 26 : i32
      %c26_i32_277 = arith.constant 26 : i32
      %c0_i32_278 = arith.constant 0 : i32
      %455 = tpu.memref_slice %arg3[%454, %c0_i32_278] : memref<1000x128xf32, #tpu.memory_space<any>> -> memref<1x128xf32, #tpu.memory_space<any>>
      %456 = tpu.memref_squeeze %455 : memref<1x128xf32, #tpu.memory_space<any>> -> memref<128xf32, #tpu.memory_space<any>>
      %c0_i32_279 = arith.constant 0 : i32
      %457 = tpu.memref_slice %arg5[%214, %c26_i32_276, %c0_i32_279] : memref<2x32x128xf32, #tpu.memory_space<vmem>> -> memref<1x1x128xf32, #tpu.memory_space<vmem>>
      %458 = tpu.memref_squeeze %457 : memref<1x1x128xf32, #tpu.memory_space<vmem>> -> memref<128xf32, #tpu.memory_space<vmem>>
      %459 = tpu.memref_slice %arg6[%214, %c26_i32_277] : memref<2x32x!tpu.dma_semaphore, #tpu.memory_space<semaphore_mem>> -> memref<1x1x!tpu.dma_semaphore, #tpu.memory_space<semaphore_mem>>
      %460 = tpu.memref_squeeze %459 : memref<1x1x!tpu.dma_semaphore, #tpu.memory_space<semaphore_mem>> -> memref<!tpu.dma_semaphore, #tpu.memory_space<semaphore_mem>>
      tpu.enqueue_dma source(%456 : memref<128xf32, #tpu.memory_space<any>>) target(%458 : memref<128xf32, #tpu.memory_space<vmem>>) target_semaphore(%460 : memref<!tpu.dma_semaphore, #tpu.memory_space<semaphore_mem>>)
      %c27_i32_280 = arith.constant 27 : i32
      %461 = arith.addi %217, %c27_i32_280 : i32
      %462 = arith.index_cast %461 : i32 to index
      %463 = memref.load %arg2[%462] : memref<96xi32, #tpu.memory_space<smem>>
      %c27_i32_281 = arith.constant 27 : i32
      %c27_i32_282 = arith.constant 27 : i32
      %c0_i32_283 = arith.constant 0 : i32
      %464 = tpu.memref_slice %arg3[%463, %c0_i32_283] : memref<1000x128xf32, #tpu.memory_space<any>> -> memref<1x128xf32, #tpu.memory_space<any>>
      %465 = tpu.memref_squeeze %464 : memref<1x128xf32, #tpu.memory_space<any>> -> memref<128xf32, #tpu.memory_space<any>>
      %c0_i32_284 = arith.constant 0 : i32
      %466 = tpu.memref_slice %arg5[%214, %c27_i32_281, %c0_i32_284] : memref<2x32x128xf32, #tpu.memory_space<vmem>> -> memref<1x1x128xf32, #tpu.memory_space<vmem>>
      %467 = tpu.memref_squeeze %466 : memref<1x1x128xf32, #tpu.memory_space<vmem>> -> memref<128xf32, #tpu.memory_space<vmem>>
      %468 = tpu.memref_slice %arg6[%214, %c27_i32_282] : memref<2x32x!tpu.dma_semaphore, #tpu.memory_space<semaphore_mem>> -> memref<1x1x!tpu.dma_semaphore, #tpu.memory_space<semaphore_mem>>
      %469 = tpu.memref_squeeze %468 : memref<1x1x!tpu.dma_semaphore, #tpu.memory_space<semaphore_mem>> -> memref<!tpu.dma_semaphore, #tpu.memory_space<semaphore_mem>>
      tpu.enqueue_dma source(%465 : memref<128xf32, #tpu.memory_space<any>>) target(%467 : memref<128xf32, #tpu.memory_space<vmem>>) target_semaphore(%469 : memref<!tpu.dma_semaphore, #tpu.memory_space<semaphore_mem>>)
      %c28_i32_285 = arith.constant 28 : i32
      %470 = arith.addi %217, %c28_i32_285 : i32
      %471 = arith.index_cast %470 : i32 to index
      %472 = memref.load %arg2[%471] : memref<96xi32, #tpu.memory_space<smem>>
      %c28_i32_286 = arith.constant 28 : i32
      %c28_i32_287 = arith.constant 28 : i32
      %c0_i32_288 = arith.constant 0 : i32
      %473 = tpu.memref_slice %arg3[%472, %c0_i32_288] : memref<1000x128xf32, #tpu.memory_space<any>> -> memref<1x128xf32, #tpu.memory_space<any>>
      %474 = tpu.memref_squeeze %473 : memref<1x128xf32, #tpu.memory_space<any>> -> memref<128xf32, #tpu.memory_space<any>>
      %c0_i32_289 = arith.constant 0 : i32
      %475 = tpu.memref_slice %arg5[%214, %c28_i32_286, %c0_i32_289] : memref<2x32x128xf32, #tpu.memory_space<vmem>> -> memref<1x1x128xf32, #tpu.memory_space<vmem>>
      %476 = tpu.memref_squeeze %475 : memref<1x1x128xf32, #tpu.memory_space<vmem>> -> memref<128xf32, #tpu.memory_space<vmem>>
      %477 = tpu.memref_slice %arg6[%214, %c28_i32_287] : memref<2x32x!tpu.dma_semaphore, #tpu.memory_space<semaphore_mem>> -> memref<1x1x!tpu.dma_semaphore, #tpu.memory_space<semaphore_mem>>
      %478 = tpu.memref_squeeze %477 : memref<1x1x!tpu.dma_semaphore, #tpu.memory_space<semaphore_mem>> -> memref<!tpu.dma_semaphore, #tpu.memory_space<semaphore_mem>>
      tpu.enqueue_dma source(%474 : memref<128xf32, #tpu.memory_space<any>>) target(%476 : memref<128xf32, #tpu.memory_space<vmem>>) target_semaphore(%478 : memref<!tpu.dma_semaphore, #tpu.memory_space<semaphore_mem>>)
      %c29_i32_290 = arith.constant 29 : i32
      %479 = arith.addi %217, %c29_i32_290 : i32
      %480 = arith.index_cast %479 : i32 to index
      %481 = memref.load %arg2[%480] : memref<96xi32, #tpu.memory_space<smem>>
      %c29_i32_291 = arith.constant 29 : i32
      %c29_i32_292 = arith.constant 29 : i32
      %c0_i32_293 = arith.constant 0 : i32
      %482 = tpu.memref_slice %arg3[%481, %c0_i32_293] : memref<1000x128xf32, #tpu.memory_space<any>> -> memref<1x128xf32, #tpu.memory_space<any>>
      %483 = tpu.memref_squeeze %482 : memref<1x128xf32, #tpu.memory_space<any>> -> memref<128xf32, #tpu.memory_space<any>>
      %c0_i32_294 = arith.constant 0 : i32
      %484 = tpu.memref_slice %arg5[%214, %c29_i32_291, %c0_i32_294] : memref<2x32x128xf32, #tpu.memory_space<vmem>> -> memref<1x1x128xf32, #tpu.memory_space<vmem>>
      %485 = tpu.memref_squeeze %484 : memref<1x1x128xf32, #tpu.memory_space<vmem>> -> memref<128xf32, #tpu.memory_space<vmem>>
      %486 = tpu.memref_slice %arg6[%214, %c29_i32_292] : memref<2x32x!tpu.dma_semaphore, #tpu.memory_space<semaphore_mem>> -> memref<1x1x!tpu.dma_semaphore, #tpu.memory_space<semaphore_mem>>
      %487 = tpu.memref_squeeze %486 : memref<1x1x!tpu.dma_semaphore, #tpu.memory_space<semaphore_mem>> -> memref<!tpu.dma_semaphore, #tpu.memory_space<semaphore_mem>>
      tpu.enqueue_dma source(%483 : memref<128xf32, #tpu.memory_space<any>>) target(%485 : memref<128xf32, #tpu.memory_space<vmem>>) target_semaphore(%487 : memref<!tpu.dma_semaphore, #tpu.memory_space<semaphore_mem>>)
      %c30_i32_295 = arith.constant 30 : i32
      %488 = arith.addi %217, %c30_i32_295 : i32
      %489 = arith.index_cast %488 : i32 to index
      %490 = memref.load %arg2[%489] : memref<96xi32, #tpu.memory_space<smem>>
      %c30_i32_296 = arith.constant 30 : i32
      %c30_i32_297 = arith.constant 30 : i32
      %c0_i32_298 = arith.constant 0 : i32
      %491 = tpu.memref_slice %arg3[%490, %c0_i32_298] : memref<1000x128xf32, #tpu.memory_space<any>> -> memref<1x128xf32, #tpu.memory_space<any>>
      %492 = tpu.memref_squeeze %491 : memref<1x128xf32, #tpu.memory_space<any>> -> memref<128xf32, #tpu.memory_space<any>>
      %c0_i32_299 = arith.constant 0 : i32
      %493 = tpu.memref_slice %arg5[%214, %c30_i32_296, %c0_i32_299] : memref<2x32x128xf32, #tpu.memory_space<vmem>> -> memref<1x1x128xf32, #tpu.memory_space<vmem>>
      %494 = tpu.memref_squeeze %493 : memref<1x1x128xf32, #tpu.memory_space<vmem>> -> memref<128xf32, #tpu.memory_space<vmem>>
      %495 = tpu.memref_slice %arg6[%214, %c30_i32_297] : memref<2x32x!tpu.dma_semaphore, #tpu.memory_space<semaphore_mem>> -> memref<1x1x!tpu.dma_semaphore, #tpu.memory_space<semaphore_mem>>
      %496 = tpu.memref_squeeze %495 : memref<1x1x!tpu.dma_semaphore, #tpu.memory_space<semaphore_mem>> -> memref<!tpu.dma_semaphore, #tpu.memory_space<semaphore_mem>>
      tpu.enqueue_dma source(%492 : memref<128xf32, #tpu.memory_space<any>>) target(%494 : memref<128xf32, #tpu.memory_space<vmem>>) target_semaphore(%496 : memref<!tpu.dma_semaphore, #tpu.memory_space<semaphore_mem>>)
      %c31_i32_300 = arith.constant 31 : i32
      %497 = arith.addi %217, %c31_i32_300 : i32
      %498 = arith.index_cast %497 : i32 to index
      %499 = memref.load %arg2[%498] : memref<96xi32, #tpu.memory_space<smem>>
      %c31_i32_301 = arith.constant 31 : i32
      %c31_i32_302 = arith.constant 31 : i32
      %c0_i32_303 = arith.constant 0 : i32
      %500 = tpu.memref_slice %arg3[%499, %c0_i32_303] : memref<1000x128xf32, #tpu.memory_space<any>> -> memref<1x128xf32, #tpu.memory_space<any>>
      %501 = tpu.memref_squeeze %500 : memref<1x128xf32, #tpu.memory_space<any>> -> memref<128xf32, #tpu.memory_space<any>>
      %c0_i32_304 = arith.constant 0 : i32
      %502 = tpu.memref_slice %arg5[%214, %c31_i32_301, %c0_i32_304] : memref<2x32x128xf32, #tpu.memory_space<vmem>> -> memref<1x1x128xf32, #tpu.memory_space<vmem>>
      %503 = tpu.memref_squeeze %502 : memref<1x1x128xf32, #tpu.memory_space<vmem>> -> memref<128xf32, #tpu.memory_space<vmem>>
      %504 = tpu.memref_slice %arg6[%214, %c31_i32_302] : memref<2x32x!tpu.dma_semaphore, #tpu.memory_space<semaphore_mem>> -> memref<1x1x!tpu.dma_semaphore, #tpu.memory_space<semaphore_mem>>
      %505 = tpu.memref_squeeze %504 : memref<1x1x!tpu.dma_semaphore, #tpu.memory_space<semaphore_mem>> -> memref<!tpu.dma_semaphore, #tpu.memory_space<semaphore_mem>>
      tpu.enqueue_dma source(%501 : memref<128xf32, #tpu.memory_space<any>>) target(%503 : memref<128xf32, #tpu.memory_space<vmem>>) target_semaphore(%505 : memref<!tpu.dma_semaphore, #tpu.memory_space<semaphore_mem>>)
    } else {
    }
    %c0_i32_7 = arith.constant 0 : i32
    %c0_i32_8 = arith.constant 0 : i32
    %c0_i32_9 = arith.constant 0 : i32
    %c0_i32_10 = arith.constant 0 : i32
    %17 = tpu.memref_slice %arg3[%c0_i32_7, %c0_i32_10] : memref<1000x128xf32, #tpu.memory_space<any>> -> memref<1x128xf32, #tpu.memory_space<any>>
    %18 = tpu.memref_squeeze %17 : memref<1x128xf32, #tpu.memory_space<any>> -> memref<128xf32, #tpu.memory_space<any>>
    %c0_i32_11 = arith.constant 0 : i32
    %19 = tpu.memref_slice %arg5[%9, %c0_i32_8, %c0_i32_11] : memref<2x32x128xf32, #tpu.memory_space<vmem>> -> memref<1x1x128xf32, #tpu.memory_space<vmem>>
    %20 = tpu.memref_squeeze %19 : memref<1x1x128xf32, #tpu.memory_space<vmem>> -> memref<128xf32, #tpu.memory_space<vmem>>
    %21 = tpu.memref_slice %arg6[%9, %c0_i32_9] : memref<2x32x!tpu.dma_semaphore, #tpu.memory_space<semaphore_mem>> -> memref<1x1x!tpu.dma_semaphore, #tpu.memory_space<semaphore_mem>>
    %22 = tpu.memref_squeeze %21 : memref<1x1x!tpu.dma_semaphore, #tpu.memory_space<semaphore_mem>> -> memref<!tpu.dma_semaphore, #tpu.memory_space<semaphore_mem>>
    tpu.wait_dma2 semaphore(%22 : memref<!tpu.dma_semaphore, #tpu.memory_space<semaphore_mem>>) src(%18 : memref<128xf32, #tpu.memory_space<any>>) dst(%20 : memref<128xf32, #tpu.memory_space<vmem>>)
    %c0_i32_12 = arith.constant 0 : i32
    %c1_i32_13 = arith.constant 1 : i32
    %c1_i32_14 = arith.constant 1 : i32
    %c0_i32_15 = arith.constant 0 : i32
    %23 = tpu.memref_slice %arg3[%c0_i32_12, %c0_i32_15] : memref<1000x128xf32, #tpu.memory_space<any>> -> memref<1x128xf32, #tpu.memory_space<any>>
    %24 = tpu.memref_squeeze %23 : memref<1x128xf32, #tpu.memory_space<any>> -> memref<128xf32, #tpu.memory_space<any>>
    %c0_i32_16 = arith.constant 0 : i32
    %25 = tpu.memref_slice %arg5[%9, %c1_i32_13, %c0_i32_16] : memref<2x32x128xf32, #tpu.memory_space<vmem>> -> memref<1x1x128xf32, #tpu.memory_space<vmem>>
    %26 = tpu.memref_squeeze %25 : memref<1x1x128xf32, #tpu.memory_space<vmem>> -> memref<128xf32, #tpu.memory_space<vmem>>
    %27 = tpu.memref_slice %arg6[%9, %c1_i32_14] : memref<2x32x!tpu.dma_semaphore, #tpu.memory_space<semaphore_mem>> -> memref<1x1x!tpu.dma_semaphore, #tpu.memory_space<semaphore_mem>>
    %28 = tpu.memref_squeeze %27 : memref<1x1x!tpu.dma_semaphore, #tpu.memory_space<semaphore_mem>> -> memref<!tpu.dma_semaphore, #tpu.memory_space<semaphore_mem>>
    tpu.wait_dma2 semaphore(%28 : memref<!tpu.dma_semaphore, #tpu.memory_space<semaphore_mem>>) src(%24 : memref<128xf32, #tpu.memory_space<any>>) dst(%26 : memref<128xf32, #tpu.memory_space<vmem>>)
    %c0_i32_17 = arith.constant 0 : i32
    %c2_i32_18 = arith.constant 2 : i32
    %c2_i32_19 = arith.constant 2 : i32
    %c0_i32_20 = arith.constant 0 : i32
    %29 = tpu.memref_slice %arg3[%c0_i32_17, %c0_i32_20] : memref<1000x128xf32, #tpu.memory_space<any>> -> memref<1x128xf32, #tpu.memory_space<any>>
    %30 = tpu.memref_squeeze %29 : memref<1x128xf32, #tpu.memory_space<any>> -> memref<128xf32, #tpu.memory_space<any>>
    %c0_i32_21 = arith.constant 0 : i32
    %31 = tpu.memref_slice %arg5[%9, %c2_i32_18, %c0_i32_21] : memref<2x32x128xf32, #tpu.memory_space<vmem>> -> memref<1x1x128xf32, #tpu.memory_space<vmem>>
    %32 = tpu.memref_squeeze %31 : memref<1x1x128xf32, #tpu.memory_space<vmem>> -> memref<128xf32, #tpu.memory_space<vmem>>
    %33 = tpu.memref_slice %arg6[%9, %c2_i32_19] : memref<2x32x!tpu.dma_semaphore, #tpu.memory_space<semaphore_mem>> -> memref<1x1x!tpu.dma_semaphore, #tpu.memory_space<semaphore_mem>>
    %34 = tpu.memref_squeeze %33 : memref<1x1x!tpu.dma_semaphore, #tpu.memory_space<semaphore_mem>> -> memref<!tpu.dma_semaphore, #tpu.memory_space<semaphore_mem>>
    tpu.wait_dma2 semaphore(%34 : memref<!tpu.dma_semaphore, #tpu.memory_space<semaphore_mem>>) src(%30 : memref<128xf32, #tpu.memory_space<any>>) dst(%32 : memref<128xf32, #tpu.memory_space<vmem>>)
    %c0_i32_22 = arith.constant 0 : i32
    %c3_i32_23 = arith.constant 3 : i32
    %c3_i32_24 = arith.constant 3 : i32
    %c0_i32_25 = arith.constant 0 : i32
    %35 = tpu.memref_slice %arg3[%c0_i32_22, %c0_i32_25] : memref<1000x128xf32, #tpu.memory_space<any>> -> memref<1x128xf32, #tpu.memory_space<any>>
    %36 = tpu.memref_squeeze %35 : memref<1x128xf32, #tpu.memory_space<any>> -> memref<128xf32, #tpu.memory_space<any>>
    %c0_i32_26 = arith.constant 0 : i32
    %37 = tpu.memref_slice %arg5[%9, %c3_i32_23, %c0_i32_26] : memref<2x32x128xf32, #tpu.memory_space<vmem>> -> memref<1x1x128xf32, #tpu.memory_space<vmem>>
    %38 = tpu.memref_squeeze %37 : memref<1x1x128xf32, #tpu.memory_space<vmem>> -> memref<128xf32, #tpu.memory_space<vmem>>
    %39 = tpu.memref_slice %arg6[%9, %c3_i32_24] : memref<2x32x!tpu.dma_semaphore, #tpu.memory_space<semaphore_mem>> -> memref<1x1x!tpu.dma_semaphore, #tpu.memory_space<semaphore_mem>>
    %40 = tpu.memref_squeeze %39 : memref<1x1x!tpu.dma_semaphore, #tpu.memory_space<semaphore_mem>> -> memref<!tpu.dma_semaphore, #tpu.memory_space<semaphore_mem>>
    tpu.wait_dma2 semaphore(%40 : memref<!tpu.dma_semaphore, #tpu.memory_space<semaphore_mem>>) src(%36 : memref<128xf32, #tpu.memory_space<any>>) dst(%38 : memref<128xf32, #tpu.memory_space<vmem>>)
    %c0_i32_27 = arith.constant 0 : i32
    %c4_i32 = arith.constant 4 : i32
    %c4_i32_28 = arith.constant 4 : i32
    %c0_i32_29 = arith.constant 0 : i32
    %41 = tpu.memref_slice %arg3[%c0_i32_27, %c0_i32_29] : memref<1000x128xf32, #tpu.memory_space<any>> -> memref<1x128xf32, #tpu.memory_space<any>>
    %42 = tpu.memref_squeeze %41 : memref<1x128xf32, #tpu.memory_space<any>> -> memref<128xf32, #tpu.memory_space<any>>
    %c0_i32_30 = arith.constant 0 : i32
    %43 = tpu.memref_slice %arg5[%9, %c4_i32, %c0_i32_30] : memref<2x32x128xf32, #tpu.memory_space<vmem>> -> memref<1x1x128xf32, #tpu.memory_space<vmem>>
    %44 = tpu.memref_squeeze %43 : memref<1x1x128xf32, #tpu.memory_space<vmem>> -> memref<128xf32, #tpu.memory_space<vmem>>
    %45 = tpu.memref_slice %arg6[%9, %c4_i32_28] : memref<2x32x!tpu.dma_semaphore, #tpu.memory_space<semaphore_mem>> -> memref<1x1x!tpu.dma_semaphore, #tpu.memory_space<semaphore_mem>>
    %46 = tpu.memref_squeeze %45 : memref<1x1x!tpu.dma_semaphore, #tpu.memory_space<semaphore_mem>> -> memref<!tpu.dma_semaphore, #tpu.memory_space<semaphore_mem>>
    tpu.wait_dma2 semaphore(%46 : memref<!tpu.dma_semaphore, #tpu.memory_space<semaphore_mem>>) src(%42 : memref<128xf32, #tpu.memory_space<any>>) dst(%44 : memref<128xf32, #tpu.memory_space<vmem>>)
    %c0_i32_31 = arith.constant 0 : i32
    %c5_i32 = arith.constant 5 : i32
    %c5_i32_32 = arith.constant 5 : i32
    %c0_i32_33 = arith.constant 0 : i32
    %47 = tpu.memref_slice %arg3[%c0_i32_31, %c0_i32_33] : memref<1000x128xf32, #tpu.memory_space<any>> -> memref<1x128xf32, #tpu.memory_space<any>>
    %48 = tpu.memref_squeeze %47 : memref<1x128xf32, #tpu.memory_space<any>> -> memref<128xf32, #tpu.memory_space<any>>
    %c0_i32_34 = arith.constant 0 : i32
    %49 = tpu.memref_slice %arg5[%9, %c5_i32, %c0_i32_34] : memref<2x32x128xf32, #tpu.memory_space<vmem>> -> memref<1x1x128xf32, #tpu.memory_space<vmem>>
    %50 = tpu.memref_squeeze %49 : memref<1x1x128xf32, #tpu.memory_space<vmem>> -> memref<128xf32, #tpu.memory_space<vmem>>
    %51 = tpu.memref_slice %arg6[%9, %c5_i32_32] : memref<2x32x!tpu.dma_semaphore, #tpu.memory_space<semaphore_mem>> -> memref<1x1x!tpu.dma_semaphore, #tpu.memory_space<semaphore_mem>>
    %52 = tpu.memref_squeeze %51 : memref<1x1x!tpu.dma_semaphore, #tpu.memory_space<semaphore_mem>> -> memref<!tpu.dma_semaphore, #tpu.memory_space<semaphore_mem>>
    tpu.wait_dma2 semaphore(%52 : memref<!tpu.dma_semaphore, #tpu.memory_space<semaphore_mem>>) src(%48 : memref<128xf32, #tpu.memory_space<any>>) dst(%50 : memref<128xf32, #tpu.memory_space<vmem>>)
    %c0_i32_35 = arith.constant 0 : i32
    %c6_i32 = arith.constant 6 : i32
    %c6_i32_36 = arith.constant 6 : i32
    %c0_i32_37 = arith.constant 0 : i32
    %53 = tpu.memref_slice %arg3[%c0_i32_35, %c0_i32_37] : memref<1000x128xf32, #tpu.memory_space<any>> -> memref<1x128xf32, #tpu.memory_space<any>>
    %54 = tpu.memref_squeeze %53 : memref<1x128xf32, #tpu.memory_space<any>> -> memref<128xf32, #tpu.memory_space<any>>
    %c0_i32_38 = arith.constant 0 : i32
    %55 = tpu.memref_slice %arg5[%9, %c6_i32, %c0_i32_38] : memref<2x32x128xf32, #tpu.memory_space<vmem>> -> memref<1x1x128xf32, #tpu.memory_space<vmem>>
    %56 = tpu.memref_squeeze %55 : memref<1x1x128xf32, #tpu.memory_space<vmem>> -> memref<128xf32, #tpu.memory_space<vmem>>
    %57 = tpu.memref_slice %arg6[%9, %c6_i32_36] : memref<2x32x!tpu.dma_semaphore, #tpu.memory_space<semaphore_mem>> -> memref<1x1x!tpu.dma_semaphore, #tpu.memory_space<semaphore_mem>>
    %58 = tpu.memref_squeeze %57 : memref<1x1x!tpu.dma_semaphore, #tpu.memory_space<semaphore_mem>> -> memref<!tpu.dma_semaphore, #tpu.memory_space<semaphore_mem>>
    tpu.wait_dma2 semaphore(%58 : memref<!tpu.dma_semaphore, #tpu.memory_space<semaphore_mem>>) src(%54 : memref<128xf32, #tpu.memory_space<any>>) dst(%56 : memref<128xf32, #tpu.memory_space<vmem>>)
    %c0_i32_39 = arith.constant 0 : i32
    %c7_i32 = arith.constant 7 : i32
    %c7_i32_40 = arith.constant 7 : i32
    %c0_i32_41 = arith.constant 0 : i32
    %59 = tpu.memref_slice %arg3[%c0_i32_39, %c0_i32_41] : memref<1000x128xf32, #tpu.memory_space<any>> -> memref<1x128xf32, #tpu.memory_space<any>>
    %60 = tpu.memref_squeeze %59 : memref<1x128xf32, #tpu.memory_space<any>> -> memref<128xf32, #tpu.memory_space<any>>
    %c0_i32_42 = arith.constant 0 : i32
    %61 = tpu.memref_slice %arg5[%9, %c7_i32, %c0_i32_42] : memref<2x32x128xf32, #tpu.memory_space<vmem>> -> memref<1x1x128xf32, #tpu.memory_space<vmem>>
    %62 = tpu.memref_squeeze %61 : memref<1x1x128xf32, #tpu.memory_space<vmem>> -> memref<128xf32, #tpu.memory_space<vmem>>
    %63 = tpu.memref_slice %arg6[%9, %c7_i32_40] : memref<2x32x!tpu.dma_semaphore, #tpu.memory_space<semaphore_mem>> -> memref<1x1x!tpu.dma_semaphore, #tpu.memory_space<semaphore_mem>>
    %64 = tpu.memref_squeeze %63 : memref<1x1x!tpu.dma_semaphore, #tpu.memory_space<semaphore_mem>> -> memref<!tpu.dma_semaphore, #tpu.memory_space<semaphore_mem>>
    tpu.wait_dma2 semaphore(%64 : memref<!tpu.dma_semaphore, #tpu.memory_space<semaphore_mem>>) src(%60 : memref<128xf32, #tpu.memory_space<any>>) dst(%62 : memref<128xf32, #tpu.memory_space<vmem>>)
    %c0_i32_43 = arith.constant 0 : i32
    %c8_i32 = arith.constant 8 : i32
    %c8_i32_44 = arith.constant 8 : i32
    %c0_i32_45 = arith.constant 0 : i32
    %65 = tpu.memref_slice %arg3[%c0_i32_43, %c0_i32_45] : memref<1000x128xf32, #tpu.memory_space<any>> -> memref<1x128xf32, #tpu.memory_space<any>>
    %66 = tpu.memref_squeeze %65 : memref<1x128xf32, #tpu.memory_space<any>> -> memref<128xf32, #tpu.memory_space<any>>
    %c0_i32_46 = arith.constant 0 : i32
    %67 = tpu.memref_slice %arg5[%9, %c8_i32, %c0_i32_46] : memref<2x32x128xf32, #tpu.memory_space<vmem>> -> memref<1x1x128xf32, #tpu.memory_space<vmem>>
    %68 = tpu.memref_squeeze %67 : memref<1x1x128xf32, #tpu.memory_space<vmem>> -> memref<128xf32, #tpu.memory_space<vmem>>
    %69 = tpu.memref_slice %arg6[%9, %c8_i32_44] : memref<2x32x!tpu.dma_semaphore, #tpu.memory_space<semaphore_mem>> -> memref<1x1x!tpu.dma_semaphore, #tpu.memory_space<semaphore_mem>>
    %70 = tpu.memref_squeeze %69 : memref<1x1x!tpu.dma_semaphore, #tpu.memory_space<semaphore_mem>> -> memref<!tpu.dma_semaphore, #tpu.memory_space<semaphore_mem>>
    tpu.wait_dma2 semaphore(%70 : memref<!tpu.dma_semaphore, #tpu.memory_space<semaphore_mem>>) src(%66 : memref<128xf32, #tpu.memory_space<any>>) dst(%68 : memref<128xf32, #tpu.memory_space<vmem>>)
    %c0_i32_47 = arith.constant 0 : i32
    %c9_i32 = arith.constant 9 : i32
    %c9_i32_48 = arith.constant 9 : i32
    %c0_i32_49 = arith.constant 0 : i32
    %71 = tpu.memref_slice %arg3[%c0_i32_47, %c0_i32_49] : memref<1000x128xf32, #tpu.memory_space<any>> -> memref<1x128xf32, #tpu.memory_space<any>>
    %72 = tpu.memref_squeeze %71 : memref<1x128xf32, #tpu.memory_space<any>> -> memref<128xf32, #tpu.memory_space<any>>
    %c0_i32_50 = arith.constant 0 : i32
    %73 = tpu.memref_slice %arg5[%9, %c9_i32, %c0_i32_50] : memref<2x32x128xf32, #tpu.memory_space<vmem>> -> memref<1x1x128xf32, #tpu.memory_space<vmem>>
    %74 = tpu.memref_squeeze %73 : memref<1x1x128xf32, #tpu.memory_space<vmem>> -> memref<128xf32, #tpu.memory_space<vmem>>
    %75 = tpu.memref_slice %arg6[%9, %c9_i32_48] : memref<2x32x!tpu.dma_semaphore, #tpu.memory_space<semaphore_mem>> -> memref<1x1x!tpu.dma_semaphore, #tpu.memory_space<semaphore_mem>>
    %76 = tpu.memref_squeeze %75 : memref<1x1x!tpu.dma_semaphore, #tpu.memory_space<semaphore_mem>> -> memref<!tpu.dma_semaphore, #tpu.memory_space<semaphore_mem>>
    tpu.wait_dma2 semaphore(%76 : memref<!tpu.dma_semaphore, #tpu.memory_space<semaphore_mem>>) src(%72 : memref<128xf32, #tpu.memory_space<any>>) dst(%74 : memref<128xf32, #tpu.memory_space<vmem>>)
    %c0_i32_51 = arith.constant 0 : i32
    %c10_i32 = arith.constant 10 : i32
    %c10_i32_52 = arith.constant 10 : i32
    %c0_i32_53 = arith.constant 0 : i32
    %77 = tpu.memref_slice %arg3[%c0_i32_51, %c0_i32_53] : memref<1000x128xf32, #tpu.memory_space<any>> -> memref<1x128xf32, #tpu.memory_space<any>>
    %78 = tpu.memref_squeeze %77 : memref<1x128xf32, #tpu.memory_space<any>> -> memref<128xf32, #tpu.memory_space<any>>
    %c0_i32_54 = arith.constant 0 : i32
    %79 = tpu.memref_slice %arg5[%9, %c10_i32, %c0_i32_54] : memref<2x32x128xf32, #tpu.memory_space<vmem>> -> memref<1x1x128xf32, #tpu.memory_space<vmem>>
    %80 = tpu.memref_squeeze %79 : memref<1x1x128xf32, #tpu.memory_space<vmem>> -> memref<128xf32, #tpu.memory_space<vmem>>
    %81 = tpu.memref_slice %arg6[%9, %c10_i32_52] : memref<2x32x!tpu.dma_semaphore, #tpu.memory_space<semaphore_mem>> -> memref<1x1x!tpu.dma_semaphore, #tpu.memory_space<semaphore_mem>>
    %82 = tpu.memref_squeeze %81 : memref<1x1x!tpu.dma_semaphore, #tpu.memory_space<semaphore_mem>> -> memref<!tpu.dma_semaphore, #tpu.memory_space<semaphore_mem>>
    tpu.wait_dma2 semaphore(%82 : memref<!tpu.dma_semaphore, #tpu.memory_space<semaphore_mem>>) src(%78 : memref<128xf32, #tpu.memory_space<any>>) dst(%80 : memref<128xf32, #tpu.memory_space<vmem>>)
    %c0_i32_55 = arith.constant 0 : i32
    %c11_i32 = arith.constant 11 : i32
    %c11_i32_56 = arith.constant 11 : i32
    %c0_i32_57 = arith.constant 0 : i32
    %83 = tpu.memref_slice %arg3[%c0_i32_55, %c0_i32_57] : memref<1000x128xf32, #tpu.memory_space<any>> -> memref<1x128xf32, #tpu.memory_space<any>>
    %84 = tpu.memref_squeeze %83 : memref<1x128xf32, #tpu.memory_space<any>> -> memref<128xf32, #tpu.memory_space<any>>
    %c0_i32_58 = arith.constant 0 : i32
    %85 = tpu.memref_slice %arg5[%9, %c11_i32, %c0_i32_58] : memref<2x32x128xf32, #tpu.memory_space<vmem>> -> memref<1x1x128xf32, #tpu.memory_space<vmem>>
    %86 = tpu.memref_squeeze %85 : memref<1x1x128xf32, #tpu.memory_space<vmem>> -> memref<128xf32, #tpu.memory_space<vmem>>
    %87 = tpu.memref_slice %arg6[%9, %c11_i32_56] : memref<2x32x!tpu.dma_semaphore, #tpu.memory_space<semaphore_mem>> -> memref<1x1x!tpu.dma_semaphore, #tpu.memory_space<semaphore_mem>>
    %88 = tpu.memref_squeeze %87 : memref<1x1x!tpu.dma_semaphore, #tpu.memory_space<semaphore_mem>> -> memref<!tpu.dma_semaphore, #tpu.memory_space<semaphore_mem>>
    tpu.wait_dma2 semaphore(%88 : memref<!tpu.dma_semaphore, #tpu.memory_space<semaphore_mem>>) src(%84 : memref<128xf32, #tpu.memory_space<any>>) dst(%86 : memref<128xf32, #tpu.memory_space<vmem>>)
    %c0_i32_59 = arith.constant 0 : i32
    %c12_i32 = arith.constant 12 : i32
    %c12_i32_60 = arith.constant 12 : i32
    %c0_i32_61 = arith.constant 0 : i32
    %89 = tpu.memref_slice %arg3[%c0_i32_59, %c0_i32_61] : memref<1000x128xf32, #tpu.memory_space<any>> -> memref<1x128xf32, #tpu.memory_space<any>>
    %90 = tpu.memref_squeeze %89 : memref<1x128xf32, #tpu.memory_space<any>> -> memref<128xf32, #tpu.memory_space<any>>
    %c0_i32_62 = arith.constant 0 : i32
    %91 = tpu.memref_slice %arg5[%9, %c12_i32, %c0_i32_62] : memref<2x32x128xf32, #tpu.memory_space<vmem>> -> memref<1x1x128xf32, #tpu.memory_space<vmem>>
    %92 = tpu.memref_squeeze %91 : memref<1x1x128xf32, #tpu.memory_space<vmem>> -> memref<128xf32, #tpu.memory_space<vmem>>
    %93 = tpu.memref_slice %arg6[%9, %c12_i32_60] : memref<2x32x!tpu.dma_semaphore, #tpu.memory_space<semaphore_mem>> -> memref<1x1x!tpu.dma_semaphore, #tpu.memory_space<semaphore_mem>>
    %94 = tpu.memref_squeeze %93 : memref<1x1x!tpu.dma_semaphore, #tpu.memory_space<semaphore_mem>> -> memref<!tpu.dma_semaphore, #tpu.memory_space<semaphore_mem>>
    tpu.wait_dma2 semaphore(%94 : memref<!tpu.dma_semaphore, #tpu.memory_space<semaphore_mem>>) src(%90 : memref<128xf32, #tpu.memory_space<any>>) dst(%92 : memref<128xf32, #tpu.memory_space<vmem>>)
    %c0_i32_63 = arith.constant 0 : i32
    %c13_i32 = arith.constant 13 : i32
    %c13_i32_64 = arith.constant 13 : i32
    %c0_i32_65 = arith.constant 0 : i32
    %95 = tpu.memref_slice %arg3[%c0_i32_63, %c0_i32_65] : memref<1000x128xf32, #tpu.memory_space<any>> -> memref<1x128xf32, #tpu.memory_space<any>>
    %96 = tpu.memref_squeeze %95 : memref<1x128xf32, #tpu.memory_space<any>> -> memref<128xf32, #tpu.memory_space<any>>
    %c0_i32_66 = arith.constant 0 : i32
    %97 = tpu.memref_slice %arg5[%9, %c13_i32, %c0_i32_66] : memref<2x32x128xf32, #tpu.memory_space<vmem>> -> memref<1x1x128xf32, #tpu.memory_space<vmem>>
    %98 = tpu.memref_squeeze %97 : memref<1x1x128xf32, #tpu.memory_space<vmem>> -> memref<128xf32, #tpu.memory_space<vmem>>
    %99 = tpu.memref_slice %arg6[%9, %c13_i32_64] : memref<2x32x!tpu.dma_semaphore, #tpu.memory_space<semaphore_mem>> -> memref<1x1x!tpu.dma_semaphore, #tpu.memory_space<semaphore_mem>>
    %100 = tpu.memref_squeeze %99 : memref<1x1x!tpu.dma_semaphore, #tpu.memory_space<semaphore_mem>> -> memref<!tpu.dma_semaphore, #tpu.memory_space<semaphore_mem>>
    tpu.wait_dma2 semaphore(%100 : memref<!tpu.dma_semaphore, #tpu.memory_space<semaphore_mem>>) src(%96 : memref<128xf32, #tpu.memory_space<any>>) dst(%98 : memref<128xf32, #tpu.memory_space<vmem>>)
    %c0_i32_67 = arith.constant 0 : i32
    %c14_i32 = arith.constant 14 : i32
    %c14_i32_68 = arith.constant 14 : i32
    %c0_i32_69 = arith.constant 0 : i32
    %101 = tpu.memref_slice %arg3[%c0_i32_67, %c0_i32_69] : memref<1000x128xf32, #tpu.memory_space<any>> -> memref<1x128xf32, #tpu.memory_space<any>>
    %102 = tpu.memref_squeeze %101 : memref<1x128xf32, #tpu.memory_space<any>> -> memref<128xf32, #tpu.memory_space<any>>
    %c0_i32_70 = arith.constant 0 : i32
    %103 = tpu.memref_slice %arg5[%9, %c14_i32, %c0_i32_70] : memref<2x32x128xf32, #tpu.memory_space<vmem>> -> memref<1x1x128xf32, #tpu.memory_space<vmem>>
    %104 = tpu.memref_squeeze %103 : memref<1x1x128xf32, #tpu.memory_space<vmem>> -> memref<128xf32, #tpu.memory_space<vmem>>
    %105 = tpu.memref_slice %arg6[%9, %c14_i32_68] : memref<2x32x!tpu.dma_semaphore, #tpu.memory_space<semaphore_mem>> -> memref<1x1x!tpu.dma_semaphore, #tpu.memory_space<semaphore_mem>>
    %106 = tpu.memref_squeeze %105 : memref<1x1x!tpu.dma_semaphore, #tpu.memory_space<semaphore_mem>> -> memref<!tpu.dma_semaphore, #tpu.memory_space<semaphore_mem>>
    tpu.wait_dma2 semaphore(%106 : memref<!tpu.dma_semaphore, #tpu.memory_space<semaphore_mem>>) src(%102 : memref<128xf32, #tpu.memory_space<any>>) dst(%104 : memref<128xf32, #tpu.memory_space<vmem>>)
    %c0_i32_71 = arith.constant 0 : i32
    %c15_i32 = arith.constant 15 : i32
    %c15_i32_72 = arith.constant 15 : i32
    %c0_i32_73 = arith.constant 0 : i32
    %107 = tpu.memref_slice %arg3[%c0_i32_71, %c0_i32_73] : memref<1000x128xf32, #tpu.memory_space<any>> -> memref<1x128xf32, #tpu.memory_space<any>>
    %108 = tpu.memref_squeeze %107 : memref<1x128xf32, #tpu.memory_space<any>> -> memref<128xf32, #tpu.memory_space<any>>
    %c0_i32_74 = arith.constant 0 : i32
    %109 = tpu.memref_slice %arg5[%9, %c15_i32, %c0_i32_74] : memref<2x32x128xf32, #tpu.memory_space<vmem>> -> memref<1x1x128xf32, #tpu.memory_space<vmem>>
    %110 = tpu.memref_squeeze %109 : memref<1x1x128xf32, #tpu.memory_space<vmem>> -> memref<128xf32, #tpu.memory_space<vmem>>
    %111 = tpu.memref_slice %arg6[%9, %c15_i32_72] : memref<2x32x!tpu.dma_semaphore, #tpu.memory_space<semaphore_mem>> -> memref<1x1x!tpu.dma_semaphore, #tpu.memory_space<semaphore_mem>>
    %112 = tpu.memref_squeeze %111 : memref<1x1x!tpu.dma_semaphore, #tpu.memory_space<semaphore_mem>> -> memref<!tpu.dma_semaphore, #tpu.memory_space<semaphore_mem>>
    tpu.wait_dma2 semaphore(%112 : memref<!tpu.dma_semaphore, #tpu.memory_space<semaphore_mem>>) src(%108 : memref<128xf32, #tpu.memory_space<any>>) dst(%110 : memref<128xf32, #tpu.memory_space<vmem>>)
    %c0_i32_75 = arith.constant 0 : i32
    %c16_i32 = arith.constant 16 : i32
    %c16_i32_76 = arith.constant 16 : i32
    %c0_i32_77 = arith.constant 0 : i32
    %113 = tpu.memref_slice %arg3[%c0_i32_75, %c0_i32_77] : memref<1000x128xf32, #tpu.memory_space<any>> -> memref<1x128xf32, #tpu.memory_space<any>>
    %114 = tpu.memref_squeeze %113 : memref<1x128xf32, #tpu.memory_space<any>> -> memref<128xf32, #tpu.memory_space<any>>
    %c0_i32_78 = arith.constant 0 : i32
    %115 = tpu.memref_slice %arg5[%9, %c16_i32, %c0_i32_78] : memref<2x32x128xf32, #tpu.memory_space<vmem>> -> memref<1x1x128xf32, #tpu.memory_space<vmem>>
    %116 = tpu.memref_squeeze %115 : memref<1x1x128xf32, #tpu.memory_space<vmem>> -> memref<128xf32, #tpu.memory_space<vmem>>
    %117 = tpu.memref_slice %arg6[%9, %c16_i32_76] : memref<2x32x!tpu.dma_semaphore, #tpu.memory_space<semaphore_mem>> -> memref<1x1x!tpu.dma_semaphore, #tpu.memory_space<semaphore_mem>>
    %118 = tpu.memref_squeeze %117 : memref<1x1x!tpu.dma_semaphore, #tpu.memory_space<semaphore_mem>> -> memref<!tpu.dma_semaphore, #tpu.memory_space<semaphore_mem>>
    tpu.wait_dma2 semaphore(%118 : memref<!tpu.dma_semaphore, #tpu.memory_space<semaphore_mem>>) src(%114 : memref<128xf32, #tpu.memory_space<any>>) dst(%116 : memref<128xf32, #tpu.memory_space<vmem>>)
    %c0_i32_79 = arith.constant 0 : i32
    %c17_i32 = arith.constant 17 : i32
    %c17_i32_80 = arith.constant 17 : i32
    %c0_i32_81 = arith.constant 0 : i32
    %119 = tpu.memref_slice %arg3[%c0_i32_79, %c0_i32_81] : memref<1000x128xf32, #tpu.memory_space<any>> -> memref<1x128xf32, #tpu.memory_space<any>>
    %120 = tpu.memref_squeeze %119 : memref<1x128xf32, #tpu.memory_space<any>> -> memref<128xf32, #tpu.memory_space<any>>
    %c0_i32_82 = arith.constant 0 : i32
    %121 = tpu.memref_slice %arg5[%9, %c17_i32, %c0_i32_82] : memref<2x32x128xf32, #tpu.memory_space<vmem>> -> memref<1x1x128xf32, #tpu.memory_space<vmem>>
    %122 = tpu.memref_squeeze %121 : memref<1x1x128xf32, #tpu.memory_space<vmem>> -> memref<128xf32, #tpu.memory_space<vmem>>
    %123 = tpu.memref_slice %arg6[%9, %c17_i32_80] : memref<2x32x!tpu.dma_semaphore, #tpu.memory_space<semaphore_mem>> -> memref<1x1x!tpu.dma_semaphore, #tpu.memory_space<semaphore_mem>>
    %124 = tpu.memref_squeeze %123 : memref<1x1x!tpu.dma_semaphore, #tpu.memory_space<semaphore_mem>> -> memref<!tpu.dma_semaphore, #tpu.memory_space<semaphore_mem>>
    tpu.wait_dma2 semaphore(%124 : memref<!tpu.dma_semaphore, #tpu.memory_space<semaphore_mem>>) src(%120 : memref<128xf32, #tpu.memory_space<any>>) dst(%122 : memref<128xf32, #tpu.memory_space<vmem>>)
    %c0_i32_83 = arith.constant 0 : i32
    %c18_i32 = arith.constant 18 : i32
    %c18_i32_84 = arith.constant 18 : i32
    %c0_i32_85 = arith.constant 0 : i32
    %125 = tpu.memref_slice %arg3[%c0_i32_83, %c0_i32_85] : memref<1000x128xf32, #tpu.memory_space<any>> -> memref<1x128xf32, #tpu.memory_space<any>>
    %126 = tpu.memref_squeeze %125 : memref<1x128xf32, #tpu.memory_space<any>> -> memref<128xf32, #tpu.memory_space<any>>
    %c0_i32_86 = arith.constant 0 : i32
    %127 = tpu.memref_slice %arg5[%9, %c18_i32, %c0_i32_86] : memref<2x32x128xf32, #tpu.memory_space<vmem>> -> memref<1x1x128xf32, #tpu.memory_space<vmem>>
    %128 = tpu.memref_squeeze %127 : memref<1x1x128xf32, #tpu.memory_space<vmem>> -> memref<128xf32, #tpu.memory_space<vmem>>
    %129 = tpu.memref_slice %arg6[%9, %c18_i32_84] : memref<2x32x!tpu.dma_semaphore, #tpu.memory_space<semaphore_mem>> -> memref<1x1x!tpu.dma_semaphore, #tpu.memory_space<semaphore_mem>>
    %130 = tpu.memref_squeeze %129 : memref<1x1x!tpu.dma_semaphore, #tpu.memory_space<semaphore_mem>> -> memref<!tpu.dma_semaphore, #tpu.memory_space<semaphore_mem>>
    tpu.wait_dma2 semaphore(%130 : memref<!tpu.dma_semaphore, #tpu.memory_space<semaphore_mem>>) src(%126 : memref<128xf32, #tpu.memory_space<any>>) dst(%128 : memref<128xf32, #tpu.memory_space<vmem>>)
    %c0_i32_87 = arith.constant 0 : i32
    %c19_i32 = arith.constant 19 : i32
    %c19_i32_88 = arith.constant 19 : i32
    %c0_i32_89 = arith.constant 0 : i32
    %131 = tpu.memref_slice %arg3[%c0_i32_87, %c0_i32_89] : memref<1000x128xf32, #tpu.memory_space<any>> -> memref<1x128xf32, #tpu.memory_space<any>>
    %132 = tpu.memref_squeeze %131 : memref<1x128xf32, #tpu.memory_space<any>> -> memref<128xf32, #tpu.memory_space<any>>
    %c0_i32_90 = arith.constant 0 : i32
    %133 = tpu.memref_slice %arg5[%9, %c19_i32, %c0_i32_90] : memref<2x32x128xf32, #tpu.memory_space<vmem>> -> memref<1x1x128xf32, #tpu.memory_space<vmem>>
    %134 = tpu.memref_squeeze %133 : memref<1x1x128xf32, #tpu.memory_space<vmem>> -> memref<128xf32, #tpu.memory_space<vmem>>
    %135 = tpu.memref_slice %arg6[%9, %c19_i32_88] : memref<2x32x!tpu.dma_semaphore, #tpu.memory_space<semaphore_mem>> -> memref<1x1x!tpu.dma_semaphore, #tpu.memory_space<semaphore_mem>>
    %136 = tpu.memref_squeeze %135 : memref<1x1x!tpu.dma_semaphore, #tpu.memory_space<semaphore_mem>> -> memref<!tpu.dma_semaphore, #tpu.memory_space<semaphore_mem>>
    tpu.wait_dma2 semaphore(%136 : memref<!tpu.dma_semaphore, #tpu.memory_space<semaphore_mem>>) src(%132 : memref<128xf32, #tpu.memory_space<any>>) dst(%134 : memref<128xf32, #tpu.memory_space<vmem>>)
    %c0_i32_91 = arith.constant 0 : i32
    %c20_i32 = arith.constant 20 : i32
    %c20_i32_92 = arith.constant 20 : i32
    %c0_i32_93 = arith.constant 0 : i32
    %137 = tpu.memref_slice %arg3[%c0_i32_91, %c0_i32_93] : memref<1000x128xf32, #tpu.memory_space<any>> -> memref<1x128xf32, #tpu.memory_space<any>>
    %138 = tpu.memref_squeeze %137 : memref<1x128xf32, #tpu.memory_space<any>> -> memref<128xf32, #tpu.memory_space<any>>
    %c0_i32_94 = arith.constant 0 : i32
    %139 = tpu.memref_slice %arg5[%9, %c20_i32, %c0_i32_94] : memref<2x32x128xf32, #tpu.memory_space<vmem>> -> memref<1x1x128xf32, #tpu.memory_space<vmem>>
    %140 = tpu.memref_squeeze %139 : memref<1x1x128xf32, #tpu.memory_space<vmem>> -> memref<128xf32, #tpu.memory_space<vmem>>
    %141 = tpu.memref_slice %arg6[%9, %c20_i32_92] : memref<2x32x!tpu.dma_semaphore, #tpu.memory_space<semaphore_mem>> -> memref<1x1x!tpu.dma_semaphore, #tpu.memory_space<semaphore_mem>>
    %142 = tpu.memref_squeeze %141 : memref<1x1x!tpu.dma_semaphore, #tpu.memory_space<semaphore_mem>> -> memref<!tpu.dma_semaphore, #tpu.memory_space<semaphore_mem>>
    tpu.wait_dma2 semaphore(%142 : memref<!tpu.dma_semaphore, #tpu.memory_space<semaphore_mem>>) src(%138 : memref<128xf32, #tpu.memory_space<any>>) dst(%140 : memref<128xf32, #tpu.memory_space<vmem>>)
    %c0_i32_95 = arith.constant 0 : i32
    %c21_i32 = arith.constant 21 : i32
    %c21_i32_96 = arith.constant 21 : i32
    %c0_i32_97 = arith.constant 0 : i32
    %143 = tpu.memref_slice %arg3[%c0_i32_95, %c0_i32_97] : memref<1000x128xf32, #tpu.memory_space<any>> -> memref<1x128xf32, #tpu.memory_space<any>>
    %144 = tpu.memref_squeeze %143 : memref<1x128xf32, #tpu.memory_space<any>> -> memref<128xf32, #tpu.memory_space<any>>
    %c0_i32_98 = arith.constant 0 : i32
    %145 = tpu.memref_slice %arg5[%9, %c21_i32, %c0_i32_98] : memref<2x32x128xf32, #tpu.memory_space<vmem>> -> memref<1x1x128xf32, #tpu.memory_space<vmem>>
    %146 = tpu.memref_squeeze %145 : memref<1x1x128xf32, #tpu.memory_space<vmem>> -> memref<128xf32, #tpu.memory_space<vmem>>
    %147 = tpu.memref_slice %arg6[%9, %c21_i32_96] : memref<2x32x!tpu.dma_semaphore, #tpu.memory_space<semaphore_mem>> -> memref<1x1x!tpu.dma_semaphore, #tpu.memory_space<semaphore_mem>>
    %148 = tpu.memref_squeeze %147 : memref<1x1x!tpu.dma_semaphore, #tpu.memory_space<semaphore_mem>> -> memref<!tpu.dma_semaphore, #tpu.memory_space<semaphore_mem>>
    tpu.wait_dma2 semaphore(%148 : memref<!tpu.dma_semaphore, #tpu.memory_space<semaphore_mem>>) src(%144 : memref<128xf32, #tpu.memory_space<any>>) dst(%146 : memref<128xf32, #tpu.memory_space<vmem>>)
    %c0_i32_99 = arith.constant 0 : i32
    %c22_i32 = arith.constant 22 : i32
    %c22_i32_100 = arith.constant 22 : i32
    %c0_i32_101 = arith.constant 0 : i32
    %149 = tpu.memref_slice %arg3[%c0_i32_99, %c0_i32_101] : memref<1000x128xf32, #tpu.memory_space<any>> -> memref<1x128xf32, #tpu.memory_space<any>>
    %150 = tpu.memref_squeeze %149 : memref<1x128xf32, #tpu.memory_space<any>> -> memref<128xf32, #tpu.memory_space<any>>
    %c0_i32_102 = arith.constant 0 : i32
    %151 = tpu.memref_slice %arg5[%9, %c22_i32, %c0_i32_102] : memref<2x32x128xf32, #tpu.memory_space<vmem>> -> memref<1x1x128xf32, #tpu.memory_space<vmem>>
    %152 = tpu.memref_squeeze %151 : memref<1x1x128xf32, #tpu.memory_space<vmem>> -> memref<128xf32, #tpu.memory_space<vmem>>
    %153 = tpu.memref_slice %arg6[%9, %c22_i32_100] : memref<2x32x!tpu.dma_semaphore, #tpu.memory_space<semaphore_mem>> -> memref<1x1x!tpu.dma_semaphore, #tpu.memory_space<semaphore_mem>>
    %154 = tpu.memref_squeeze %153 : memref<1x1x!tpu.dma_semaphore, #tpu.memory_space<semaphore_mem>> -> memref<!tpu.dma_semaphore, #tpu.memory_space<semaphore_mem>>
    tpu.wait_dma2 semaphore(%154 : memref<!tpu.dma_semaphore, #tpu.memory_space<semaphore_mem>>) src(%150 : memref<128xf32, #tpu.memory_space<any>>) dst(%152 : memref<128xf32, #tpu.memory_space<vmem>>)
    %c0_i32_103 = arith.constant 0 : i32
    %c23_i32 = arith.constant 23 : i32
    %c23_i32_104 = arith.constant 23 : i32
    %c0_i32_105 = arith.constant 0 : i32
    %155 = tpu.memref_slice %arg3[%c0_i32_103, %c0_i32_105] : memref<1000x128xf32, #tpu.memory_space<any>> -> memref<1x128xf32, #tpu.memory_space<any>>
    %156 = tpu.memref_squeeze %155 : memref<1x128xf32, #tpu.memory_space<any>> -> memref<128xf32, #tpu.memory_space<any>>
    %c0_i32_106 = arith.constant 0 : i32
    %157 = tpu.memref_slice %arg5[%9, %c23_i32, %c0_i32_106] : memref<2x32x128xf32, #tpu.memory_space<vmem>> -> memref<1x1x128xf32, #tpu.memory_space<vmem>>
    %158 = tpu.memref_squeeze %157 : memref<1x1x128xf32, #tpu.memory_space<vmem>> -> memref<128xf32, #tpu.memory_space<vmem>>
    %159 = tpu.memref_slice %arg6[%9, %c23_i32_104] : memref<2x32x!tpu.dma_semaphore, #tpu.memory_space<semaphore_mem>> -> memref<1x1x!tpu.dma_semaphore, #tpu.memory_space<semaphore_mem>>
    %160 = tpu.memref_squeeze %159 : memref<1x1x!tpu.dma_semaphore, #tpu.memory_space<semaphore_mem>> -> memref<!tpu.dma_semaphore, #tpu.memory_space<semaphore_mem>>
    tpu.wait_dma2 semaphore(%160 : memref<!tpu.dma_semaphore, #tpu.memory_space<semaphore_mem>>) src(%156 : memref<128xf32, #tpu.memory_space<any>>) dst(%158 : memref<128xf32, #tpu.memory_space<vmem>>)
    %c0_i32_107 = arith.constant 0 : i32
    %c24_i32 = arith.constant 24 : i32
    %c24_i32_108 = arith.constant 24 : i32
    %c0_i32_109 = arith.constant 0 : i32
    %161 = tpu.memref_slice %arg3[%c0_i32_107, %c0_i32_109] : memref<1000x128xf32, #tpu.memory_space<any>> -> memref<1x128xf32, #tpu.memory_space<any>>
    %162 = tpu.memref_squeeze %161 : memref<1x128xf32, #tpu.memory_space<any>> -> memref<128xf32, #tpu.memory_space<any>>
    %c0_i32_110 = arith.constant 0 : i32
    %163 = tpu.memref_slice %arg5[%9, %c24_i32, %c0_i32_110] : memref<2x32x128xf32, #tpu.memory_space<vmem>> -> memref<1x1x128xf32, #tpu.memory_space<vmem>>
    %164 = tpu.memref_squeeze %163 : memref<1x1x128xf32, #tpu.memory_space<vmem>> -> memref<128xf32, #tpu.memory_space<vmem>>
    %165 = tpu.memref_slice %arg6[%9, %c24_i32_108] : memref<2x32x!tpu.dma_semaphore, #tpu.memory_space<semaphore_mem>> -> memref<1x1x!tpu.dma_semaphore, #tpu.memory_space<semaphore_mem>>
    %166 = tpu.memref_squeeze %165 : memref<1x1x!tpu.dma_semaphore, #tpu.memory_space<semaphore_mem>> -> memref<!tpu.dma_semaphore, #tpu.memory_space<semaphore_mem>>
    tpu.wait_dma2 semaphore(%166 : memref<!tpu.dma_semaphore, #tpu.memory_space<semaphore_mem>>) src(%162 : memref<128xf32, #tpu.memory_space<any>>) dst(%164 : memref<128xf32, #tpu.memory_space<vmem>>)
    %c0_i32_111 = arith.constant 0 : i32
    %c25_i32 = arith.constant 25 : i32
    %c25_i32_112 = arith.constant 25 : i32
    %c0_i32_113 = arith.constant 0 : i32
    %167 = tpu.memref_slice %arg3[%c0_i32_111, %c0_i32_113] : memref<1000x128xf32, #tpu.memory_space<any>> -> memref<1x128xf32, #tpu.memory_space<any>>
    %168 = tpu.memref_squeeze %167 : memref<1x128xf32, #tpu.memory_space<any>> -> memref<128xf32, #tpu.memory_space<any>>
    %c0_i32_114 = arith.constant 0 : i32
    %169 = tpu.memref_slice %arg5[%9, %c25_i32, %c0_i32_114] : memref<2x32x128xf32, #tpu.memory_space<vmem>> -> memref<1x1x128xf32, #tpu.memory_space<vmem>>
    %170 = tpu.memref_squeeze %169 : memref<1x1x128xf32, #tpu.memory_space<vmem>> -> memref<128xf32, #tpu.memory_space<vmem>>
    %171 = tpu.memref_slice %arg6[%9, %c25_i32_112] : memref<2x32x!tpu.dma_semaphore, #tpu.memory_space<semaphore_mem>> -> memref<1x1x!tpu.dma_semaphore, #tpu.memory_space<semaphore_mem>>
    %172 = tpu.memref_squeeze %171 : memref<1x1x!tpu.dma_semaphore, #tpu.memory_space<semaphore_mem>> -> memref<!tpu.dma_semaphore, #tpu.memory_space<semaphore_mem>>
    tpu.wait_dma2 semaphore(%172 : memref<!tpu.dma_semaphore, #tpu.memory_space<semaphore_mem>>) src(%168 : memref<128xf32, #tpu.memory_space<any>>) dst(%170 : memref<128xf32, #tpu.memory_space<vmem>>)
    %c0_i32_115 = arith.constant 0 : i32
    %c26_i32 = arith.constant 26 : i32
    %c26_i32_116 = arith.constant 26 : i32
    %c0_i32_117 = arith.constant 0 : i32
    %173 = tpu.memref_slice %arg3[%c0_i32_115, %c0_i32_117] : memref<1000x128xf32, #tpu.memory_space<any>> -> memref<1x128xf32, #tpu.memory_space<any>>
    %174 = tpu.memref_squeeze %173 : memref<1x128xf32, #tpu.memory_space<any>> -> memref<128xf32, #tpu.memory_space<any>>
    %c0_i32_118 = arith.constant 0 : i32
    %175 = tpu.memref_slice %arg5[%9, %c26_i32, %c0_i32_118] : memref<2x32x128xf32, #tpu.memory_space<vmem>> -> memref<1x1x128xf32, #tpu.memory_space<vmem>>
    %176 = tpu.memref_squeeze %175 : memref<1x1x128xf32, #tpu.memory_space<vmem>> -> memref<128xf32, #tpu.memory_space<vmem>>
    %177 = tpu.memref_slice %arg6[%9, %c26_i32_116] : memref<2x32x!tpu.dma_semaphore, #tpu.memory_space<semaphore_mem>> -> memref<1x1x!tpu.dma_semaphore, #tpu.memory_space<semaphore_mem>>
    %178 = tpu.memref_squeeze %177 : memref<1x1x!tpu.dma_semaphore, #tpu.memory_space<semaphore_mem>> -> memref<!tpu.dma_semaphore, #tpu.memory_space<semaphore_mem>>
    tpu.wait_dma2 semaphore(%178 : memref<!tpu.dma_semaphore, #tpu.memory_space<semaphore_mem>>) src(%174 : memref<128xf32, #tpu.memory_space<any>>) dst(%176 : memref<128xf32, #tpu.memory_space<vmem>>)
    %c0_i32_119 = arith.constant 0 : i32
    %c27_i32 = arith.constant 27 : i32
    %c27_i32_120 = arith.constant 27 : i32
    %c0_i32_121 = arith.constant 0 : i32
    %179 = tpu.memref_slice %arg3[%c0_i32_119, %c0_i32_121] : memref<1000x128xf32, #tpu.memory_space<any>> -> memref<1x128xf32, #tpu.memory_space<any>>
    %180 = tpu.memref_squeeze %179 : memref<1x128xf32, #tpu.memory_space<any>> -> memref<128xf32, #tpu.memory_space<any>>
    %c0_i32_122 = arith.constant 0 : i32
    %181 = tpu.memref_slice %arg5[%9, %c27_i32, %c0_i32_122] : memref<2x32x128xf32, #tpu.memory_space<vmem>> -> memref<1x1x128xf32, #tpu.memory_space<vmem>>
    %182 = tpu.memref_squeeze %181 : memref<1x1x128xf32, #tpu.memory_space<vmem>> -> memref<128xf32, #tpu.memory_space<vmem>>
    %183 = tpu.memref_slice %arg6[%9, %c27_i32_120] : memref<2x32x!tpu.dma_semaphore, #tpu.memory_space<semaphore_mem>> -> memref<1x1x!tpu.dma_semaphore, #tpu.memory_space<semaphore_mem>>
    %184 = tpu.memref_squeeze %183 : memref<1x1x!tpu.dma_semaphore, #tpu.memory_space<semaphore_mem>> -> memref<!tpu.dma_semaphore, #tpu.memory_space<semaphore_mem>>
    tpu.wait_dma2 semaphore(%184 : memref<!tpu.dma_semaphore, #tpu.memory_space<semaphore_mem>>) src(%180 : memref<128xf32, #tpu.memory_space<any>>) dst(%182 : memref<128xf32, #tpu.memory_space<vmem>>)
    %c0_i32_123 = arith.constant 0 : i32
    %c28_i32 = arith.constant 28 : i32
    %c28_i32_124 = arith.constant 28 : i32
    %c0_i32_125 = arith.constant 0 : i32
    %185 = tpu.memref_slice %arg3[%c0_i32_123, %c0_i32_125] : memref<1000x128xf32, #tpu.memory_space<any>> -> memref<1x128xf32, #tpu.memory_space<any>>
    %186 = tpu.memref_squeeze %185 : memref<1x128xf32, #tpu.memory_space<any>> -> memref<128xf32, #tpu.memory_space<any>>
    %c0_i32_126 = arith.constant 0 : i32
    %187 = tpu.memref_slice %arg5[%9, %c28_i32, %c0_i32_126] : memref<2x32x128xf32, #tpu.memory_space<vmem>> -> memref<1x1x128xf32, #tpu.memory_space<vmem>>
    %188 = tpu.memref_squeeze %187 : memref<1x1x128xf32, #tpu.memory_space<vmem>> -> memref<128xf32, #tpu.memory_space<vmem>>
    %189 = tpu.memref_slice %arg6[%9, %c28_i32_124] : memref<2x32x!tpu.dma_semaphore, #tpu.memory_space<semaphore_mem>> -> memref<1x1x!tpu.dma_semaphore, #tpu.memory_space<semaphore_mem>>
    %190 = tpu.memref_squeeze %189 : memref<1x1x!tpu.dma_semaphore, #tpu.memory_space<semaphore_mem>> -> memref<!tpu.dma_semaphore, #tpu.memory_space<semaphore_mem>>
    tpu.wait_dma2 semaphore(%190 : memref<!tpu.dma_semaphore, #tpu.memory_space<semaphore_mem>>) src(%186 : memref<128xf32, #tpu.memory_space<any>>) dst(%188 : memref<128xf32, #tpu.memory_space<vmem>>)
    %c0_i32_127 = arith.constant 0 : i32
    %c29_i32 = arith.constant 29 : i32
    %c29_i32_128 = arith.constant 29 : i32
    %c0_i32_129 = arith.constant 0 : i32
    %191 = tpu.memref_slice %arg3[%c0_i32_127, %c0_i32_129] : memref<1000x128xf32, #tpu.memory_space<any>> -> memref<1x128xf32, #tpu.memory_space<any>>
    %192 = tpu.memref_squeeze %191 : memref<1x128xf32, #tpu.memory_space<any>> -> memref<128xf32, #tpu.memory_space<any>>
    %c0_i32_130 = arith.constant 0 : i32
    %193 = tpu.memref_slice %arg5[%9, %c29_i32, %c0_i32_130] : memref<2x32x128xf32, #tpu.memory_space<vmem>> -> memref<1x1x128xf32, #tpu.memory_space<vmem>>
    %194 = tpu.memref_squeeze %193 : memref<1x1x128xf32, #tpu.memory_space<vmem>> -> memref<128xf32, #tpu.memory_space<vmem>>
    %195 = tpu.memref_slice %arg6[%9, %c29_i32_128] : memref<2x32x!tpu.dma_semaphore, #tpu.memory_space<semaphore_mem>> -> memref<1x1x!tpu.dma_semaphore, #tpu.memory_space<semaphore_mem>>
    %196 = tpu.memref_squeeze %195 : memref<1x1x!tpu.dma_semaphore, #tpu.memory_space<semaphore_mem>> -> memref<!tpu.dma_semaphore, #tpu.memory_space<semaphore_mem>>
    tpu.wait_dma2 semaphore(%196 : memref<!tpu.dma_semaphore, #tpu.memory_space<semaphore_mem>>) src(%192 : memref<128xf32, #tpu.memory_space<any>>) dst(%194 : memref<128xf32, #tpu.memory_space<vmem>>)
    %c0_i32_131 = arith.constant 0 : i32
    %c30_i32 = arith.constant 30 : i32
    %c30_i32_132 = arith.constant 30 : i32
    %c0_i32_133 = arith.constant 0 : i32
    %197 = tpu.memref_slice %arg3[%c0_i32_131, %c0_i32_133] : memref<1000x128xf32, #tpu.memory_space<any>> -> memref<1x128xf32, #tpu.memory_space<any>>
    %198 = tpu.memref_squeeze %197 : memref<1x128xf32, #tpu.memory_space<any>> -> memref<128xf32, #tpu.memory_space<any>>
    %c0_i32_134 = arith.constant 0 : i32
    %199 = tpu.memref_slice %arg5[%9, %c30_i32, %c0_i32_134] : memref<2x32x128xf32, #tpu.memory_space<vmem>> -> memref<1x1x128xf32, #tpu.memory_space<vmem>>
    %200 = tpu.memref_squeeze %199 : memref<1x1x128xf32, #tpu.memory_space<vmem>> -> memref<128xf32, #tpu.memory_space<vmem>>
    %201 = tpu.memref_slice %arg6[%9, %c30_i32_132] : memref<2x32x!tpu.dma_semaphore, #tpu.memory_space<semaphore_mem>> -> memref<1x1x!tpu.dma_semaphore, #tpu.memory_space<semaphore_mem>>
    %202 = tpu.memref_squeeze %201 : memref<1x1x!tpu.dma_semaphore, #tpu.memory_space<semaphore_mem>> -> memref<!tpu.dma_semaphore, #tpu.memory_space<semaphore_mem>>
    tpu.wait_dma2 semaphore(%202 : memref<!tpu.dma_semaphore, #tpu.memory_space<semaphore_mem>>) src(%198 : memref<128xf32, #tpu.memory_space<any>>) dst(%200 : memref<128xf32, #tpu.memory_space<vmem>>)
    %c0_i32_135 = arith.constant 0 : i32
    %c31_i32 = arith.constant 31 : i32
    %c31_i32_136 = arith.constant 31 : i32
    %c0_i32_137 = arith.constant 0 : i32
    %203 = tpu.memref_slice %arg3[%c0_i32_135, %c0_i32_137] : memref<1000x128xf32, #tpu.memory_space<any>> -> memref<1x128xf32, #tpu.memory_space<any>>
    %204 = tpu.memref_squeeze %203 : memref<1x128xf32, #tpu.memory_space<any>> -> memref<128xf32, #tpu.memory_space<any>>
    %c0_i32_138 = arith.constant 0 : i32
    %205 = tpu.memref_slice %arg5[%9, %c31_i32, %c0_i32_138] : memref<2x32x128xf32, #tpu.memory_space<vmem>> -> memref<1x1x128xf32, #tpu.memory_space<vmem>>
    %206 = tpu.memref_squeeze %205 : memref<1x1x128xf32, #tpu.memory_space<vmem>> -> memref<128xf32, #tpu.memory_space<vmem>>
    %207 = tpu.memref_slice %arg6[%9, %c31_i32_136] : memref<2x32x!tpu.dma_semaphore, #tpu.memory_space<semaphore_mem>> -> memref<1x1x!tpu.dma_semaphore, #tpu.memory_space<semaphore_mem>>
    %208 = tpu.memref_squeeze %207 : memref<1x1x!tpu.dma_semaphore, #tpu.memory_space<semaphore_mem>> -> memref<!tpu.dma_semaphore, #tpu.memory_space<semaphore_mem>>
    tpu.wait_dma2 semaphore(%208 : memref<!tpu.dma_semaphore, #tpu.memory_space<semaphore_mem>>) src(%204 : memref<128xf32, #tpu.memory_space<any>>) dst(%206 : memref<128xf32, #tpu.memory_space<vmem>>)
    %209 = arith.index_cast %9 : i32 to index
    %c0 = arith.constant 0 : index
    %c0_139 = arith.constant 0 : index
    %210 = vector.load %arg5[%209, %c0, %c0_139] : memref<2x32x128xf32, #tpu.memory_space<vmem>>, vector<1x32x128xf32>
    %211 = vector.shape_cast %210 : vector<1x32x128xf32> to vector<32x128xf32>
    %c0_140 = arith.constant 0 : index
    %c0_141 = arith.constant 0 : index
    %212 = vector.load %arg4[%c0_140, %c0_141] : memref<32x128xf32, #tpu.memory_space<vmem>>, vector<32x128xf32>
    tpu.vector_store %arg4[%c0_140, %c0_141], %211 {strides = array<i32>} : memref<32x128xf32, #tpu.memory_space<vmem>>, vector<32x128xf32>,
    return
  }
  func.func @transform_1(%arg0: i32, %arg1: i32, %arg2: memref<96xi32, #tpu.memory_space<smem>>) -> (i32, i32) {
    %c3_i32 = arith.constant 3 : i32
    %0 = arith.muli %arg0, %c3_i32 : i32
    %1 = arith.addi %0, %arg1 : i32
    %c0_i32 = arith.constant 0 : i32
    %c0_i32_0 = arith.constant 0 : i32
    return %1, %c0_i32 : i32, i32
  }
}

</mosaic_0001>

<llo_original>
// kernel: tpu_custom_call.1
$region0: #{tpu_custom_call.1}
  #allocation0 [shape = 'u32[]', space=smem, size = 0x4, offset = 0x4, fixed_abs, tag = 'smem constant byte address 0x4 - core index']
  #allocation1 [shape = 'u32[144,128]{1,0:T(1,128)}', space=vmem, size = 0x12000, scoped, tag = 'internal scratch']
  #allocation2 [shape = 'f32[2,32,128]{2,1,0:T(8,128)}', space=vmem, size = 0x8000, scoped, tag = 'scratch operand']
  #allocation3 [shape = 's32[64]{0}', space=sflag, size = 0x100, scoped, tag = 'scratch operand']
  #allocation4 [shape = 's32[1]{0}', space=sflag, size = 0x4, scoped, tag = 'scoped memory for tpu_custom_call.1']
  #allocation5 [shape = 'u8[512]{0}', space=smem, size = 0x200, scoped, tag = 'prefetched SMEM operand 0']
  #allocation8 [shape = 's32[]', space=sflag, size = 0x4, offset = 0, fixed_abs, tag = 'sflag constant byte address 0x0 - dummy sync flag']
  #allocation9 [shape = 's32[]', space=sflag, size = 0x4, offset = 0, fixed_abs, tag = 'sflag constant byte address 0x0 - dummy sync flag']
  #allocation10 [shape = 'u32[]', space=smem, size = 0x4, offset = 0x44, fixed_abs, tag = 'smem constant byte address 0x44 - assertion arg 0']
  #allocation11 [shape = 'u32[]', space=smem, size = 0x4, offset = 0x48, fixed_abs, tag = 'smem constant byte address 0x48 - assertion arg 1']
  #allocation12 [shape = 's32[]', space=sflag, size = 0x4, offset = 0, fixed_abs, tag = 'sflag constant byte address 0x0 - dummy sync flag']
  #allocation13 [shape = 's32[]', space=sflag, size = 0x4, offset = 0, fixed_abs, tag = 'sflag constant byte address 0x0 - dummy sync flag']
  #allocation14 [shape = 's32[]', space=sflag, size = 0x4, offset = 0, fixed_abs, tag = 'sflag constant byte address 0x0 - dummy sync flag']
  #allocation15 [shape = 's32[]', space=sflag, size = 0x4, offset = 0, fixed_abs, tag = 'sflag constant byte address 0x0 - dummy sync flag']
  #allocation16 [shape = 's32[]', space=sflag, size = 0x4, offset = 0, fixed_abs, tag = 'sflag constant byte address 0x0 - dummy sync flag']
  #allocation17 [shape = 's32[]', space=sflag, size = 0x4, offset = 0, fixed_abs, tag = 'sflag constant byte address 0x0 - dummy sync flag']
  #allocation18 [shape = 's32[]', space=sflag, size = 0x4, offset = 0, fixed_abs, tag = 'sflag constant byte address 0x0 - dummy sync flag']
  #allocation19 [shape = 's32[]', space=sflag, size = 0x4, offset = 0, fixed_abs, tag = 'sflag constant byte address 0x0 - dummy sync flag']
  #allocation20 [shape = 's32[]', space=sflag, size = 0x4, offset = 0, fixed_abs, tag = 'sflag constant byte address 0x0 - dummy sync flag']
  #allocation21 [shape = 's32[]', space=sflag, size = 0x4, offset = 0, fixed_abs, tag = 'sflag constant byte address 0x0 - dummy sync flag']
  #allocation22 [shape = 's32[]', space=sflag, size = 0x4, offset = 0, fixed_abs, tag = 'sflag constant byte address 0x0 - dummy sync flag']
  #allocation23 [shape = 's32[]', space=sflag, size = 0x4, offset = 0, fixed_abs, tag = 'sflag constant byte address 0x0 - dummy sync flag']
  #allocation24 [shape = 's32[]', space=sflag, size = 0x4, offset = 0, fixed_abs, tag = 'sflag constant byte address 0x0 - dummy sync flag']
  #allocation25 [shape = 's32[]', space=sflag, size = 0x4, offset = 0, fixed_abs, tag = 'sflag constant byte address 0x0 - dummy sync flag']
  #allocation26 [shape = 's32[]', space=sflag, size = 0x4, offset = 0, fixed_abs, tag = 'sflag constant byte address 0x0 - dummy sync flag']
  #allocation27 [shape = 's32[]', space=sflag, size = 0x4, offset = 0, fixed_abs, tag = 'sflag constant byte address 0x0 - dummy sync flag']
  #allocation28 [shape = 's32[]', space=sflag, size = 0x4, offset = 0, fixed_abs, tag = 'sflag constant byte address 0x0 - dummy sync flag']
  #allocation29 [shape = 's32[]', space=sflag, size = 0x4, offset = 0, fixed_abs, tag = 'sflag constant byte address 0x0 - dummy sync flag']
  #allocation30 [shape = 's32[]', space=sflag, size = 0x4, offset = 0, fixed_abs, tag = 'sflag constant byte address 0x0 - dummy sync flag']
  #allocation31 [shape = 's32[]', space=sflag, size = 0x4, offset = 0, fixed_abs, tag = 'sflag constant byte address 0x0 - dummy sync flag']
  #allocation32 [shape = 's32[]', space=sflag, size = 0x4, offset = 0, fixed_abs, tag = 'sflag constant byte address 0x0 - dummy sync flag']
  #allocation33 [shape = 's32[]', space=sflag, size = 0x4, offset = 0, fixed_abs, tag = 'sflag constant byte address 0x0 - dummy sync flag']
  #allocation34 [shape = 's32[]', space=sflag, size = 0x4, offset = 0, fixed_abs, tag = 'sflag constant byte address 0x0 - dummy sync flag']
  #allocation35 [shape = 's32[]', space=sflag, size = 0x4, offset = 0, fixed_abs, tag = 'sflag constant byte address 0x0 - dummy sync flag']
  #allocation36 [shape = 's32[]', space=sflag, size = 0x4, offset = 0, fixed_abs, tag = 'sflag constant byte address 0x0 - dummy sync flag']
  #allocation37 [shape = 's32[]', space=sflag, size = 0x4, offset = 0, fixed_abs, tag = 'sflag constant byte address 0x0 - dummy sync flag']
  #allocation38 [shape = 's32[]', space=sflag, size = 0x4, offset = 0, fixed_abs, tag = 'sflag constant byte address 0x0 - dummy sync flag']
  #allocation39 [shape = 's32[]', space=sflag, size = 0x4, offset = 0, fixed_abs, tag = 'sflag constant byte address 0x0 - dummy sync flag']
  #allocation40 [shape = 's32[]', space=sflag, size = 0x4, offset = 0, fixed_abs, tag = 'sflag constant byte address 0x0 - dummy sync flag']
  #allocation41 [shape = 's32[]', space=sflag, size = 0x4, offset = 0, fixed_abs, tag = 'sflag constant byte address 0x0 - dummy sync flag']
  #allocation42 [shape = 's32[]', space=sflag, size = 0x4, offset = 0, fixed_abs, tag = 'sflag constant byte address 0x0 - dummy sync flag']
  #allocation43 [shape = 's32[]', space=sflag, size = 0x4, offset = 0, fixed_abs, tag = 'sflag constant byte address 0x0 - dummy sync flag']
  #allocation44 [shape = 's32[]', space=sflag, size = 0x4, offset = 0, fixed_abs, tag = 'sflag constant byte address 0x0 - dummy sync flag']
  #allocation45 [shape = 's32[]', space=sflag, size = 0x4, offset = 0, fixed_abs, tag = 'sflag constant byte address 0x0 - dummy sync flag']
  #allocation46 [shape = 's32[]', space=sflag, size = 0x4, offset = 0, fixed_abs, tag = 'sflag constant byte address 0x0 - dummy sync flag']
  #allocation47 [shape = 's32[]', space=sflag, size = 0x4, offset = 0, fixed_abs, tag = 'sflag constant byte address 0x0 - dummy sync flag']
  #allocation48 [shape = 's32[]', space=sflag, size = 0x4, offset = 0, fixed_abs, tag = 'sflag constant byte address 0x0 - dummy sync flag']
  #allocation49 [shape = 's32[]', space=sflag, size = 0x4, offset = 0, fixed_abs, tag = 'sflag constant byte address 0x0 - dummy sync flag']
  #allocation50 [shape = 's32[]', space=sflag, size = 0x4, offset = 0, fixed_abs, tag = 'sflag constant byte address 0x0 - dummy sync flag']
  #allocation51 [shape = 's32[]', space=sflag, size = 0x4, offset = 0, fixed_abs, tag = 'sflag constant byte address 0x0 - dummy sync flag']
  #allocation52 [shape = 's32[]', space=sflag, size = 0x4, offset = 0, fixed_abs, tag = 'sflag constant byte address 0x0 - dummy sync flag']
  #allocation53 [shape = 's32[]', space=sflag, size = 0x4, offset = 0, fixed_abs, tag = 'sflag constant byte address 0x0 - dummy sync flag']
  #allocation54 [shape = 's32[]', space=sflag, size = 0x4, offset = 0, fixed_abs, tag = 'sflag constant byte address 0x0 - dummy sync flag']
  #allocation55 [shape = 's32[]', space=sflag, size = 0x4, offset = 0, fixed_abs, tag = 'sflag constant byte address 0x0 - dummy sync flag']
  #allocation56 [shape = 's32[]', space=sflag, size = 0x4, offset = 0, fixed_abs, tag = 'sflag constant byte address 0x0 - dummy sync flag']
  #allocation57 [shape = 's32[]', space=sflag, size = 0x4, offset = 0, fixed_abs, tag = 'sflag constant byte address 0x0 - dummy sync flag']
  #allocation58 [shape = 's32[]', space=sflag, size = 0x4, offset = 0, fixed_abs, tag = 'sflag constant byte address 0x0 - dummy sync flag']
  #allocation59 [shape = 's32[]', space=sflag, size = 0x4, offset = 0, fixed_abs, tag = 'sflag constant byte address 0x0 - dummy sync flag']
  #allocation60 [shape = 's32[]', space=sflag, size = 0x4, offset = 0, fixed_abs, tag = 'sflag constant byte address 0x0 - dummy sync flag']
  #allocation61 [shape = 's32[]', space=sflag, size = 0x4, offset = 0, fixed_abs, tag = 'sflag constant byte address 0x0 - dummy sync flag']
  #allocation62 [shape = 's32[]', space=sflag, size = 0x4, offset = 0, fixed_abs, tag = 'sflag constant byte address 0x0 - dummy sync flag']
  #allocation63 [shape = 's32[]', space=sflag, size = 0x4, offset = 0, fixed_abs, tag = 'sflag constant byte address 0x0 - dummy sync flag']
  #allocation64 [shape = 's32[]', space=sflag, size = 0x4, offset = 0, fixed_abs, tag = 'sflag constant byte address 0x0 - dummy sync flag']
  #allocation65 [shape = 's32[]', space=sflag, size = 0x4, offset = 0, fixed_abs, tag = 'sflag constant byte address 0x0 - dummy sync flag']
  #allocation66 [shape = 's32[]', space=sflag, size = 0x4, offset = 0, fixed_abs, tag = 'sflag constant byte address 0x0 - dummy sync flag']
  #allocation67 [shape = 's32[]', space=sflag, size = 0x4, offset = 0, fixed_abs, tag = 'sflag constant byte address 0x0 - dummy sync flag']
  #allocation68 [shape = 's32[]', space=sflag, size = 0x4, offset = 0, fixed_abs, tag = 'sflag constant byte address 0x0 - dummy sync flag']
  #allocation69 [shape = 's32[]', space=sflag, size = 0x4, offset = 0, fixed_abs, tag = 'sflag constant byte address 0x0 - dummy sync flag']
  #allocation70 [shape = 's32[]', space=sflag, size = 0x4, offset = 0, fixed_abs, tag = 'sflag constant byte address 0x0 - dummy sync flag']
  #allocation71 [shape = 's32[]', space=sflag, size = 0x4, offset = 0, fixed_abs, tag = 'sflag constant byte address 0x0 - dummy sync flag']
  #allocation72 [shape = 's32[]', space=sflag, size = 0x4, offset = 0, fixed_abs, tag = 'sflag constant byte address 0x0 - dummy sync flag']
  #allocation73 [shape = 's32[]', space=sflag, size = 0x4, offset = 0, fixed_abs, tag = 'sflag constant byte address 0x0 - dummy sync flag']
  #allocation74 [shape = 's32[]', space=sflag, size = 0x4, offset = 0, fixed_abs, tag = 'sflag constant byte address 0x0 - dummy sync flag']
  #allocation75 [shape = 's32[]', space=sflag, size = 0x4, offset = 0, fixed_abs, tag = 'sflag constant byte address 0x0 - dummy sync flag']
  #allocation76 [shape = 's32[]', space=sflag, size = 0x4, offset = 0, fixed_abs, tag = 'sflag constant byte address 0x0 - dummy sync flag']
  #allocation77 [shape = 's32[]', space=sflag, size = 0x4, offset = 0, fixed_abs, tag = 'sflag constant byte address 0x0 - dummy sync flag']
  #allocation78 [shape = 's32[]', space=sflag, size = 0x4, offset = 0, fixed_abs, tag = 'sflag constant byte address 0x0 - dummy sync flag']
  #allocation79 [shape = 's32[]', space=sflag, size = 0x4, offset = 0, fixed_abs, tag = 'sflag constant byte address 0x0 - dummy sync flag']
  #allocation80 [shape = 's32[]', space=sflag, size = 0x4, offset = 0, fixed_abs, tag = 'sflag constant byte address 0x0 - dummy sync flag']
  #allocation81 [shape = 's32[]', space=sflag, size = 0x4, offset = 0, fixed_abs, tag = 'sflag constant byte address 0x0 - dummy sync flag']
  #allocation82 [shape = 's32[]', space=sflag, size = 0x4, offset = 0, fixed_abs, tag = 'sflag constant byte address 0x0 - dummy sync flag']
  #allocation83 [shape = 's32[]', space=sflag, size = 0x4, offset = 0, fixed_abs, tag = 'sflag constant byte address 0x0 - dummy sync flag']
  #allocation84 [shape = 's32[]', space=sflag, size = 0x4, offset = 0, fixed_abs, tag = 'sflag constant byte address 0x0 - dummy sync flag']
  #allocation85 [shape = 's32[]', space=sflag, size = 0x4, offset = 0, fixed_abs, tag = 'sflag constant byte address 0x0 - dummy sync flag']
  #allocation86 [shape = 's32[]', space=sflag, size = 0x4, offset = 0, fixed_abs, tag = 'sflag constant byte address 0x0 - dummy sync flag']
  #allocation87 [shape = 's32[]', space=sflag, size = 0x4, offset = 0, fixed_abs, tag = 'sflag constant byte address 0x0 - dummy sync flag']
  #allocation88 [shape = 's32[]', space=sflag, size = 0x4, offset = 0, fixed_abs, tag = 'sflag constant byte address 0x0 - dummy sync flag']
  #allocation89 [shape = 's32[]', space=sflag, size = 0x4, offset = 0, fixed_abs, tag = 'sflag constant byte address 0x0 - dummy sync flag']
  #allocation90 [shape = 's32[]', space=sflag, size = 0x4, offset = 0, fixed_abs, tag = 'sflag constant byte address 0x0 - dummy sync flag']
  #allocation91 [shape = 's32[]', space=sflag, size = 0x4, offset = 0, fixed_abs, tag = 'sflag constant byte address 0x0 - dummy sync flag']
  #allocation92 [shape = 's32[]', space=sflag, size = 0x4, offset = 0, fixed_abs, tag = 'sflag constant byte address 0x0 - dummy sync flag']
  #allocation93 [shape = 's32[]', space=sflag, size = 0x4, offset = 0, fixed_abs, tag = 'sflag constant byte address 0x0 - dummy sync flag']
  #allocation94 [shape = 's32[]', space=sflag, size = 0x4, offset = 0, fixed_abs, tag = 'sflag constant byte address 0x0 - dummy sync flag']
  #allocation95 [shape = 's32[]', space=sflag, size = 0x4, offset = 0, fixed_abs, tag = 'sflag constant byte address 0x0 - dummy sync flag']
  #allocation96 [shape = 's32[]', space=sflag, size = 0x4, offset = 0, fixed_abs, tag = 'sflag constant byte address 0x0 - dummy sync flag']
  #allocation97 [shape = 's32[]', space=sflag, size = 0x4, offset = 0, fixed_abs, tag = 'sflag constant byte address 0x0 - dummy sync flag']
  #allocation98 [shape = 's32[]', space=sflag, size = 0x4, offset = 0, fixed_abs, tag = 'sflag constant byte address 0x0 - dummy sync flag']
  #allocation99 [shape = 's32[]', space=sflag, size = 0x4, offset = 0, fixed_abs, tag = 'sflag constant byte address 0x0 - dummy sync flag']
  #allocation100 [shape = 's32[]', space=sflag, size = 0x4, offset = 0, fixed_abs, tag = 'sflag constant byte address 0x0 - dummy sync flag']
  #allocation101 [shape = 's32[]', space=sflag, size = 0x4, offset = 0, fixed_abs, tag = 'sflag constant byte address 0x0 - dummy sync flag']
  #allocation102 [shape = 's32[]', space=sflag, size = 0x4, offset = 0, fixed_abs, tag = 'sflag constant byte address 0x0 - dummy sync flag']
  #allocation103 [shape = 's32[]', space=sflag, size = 0x4, offset = 0, fixed_abs, tag = 'sflag constant byte address 0x0 - dummy sync flag']
  #allocation104 [shape = 's32[]', space=sflag, size = 0x4, offset = 0, fixed_abs, tag = 'sflag constant byte address 0x0 - dummy sync flag']
  #allocation105 [shape = 's32[]', space=sflag, size = 0x4, offset = 0, fixed_abs, tag = 'sflag constant byte address 0x0 - dummy sync flag']
  #allocation106 [shape = 's32[]', space=sflag, size = 0x4, offset = 0, fixed_abs, tag = 'sflag constant byte address 0x0 - dummy sync flag']
  #allocation107 [shape = 's32[]', space=sflag, size = 0x4, offset = 0, fixed_abs, tag = 'sflag constant byte address 0x0 - dummy sync flag']
  #allocation108 [shape = 's32[]', space=sflag, size = 0x4, offset = 0, fixed_abs, tag = 'sflag constant byte address 0x0 - dummy sync flag']
  #allocation109 [shape = 's32[]', space=sflag, size = 0x4, offset = 0, fixed_abs, tag = 'sflag constant byte address 0x0 - dummy sync flag']
  #allocation110 [shape = 's32[]', space=sflag, size = 0x4, offset = 0, fixed_abs, tag = 'sflag constant byte address 0x0 - dummy sync flag']
  #allocation111 [shape = 's32[]', space=sflag, size = 0x4, offset = 0, fixed_abs, tag = 'sflag constant byte address 0x0 - dummy sync flag']
  #allocation112 [shape = 's32[]', space=sflag, size = 0x4, offset = 0, fixed_abs, tag = 'sflag constant byte address 0x0 - dummy sync flag']
  #allocation113 [shape = 's32[]', space=sflag, size = 0x4, offset = 0, fixed_abs, tag = 'sflag constant byte address 0x0 - dummy sync flag']
  #allocation114 [shape = 's32[]', space=sflag, size = 0x4, offset = 0, fixed_abs, tag = 'sflag constant byte address 0x0 - dummy sync flag']
  #allocation115 [shape = 's32[]', space=sflag, size = 0x4, offset = 0, fixed_abs, tag = 'sflag constant byte address 0x0 - dummy sync flag']
  #allocation116 [shape = 's32[]', space=sflag, size = 0x4, offset = 0, fixed_abs, tag = 'sflag constant byte address 0x0 - dummy sync flag']
  #allocation117 [shape = 's32[]', space=sflag, size = 0x4, offset = 0, fixed_abs, tag = 'sflag constant byte address 0x0 - dummy sync flag']
  #allocation118 [shape = 's32[]', space=sflag, size = 0x4, offset = 0, fixed_abs, tag = 'sflag constant byte address 0x0 - dummy sync flag']
  #allocation119 [shape = 's32[]', space=sflag, size = 0x4, offset = 0, fixed_abs, tag = 'sflag constant byte address 0x0 - dummy sync flag']
  #allocation120 [shape = 's32[]', space=sflag, size = 0x4, offset = 0, fixed_abs, tag = 'sflag constant byte address 0x0 - dummy sync flag']
  #allocation121 [shape = 's32[]', space=sflag, size = 0x4, offset = 0, fixed_abs, tag = 'sflag constant byte address 0x0 - dummy sync flag']
  #allocation122 [shape = 's32[]', space=sflag, size = 0x4, offset = 0, fixed_abs, tag = 'sflag constant byte address 0x0 - dummy sync flag']
  #allocation123 [shape = 's32[]', space=sflag, size = 0x4, offset = 0, fixed_abs, tag = 'sflag constant byte address 0x0 - dummy sync flag']
  #allocation124 [shape = 's32[]', space=sflag, size = 0x4, offset = 0, fixed_abs, tag = 'sflag constant byte address 0x0 - dummy sync flag']
  #allocation125 [shape = 's32[]', space=sflag, size = 0x4, offset = 0, fixed_abs, tag = 'sflag constant byte address 0x0 - dummy sync flag']
  #allocation126 [shape = 's32[]', space=sflag, size = 0x4, offset = 0, fixed_abs, tag = 'sflag constant byte address 0x0 - dummy sync flag']
  #allocation127 [shape = 's32[]', space=sflag, size = 0x4, offset = 0, fixed_abs, tag = 'sflag constant byte address 0x0 - dummy sync flag']
  #allocation128 [shape = 's32[]', space=sflag, size = 0x4, offset = 0, fixed_abs, tag = 'sflag constant byte address 0x0 - dummy sync flag']
  #allocation129 [shape = 's32[]', space=sflag, size = 0x4, offset = 0, fixed_abs, tag = 'sflag constant byte address 0x0 - dummy sync flag']
  #allocation130 [shape = 's32[]', space=sflag, size = 0x4, offset = 0, fixed_abs, tag = 'sflag constant byte address 0x0 - dummy sync flag']
  #allocation131 [shape = 's32[]', space=sflag, size = 0x4, offset = 0, fixed_abs, tag = 'sflag constant byte address 0x0 - dummy sync flag']
  #allocation132 [shape = 's32[]', space=sflag, size = 0x4, offset = 0, fixed_abs, tag = 'sflag constant byte address 0x0 - dummy sync flag']
  #allocation133 [shape = 's32[]', space=sflag, size = 0x4, offset = 0, fixed_abs, tag = 'sflag constant byte address 0x0 - dummy sync flag']
  #allocation134 [shape = 's32[]', space=sflag, size = 0x4, offset = 0, fixed_abs, tag = 'sflag constant byte address 0x0 - dummy sync flag']
  #allocation135 [shape = 's32[]', space=sflag, size = 0x4, offset = 0, fixed_abs, tag = 'sflag constant byte address 0x0 - dummy sync flag']
  #allocation136 [shape = 's32[]', space=sflag, size = 0x4, offset = 0, fixed_abs, tag = 'sflag constant byte address 0x0 - dummy sync flag']
  #allocation137 [shape = 's32[]', space=sflag, size = 0x4, offset = 0, fixed_abs, tag = 'sflag constant byte address 0x0 - dummy sync flag']
  %s0 = inlined_call_operand.hbm [shape: s32[96], index: 0, kind: input, shape index: {}]
  %s1 = inlined_call_operand.hbm [shape: f32[1000,128], index: 1, kind: input, shape index: {}]
  %s2 = inlined_call_operand.hbm [shape: f32[96,128], index: 2, kind: output, shape index: {}]
  %s3 = sld [smem:[#allocation0]]
  $region289: #{tpu_custom_call.1} parent=0
    _
  %s5 = ssub.s32 1, %s3
  %s6 = scalar_select 0, %s5, %s3
  %8 = dma.hbm_to_smem %s0, 16, [#allocation5], [#allocation4]
  %9 = dma.done [#allocation4], 16
  %10 = sfence
  $region1: #{tpu_custom_call.1} parent=0
    #allocation6 [shape = 'u8[32768]{0}', space=vmem, size = 0x8000, scoped, tag = 'output window, operand 0']
    #allocation7 [shape = 's32[2]{0}', space=sflag, size = 0x8, scoped, tag = 'scoped memory for tpu_custom_call.1']
    %11 = vsyncpa [#allocation7], 0
    %s12 = scalar_lea.sflag [#allocation7], 1
    %13 = vsyncpa %s12, 0
    loop: start=0, step=1, limit=4
    $region2: #{tpu_custom_call.1} parent=1 // loop_pre_header
      _
    $region3: #{tpu_custom_call.1} parent=1 // loop_header
      %s15 = sphi 0, %s19
      %p16 = scmp.ge.s32.totalorder %s15, 4
      %s21 = sphi 0, %s31
      %s22 = sphi 0, %s27
      %s23 = sphi 0, %s21
      %s24 = sphi 0, %s22
      %s38 = sphi 0, %s40
      %s41 = sphi 0, %s38
      %s51 = sphi 0, %s41
    $region4: #{tpu_custom_call.1} parent=1 // loop_header_branch
      %18 = sbr.rel (%p16) target = $region8
    $region5: #{tpu_custom_call.1} parent=1 // loop_body
      %s20 = ssub.s32 %s15, 1
      %s25 = sadd.s32 1, %s22
      %p26 = scmp.ge.s32.totalorder %s25, 3
      %s27 = scalar_select %p26, 0, %s25
      %s28 = sadd.s32 1, %s21
      %s29 = scalar_select %p26, %s28, %s21
      %p30 = scmp.ge.s32.totalorder %s29, 1
      %s31 = scalar_select %p30, 0, %s29
      %s32 = smul.u32 %s21, 3
      %s33 = sadd.s32 %s32, %s22
      %s34 = smul.u32 %s31, 3
      %s35 = sadd.s32 %s34, %s27
      %s36 = ssub.s32 %s33, %s35
      %p37 = scmp.eq.s32.totalorder %s36, 0
      %s39 = sadd.s32 %s38, 1
      %s40 = scalar_select %p37, %s38, %s39
      %p42 = pneg %p37
      %p43 = scmp.eq.s32.totalorder %s15, 2
      %p44 = por %p42, %p43
      %p45 = scmp.ne.s32.totalorder %s38, %s41
      %p46 = scmp.eq.s32.totalorder %s15, 0
      %p47 = por %p45, %p46
      %p48 = scmp.ne.s32.totalorder %s38, %s41
      %p49 = scmp.eq.s32.totalorder %s20, 2
      %p50 = por %p48, %p49
      %p52 = scmp.ne.s32.totalorder %s41, %s51
      %p53 = scmp.eq.s32.totalorder %s20, 0
      %p54 = por %p52, %p53
      %p55 = scmp.lt.s32.totalorder %s15, 3
      // Predicated region
      $region9: #{tpu_custom_call.1} parent=5 // pred_check
        %p56 = pneg %p55
      $region10: #{tpu_custom_call.1} parent=5 // pred_check_branch
        %58 = sbr.rel (%p56) target = $region12
      $region11: #{tpu_custom_call.1} parent=5 // pred_region
        %p59 = pneg %p47
        %p60 = pneg %p44
        %s61 = sand.u32 %s38, 1
        %s62 = scalar_lea.sflag [#allocation7], %s61
        %s63 = sand.u32 %s38, 1
        %s64 = smul.addr %s63, 32
        %s65 = scalar_lea.vmem [#allocation6], %s64
        %s66 = smul.u32 %s21, 3
        %s67 = sadd.s32 %s66, %s22
        %s68 = smul.u32 4, %s67
        %p69 = scmp.lt.s32.totalorder %s22, 0
        %s70 = ssub.s32 0, %s22
        %s71 = scalar_select %p69, %s70, %s22
        %s72 = sand.u32 %s71, 1
        %s73 = ssub.s32 0, %s72
        %s74 = scalar_select %p69, %s73, %s72
        %p75 = scmp.ne.s32.totalorder %s74, 0
        %p76 = scmp.lt.s32.totalorder %s74, 0
        %p77 = pnand %p76, %p75
        %p78 = pneg %p77
        %s79 = sadd.s32 %s74, 2
        %s80 = scalar_select %p78, %s79, %s74
        %p81 = scmp.eq.s32.totalorder %s22, 0
        // Predicated region
        $region13: #{tpu_custom_call.1} parent=11 // pred_check
          %p82 = pneg %p81
        $region14: #{tpu_custom_call.1} parent=11 // pred_check_branch
          %84 = sbr.rel (%p82) target = $region16
        $region15: #{tpu_custom_call.1} parent=11 // pred_region
          %s85 = smul.u32 %s21, 96
          %s86 = sld [smem:[#allocation5 + %s85]]
          %s87 = smul.addr %s86, 16
          %s88 = scalar_lea.hbm %s1, %s87
          // Predicated region
          $region17: #{tpu_custom_call.1} parent=15 // pred_check
            _
          $region18: #{tpu_custom_call.1} parent=15 // pred_check_branch
            %90 = sbr.rel target = $region20
          $region19: #{tpu_custom_call.1} parent=15 // pred_region
            %91 = sst [smem:[#allocation10]] [#allocation9]
            %92 = sst [smem:[#allocation11]] [#allocation8]
          $region20: #{tpu_custom_call.1} parent=15 // pred_fallthru
            _
          %94 = shalt.err (0)
          %s96 = sshll.u32 [#allocation2], 4
          %s97 = int_to_ptr.vmem [resolvable:$true] %s96
          %99 = dma.hbm_to_vmem [thread:$0]  %s88, 16, %s97, [#allocation3]
          %s100 = sadd.s32 %s85, 1
          %s101 = sld [smem:[#allocation5 + %s100]]
          %s102 = smul.addr %s101, 16
          %s103 = scalar_lea.hbm %s1, %s102
          %s104 = scalar_lea.vmem [#allocation2], 1
          %s105 = scalar_lea.sflag [#allocation3], 1
          // Predicated region
          $region21: #{tpu_custom_call.1} parent=15 // pred_check
            _
          $region22: #{tpu_custom_call.1} parent=15 // pred_check_branch
            %107 = sbr.rel target = $region24
          $region23: #{tpu_custom_call.1} parent=15 // pred_region
            %108 = sst [smem:[#allocation10]] [#allocation13]
            %109 = sst [smem:[#allocation11]] [#allocation12]
          $region24: #{tpu_custom_call.1} parent=15 // pred_fallthru
            _
          %111 = shalt.err (0)
          %s113 = sshll.u32 %s104, 4
          %s114 = int_to_ptr.vmem [resolvable:$true] %s113
          %116 = dma.hbm_to_vmem [thread:$0]  %s103, 16, %s114, %s105
          %s117 = sadd.s32 %s85, 2
          %s118 = sld [smem:[#allocation5 + %s117]]
          %s119 = smul.addr %s118, 16
          %s120 = scalar_lea.hbm %s1, %s119
          %s121 = scalar_lea.vmem [#allocation2], 2
          %s122 = scalar_lea.sflag [#allocation3], 2
          // Predicated region
          $region25: #{tpu_custom_call.1} parent=15 // pred_check
            _
          $region26: #{tpu_custom_call.1} parent=15 // pred_check_branch
            %124 = sbr.rel target = $region28
          $region27: #{tpu_custom_call.1} parent=15 // pred_region
            %125 = sst [smem:[#allocation10]] [#allocation15]
            %126 = sst [smem:[#allocation11]] [#allocation14]
          $region28: #{tpu_custom_call.1} parent=15 // pred_fallthru
            _
          %128 = shalt.err (0)
          %s130 = sshll.u32 %s121, 4
          %s131 = int_to_ptr.vmem [resolvable:$true] %s130
          %133 = dma.hbm_to_vmem [thread:$0]  %s120, 16, %s131, %s122
          %s134 = sadd.s32 %s85, 3
          %s135 = sld [smem:[#allocation5 + %s134]]
          %s136 = smul.addr %s135, 16
          %s137 = scalar_lea.hbm %s1, %s136
          %s138 = scalar_lea.vmem [#allocation2], 3
          %s139 = scalar_lea.sflag [#allocation3], 3
          // Predicated region
          $region29: #{tpu_custom_call.1} parent=15 // pred_check
            _
          $region30: #{tpu_custom_call.1} parent=15 // pred_check_branch
            %141 = sbr.rel target = $region32
          $region31: #{tpu_custom_call.1} parent=15 // pred_region
            %142 = sst [smem:[#allocation10]] [#allocation17]
            %143 = sst [smem:[#allocation11]] [#allocation16]
          $region32: #{tpu_custom_call.1} parent=15 // pred_fallthru
            _
          %145 = shalt.err (0)
          %s147 = sshll.u32 %s138, 4
          %s148 = int_to_ptr.vmem [resolvable:$true] %s147
          %150 = dma.hbm_to_vmem [thread:$0]  %s137, 16, %s148, %s139
          %s151 = sadd.s32 %s85, 4
          %s152 = sld [smem:[#allocation5 + %s151]]
          %s153 = smul.addr %s152, 16
          %s154 = scalar_lea.hbm %s1, %s153
          %s155 = scalar_lea.vmem [#allocation2], 4
          %s156 = scalar_lea.sflag [#allocation3], 4
          // Predicated region
          $region33: #{tpu_custom_call.1} parent=15 // pred_check
            _
          $region34: #{tpu_custom_call.1} parent=15 // pred_check_branch
            %158 = sbr.rel target = $region36
          $region35: #{tpu_custom_call.1} parent=15 // pred_region
            %159 = sst [smem:[#allocation10]] [#allocation19]
            %160 = sst [smem:[#allocation11]] [#allocation18]
          $region36: #{tpu_custom_call.1} parent=15 // pred_fallthru
            _
          %162 = shalt.err (0)
          %s164 = sshll.u32 %s155, 4
          %s165 = int_to_ptr.vmem [resolvable:$true] %s164
          %167 = dma.hbm_to_vmem [thread:$0]  %s154, 16, %s165, %s156
          %s168 = sadd.s32 %s85, 5
          %s169 = sld [smem:[#allocation5 + %s168]]
          %s170 = smul.addr %s169, 16
          %s171 = scalar_lea.hbm %s1, %s170
          %s172 = scalar_lea.vmem [#allocation2], 5
          %s173 = scalar_lea.sflag [#allocation3], 5
          // Predicated region
          $region37: #{tpu_custom_call.1} parent=15 // pred_check
            _
          $region38: #{tpu_custom_call.1} parent=15 // pred_check_branch
            %175 = sbr.rel target = $region40
          $region39: #{tpu_custom_call.1} parent=15 // pred_region
            %176 = sst [smem:[#allocation10]] [#allocation21]
            %177 = sst [smem:[#allocation11]] [#allocation20]
          $region40: #{tpu_custom_call.1} parent=15 // pred_fallthru
            _
          %179 = shalt.err (0)
          %s181 = sshll.u32 %s172, 4
          %s182 = int_to_ptr.vmem [resolvable:$true] %s181
          %184 = dma.hbm_to_vmem [thread:$0]  %s171, 16, %s182, %s173
          %s185 = sadd.s32 %s85, 6
          %s186 = sld [smem:[#allocation5 + %s185]]
          %s187 = smul.addr %s186, 16
          %s188 = scalar_lea.hbm %s1, %s187
          %s189 = scalar_lea.vmem [#allocation2], 6
          %s190 = scalar_lea.sflag [#allocation3], 6
          // Predicated region
          $region41: #{tpu_custom_call.1} parent=15 // pred_check
            _
          $region42: #{tpu_custom_call.1} parent=15 // pred_check_branch
            %192 = sbr.rel target = $region44
          $region43: #{tpu_custom_call.1} parent=15 // pred_region
            %193 = sst [smem:[#allocation10]] [#allocation23]
            %194 = sst [smem:[#allocation11]] [#allocation22]
          $region44: #{tpu_custom_call.1} parent=15 // pred_fallthru
            _
          %196 = shalt.err (0)
          %s198 = sshll.u32 %s189, 4
          %s199 = int_to_ptr.vmem [resolvable:$true] %s198
          %201 = dma.hbm_to_vmem [thread:$0]  %s188, 16, %s199, %s190
          %s202 = sadd.s32 %s85, 7
          %s203 = sld [smem:[#allocation5 + %s202]]
          %s204 = smul.addr %s203, 16
          %s205 = scalar_lea.hbm %s1, %s204
          %s206 = scalar_lea.vmem [#allocation2], 7
          %s207 = scalar_lea.sflag [#allocation3], 7
          // Predicated region
          $region45: #{tpu_custom_call.1} parent=15 // pred_check
            _
          $region46: #{tpu_custom_call.1} parent=15 // pred_check_branch
            %209 = sbr.rel target = $region48
          $region47: #{tpu_custom_call.1} parent=15 // pred_region
            %210 = sst [smem:[#allocation10]] [#allocation25]
            %211 = sst [smem:[#allocation11]] [#allocation24]
          $region48: #{tpu_custom_call.1} parent=15 // pred_fallthru
            _
          %213 = shalt.err (0)
          %s215 = sshll.u32 %s206, 4
          %s216 = int_to_ptr.vmem [resolvable:$true] %s215
          %218 = dma.hbm_to_vmem [thread:$0]  %s205, 16, %s216, %s207
          %s219 = sadd.s32 %s85, 8
          %s220 = sld [smem:[#allocation5 + %s219]]
          %s221 = smul.addr %s220, 16
          %s222 = scalar_lea.hbm %s1, %s221
          %s223 = scalar_lea.vmem [#allocation2], 8
          %s224 = scalar_lea.sflag [#allocation3], 8
          // Predicated region
          $region49: #{tpu_custom_call.1} parent=15 // pred_check
            _
          $region50: #{tpu_custom_call.1} parent=15 // pred_check_branch
            %226 = sbr.rel target = $region52
          $region51: #{tpu_custom_call.1} parent=15 // pred_region
            %227 = sst [smem:[#allocation10]] [#allocation27]
            %228 = sst [smem:[#allocation11]] [#allocation26]
          $region52: #{tpu_custom_call.1} parent=15 // pred_fallthru
            _
          %230 = shalt.err (0)
          %s232 = sshll.u32 %s223, 4
          %s233 = int_to_ptr.vmem [resolvable:$true] %s232
          %235 = dma.hbm_to_vmem [thread:$0]  %s222, 16, %s233, %s224
          %s236 = sadd.s32 %s85, 9
          %s237 = sld [smem:[#allocation5 + %s236]]
          %s238 = smul.addr %s237, 16
          %s239 = scalar_lea.hbm %s1, %s238
          %s240 = scalar_lea.vmem [#allocation2], 9
          %s241 = scalar_lea.sflag [#allocation3], 9
          // Predicated region
          $region53: #{tpu_custom_call.1} parent=15 // pred_check
            _
          $region54: #{tpu_custom_call.1} parent=15 // pred_check_branch
            %243 = sbr.rel target = $region56
          $region55: #{tpu_custom_call.1} parent=15 // pred_region
            %244 = sst [smem:[#allocation10]] [#allocation29]
            %245 = sst [smem:[#allocation11]] [#allocation28]
          $region56: #{tpu_custom_call.1} parent=15 // pred_fallthru
            _
          %247 = shalt.err (0)
          %s249 = sshll.u32 %s240, 4
          %s250 = int_to_ptr.vmem [resolvable:$true] %s249
          %252 = dma.hbm_to_vmem [thread:$0]  %s239, 16, %s250, %s241
          %s253 = sadd.s32 %s85, 10
          %s254 = sld [smem:[#allocation5 + %s253]]
          %s255 = smul.addr %s254, 16
          %s256 = scalar_lea.hbm %s1, %s255
          %s257 = scalar_lea.vmem [#allocation2], 10
          %s258 = scalar_lea.sflag [#allocation3], 10
          // Predicated region
          $region57: #{tpu_custom_call.1} parent=15 // pred_check
            _
          $region58: #{tpu_custom_call.1} parent=15 // pred_check_branch
            %260 = sbr.rel target = $region60
          $region59: #{tpu_custom_call.1} parent=15 // pred_region
            %261 = sst [smem:[#allocation10]] [#allocation31]
            %262 = sst [smem:[#allocation11]] [#allocation30]
          $region60: #{tpu_custom_call.1} parent=15 // pred_fallthru
            _
          %264 = shalt.err (0)
          %s266 = sshll.u32 %s257, 4
          %s267 = int_to_ptr.vmem [resolvable:$true] %s266
          %269 = dma.hbm_to_vmem [thread:$0]  %s256, 16, %s267, %s258
          %s270 = sadd.s32 %s85, 11
          %s271 = sld [smem:[#allocation5 + %s270]]
          %s272 = smul.addr %s271, 16
          %s273 = scalar_lea.hbm %s1, %s272
          %s274 = scalar_lea.vmem [#allocation2], 11
          %s275 = scalar_lea.sflag [#allocation3], 11
          // Predicated region
          $region61: #{tpu_custom_call.1} parent=15 // pred_check
            _
          $region62: #{tpu_custom_call.1} parent=15 // pred_check_branch
            %277 = sbr.rel target = $region64
          $region63: #{tpu_custom_call.1} parent=15 // pred_region
            %278 = sst [smem:[#allocation10]] [#allocation33]
            %279 = sst [smem:[#allocation11]] [#allocation32]
          $region64: #{tpu_custom_call.1} parent=15 // pred_fallthru
            _
          %281 = shalt.err (0)
          %s283 = sshll.u32 %s274, 4
          %s284 = int_to_ptr.vmem [resolvable:$true] %s283
          %286 = dma.hbm_to_vmem [thread:$0]  %s273, 16, %s284, %s275
          %s287 = sadd.s32 %s85, 12
          %s288 = sld [smem:[#allocation5 + %s287]]
          %s289 = smul.addr %s288, 16
          %s290 = scalar_lea.hbm %s1, %s289
          %s291 = scalar_lea.vmem [#allocation2], 12
          %s292 = scalar_lea.sflag [#allocation3], 12
          // Predicated region
          $region65: #{tpu_custom_call.1} parent=15 // pred_check
            _
          $region66: #{tpu_custom_call.1} parent=15 // pred_check_branch
            %294 = sbr.rel target = $region68
          $region67: #{tpu_custom_call.1} parent=15 // pred_region
            %295 = sst [smem:[#allocation10]] [#allocation35]
            %296 = sst [smem:[#allocation11]] [#allocation34]
          $region68: #{tpu_custom_call.1} parent=15 // pred_fallthru
            _
          %298 = shalt.err (0)
          %s300 = sshll.u32 %s291, 4
          %s301 = int_to_ptr.vmem [resolvable:$true] %s300
          %303 = dma.hbm_to_vmem [thread:$0]  %s290, 16, %s301, %s292
          %s304 = sadd.s32 %s85, 13
          %s305 = sld [smem:[#allocation5 + %s304]]
          %s306 = smul.addr %s305, 16
          %s307 = scalar_lea.hbm %s1, %s306
          %s308 = scalar_lea.vmem [#allocation2], 13
          %s309 = scalar_lea.sflag [#allocation3], 13
          // Predicated region
          $region69: #{tpu_custom_call.1} parent=15 // pred_check
            _
          $region70: #{tpu_custom_call.1} parent=15 // pred_check_branch
            %311 = sbr.rel target = $region72
          $region71: #{tpu_custom_call.1} parent=15 // pred_region
            %312 = sst [smem:[#allocation10]] [#allocation37]
            %313 = sst [smem:[#allocation11]] [#allocation36]
          $region72: #{tpu_custom_call.1} parent=15 // pred_fallthru
            _
          %315 = shalt.err (0)
          %s317 = sshll.u32 %s308, 4
          %s318 = int_to_ptr.vmem [resolvable:$true] %s317
          %320 = dma.hbm_to_vmem [thread:$0]  %s307, 16, %s318, %s309
          %s321 = sadd.s32 %s85, 14
          %s322 = sld [smem:[#allocation5 + %s321]]
          %s323 = smul.addr %s322, 16
          %s324 = scalar_lea.hbm %s1, %s323
          %s325 = scalar_lea.vmem [#allocation2], 14
          %s326 = scalar_lea.sflag [#allocation3], 14
          // Predicated region
          $region73: #{tpu_custom_call.1} parent=15 // pred_check
            _
          $region74: #{tpu_custom_call.1} parent=15 // pred_check_branch
            %328 = sbr.rel target = $region76
          $region75: #{tpu_custom_call.1} parent=15 // pred_region
            %329 = sst [smem:[#allocation10]] [#allocation39]
            %330 = sst [smem:[#allocation11]] [#allocation38]
          $region76: #{tpu_custom_call.1} parent=15 // pred_fallthru
            _
          %332 = shalt.err (0)
          %s334 = sshll.u32 %s325, 4
          %s335 = int_to_ptr.vmem [resolvable:$true] %s334
          %337 = dma.hbm_to_vmem [thread:$0]  %s324, 16, %s335, %s326
          %s338 = sadd.s32 %s85, 15
          %s339 = sld [smem:[#allocation5 + %s338]]
          %s340 = smul.addr %s339, 16
          %s341 = scalar_lea.hbm %s1, %s340
          %s342 = scalar_lea.vmem [#allocation2], 15
          %s343 = scalar_lea.sflag [#allocation3], 15
          // Predicated region
          $region77: #{tpu_custom_call.1} parent=15 // pred_check
            _
          $region78: #{tpu_custom_call.1} parent=15 // pred_check_branch
            %345 = sbr.rel target = $region80
          $region79: #{tpu_custom_call.1} parent=15 // pred_region
            %346 = sst [smem:[#allocation10]] [#allocation41]
            %347 = sst [smem:[#allocation11]] [#allocation40]
          $region80: #{tpu_custom_call.1} parent=15 // pred_fallthru
            _
          %349 = shalt.err (0)
          %s351 = sshll.u32 %s342, 4
          %s352 = int_to_ptr.vmem [resolvable:$true] %s351
          %354 = dma.hbm_to_vmem [thread:$0]  %s341, 16, %s352, %s343
          %s355 = sadd.s32 %s85, 16
          %s356 = sld [smem:[#allocation5 + %s355]]
          %s357 = smul.addr %s356, 16
          %s358 = scalar_lea.hbm %s1, %s357
          %s359 = scalar_lea.vmem [#allocation2], 16
          %s360 = scalar_lea.sflag [#allocation3], 16
          // Predicated region
          $region81: #{tpu_custom_call.1} parent=15 // pred_check
            _
          $region82: #{tpu_custom_call.1} parent=15 // pred_check_branch
            %362 = sbr.rel target = $region84
          $region83: #{tpu_custom_call.1} parent=15 // pred_region
            %363 = sst [smem:[#allocation10]] [#allocation43]
            %364 = sst [smem:[#allocation11]] [#allocation42]
          $region84: #{tpu_custom_call.1} parent=15 // pred_fallthru
            _
          %366 = shalt.err (0)
          %s368 = sshll.u32 %s359, 4
          %s369 = int_to_ptr.vmem [resolvable:$true] %s368
          %371 = dma.hbm_to_vmem [thread:$0]  %s358, 16, %s369, %s360
          %s372 = sadd.s32 %s85, 17
          %s373 = sld [smem:[#allocation5 + %s372]]
          %s374 = smul.addr %s373, 16
          %s375 = scalar_lea.hbm %s1, %s374
          %s376 = scalar_lea.vmem [#allocation2], 17
          %s377 = scalar_lea.sflag [#allocation3], 17
          // Predicated region
          $region85: #{tpu_custom_call.1} parent=15 // pred_check
            _
          $region86: #{tpu_custom_call.1} parent=15 // pred_check_branch
            %379 = sbr.rel target = $region88
          $region87: #{tpu_custom_call.1} parent=15 // pred_region
            %380 = sst [smem:[#allocation10]] [#allocation45]
            %381 = sst [smem:[#allocation11]] [#allocation44]
          $region88: #{tpu_custom_call.1} parent=15 // pred_fallthru
            _
          %383 = shalt.err (0)
          %s385 = sshll.u32 %s376, 4
          %s386 = int_to_ptr.vmem [resolvable:$true] %s385
          %388 = dma.hbm_to_vmem [thread:$0]  %s375, 16, %s386, %s377
          %s389 = sadd.s32 %s85, 18
          %s390 = sld [smem:[#allocation5 + %s389]]
          %s391 = smul.addr %s390, 16
          %s392 = scalar_lea.hbm %s1, %s391
          %s393 = scalar_lea.vmem [#allocation2], 18
          %s394 = scalar_lea.sflag [#allocation3], 18
          // Predicated region
          $region89: #{tpu_custom_call.1} parent=15 // pred_check
            _
          $region90: #{tpu_custom_call.1} parent=15 // pred_check_branch
            %396 = sbr.rel target = $region92
          $region91: #{tpu_custom_call.1} parent=15 // pred_region
            %397 = sst [smem:[#allocation10]] [#allocation47]
            %398 = sst [smem:[#allocation11]] [#allocation46]
          $region92: #{tpu_custom_call.1} parent=15 // pred_fallthru
            _
          %400 = shalt.err (0)
          %s402 = sshll.u32 %s393, 4
          %s403 = int_to_ptr.vmem [resolvable:$true] %s402
          %405 = dma.hbm_to_vmem [thread:$0]  %s392, 16, %s403, %s394
          %s406 = sadd.s32 %s85, 19
          %s407 = sld [smem:[#allocation5 + %s406]]
          %s408 = smul.addr %s407, 16
          %s409 = scalar_lea.hbm %s1, %s408
          %s410 = scalar_lea.vmem [#allocation2], 19
          %s411 = scalar_lea.sflag [#allocation3], 19
          // Predicated region
          $region93: #{tpu_custom_call.1} parent=15 // pred_check
            _
          $region94: #{tpu_custom_call.1} parent=15 // pred_check_branch
            %413 = sbr.rel target = $region96
          $region95: #{tpu_custom_call.1} parent=15 // pred_region
            %414 = sst [smem:[#allocation10]] [#allocation49]
            %415 = sst [smem:[#allocation11]] [#allocation48]
          $region96: #{tpu_custom_call.1} parent=15 // pred_fallthru
            _
          %417 = shalt.err (0)
          %s419 = sshll.u32 %s410, 4
          %s420 = int_to_ptr.vmem [resolvable:$true] %s419
          %422 = dma.hbm_to_vmem [thread:$0]  %s409, 16, %s420, %s411
          %s423 = sadd.s32 %s85, 20
          %s424 = sld [smem:[#allocation5 + %s423]]
          %s425 = smul.addr %s424, 16
          %s426 = scalar_lea.hbm %s1, %s425
          %s427 = scalar_lea.vmem [#allocation2], 20
          %s428 = scalar_lea.sflag [#allocation3], 20
          // Predicated region
          $region97: #{tpu_custom_call.1} parent=15 // pred_check
            _
          $region98: #{tpu_custom_call.1} parent=15 // pred_check_branch
            %430 = sbr.rel target = $region100
          $region99: #{tpu_custom_call.1} parent=15 // pred_region
            %431 = sst [smem:[#allocation10]] [#allocation51]
            %432 = sst [smem:[#allocation11]] [#allocation50]
          $region100: #{tpu_custom_call.1} parent=15 // pred_fallthru
            _
          %434 = shalt.err (0)
          %s436 = sshll.u32 %s427, 4
          %s437 = int_to_ptr.vmem [resolvable:$true] %s436
          %439 = dma.hbm_to_vmem [thread:$0]  %s426, 16, %s437, %s428
          %s440 = sadd.s32 %s85, 21
          %s441 = sld [smem:[#allocation5 + %s440]]
          %s442 = smul.addr %s441, 16
          %s443 = scalar_lea.hbm %s1, %s442
          %s444 = scalar_lea.vmem [#allocation2], 21
          %s445 = scalar_lea.sflag [#allocation3], 21
          // Predicated region
          $region101: #{tpu_custom_call.1} parent=15 // pred_check
            _
          $region102: #{tpu_custom_call.1} parent=15 // pred_check_branch
            %447 = sbr.rel target = $region104
          $region103: #{tpu_custom_call.1} parent=15 // pred_region
            %448 = sst [smem:[#allocation10]] [#allocation53]
            %449 = sst [smem:[#allocation11]] [#allocation52]
          $region104: #{tpu_custom_call.1} parent=15 // pred_fallthru
            _
          %451 = shalt.err (0)
          %s453 = sshll.u32 %s444, 4
          %s454 = int_to_ptr.vmem [resolvable:$true] %s453
          %456 = dma.hbm_to_vmem [thread:$0]  %s443, 16, %s454, %s445
          %s457 = sadd.s32 %s85, 22
          %s458 = sld [smem:[#allocation5 + %s457]]
          %s459 = smul.addr %s458, 16
          %s460 = scalar_lea.hbm %s1, %s459
          %s461 = scalar_lea.vmem [#allocation2], 22
          %s462 = scalar_lea.sflag [#allocation3], 22
          // Predicated region
          $region105: #{tpu_custom_call.1} parent=15 // pred_check
            _
          $region106: #{tpu_custom_call.1} parent=15 // pred_check_branch
            %464 = sbr.rel target = $region108
          $region107: #{tpu_custom_call.1} parent=15 // pred_region
            %465 = sst [smem:[#allocation10]] [#allocation55]
            %466 = sst [smem:[#allocation11]] [#allocation54]
          $region108: #{tpu_custom_call.1} parent=15 // pred_fallthru
            _
          %468 = shalt.err (0)
          %s470 = sshll.u32 %s461, 4
          %s471 = int_to_ptr.vmem [resolvable:$true] %s470
          %473 = dma.hbm_to_vmem [thread:$0]  %s460, 16, %s471, %s462
          %s474 = sadd.s32 %s85, 23
          %s475 = sld [smem:[#allocation5 + %s474]]
          %s476 = smul.addr %s475, 16
          %s477 = scalar_lea.hbm %s1, %s476
          %s478 = scalar_lea.vmem [#allocation2], 23
          %s479 = scalar_lea.sflag [#allocation3], 23
          // Predicated region
          $region109: #{tpu_custom_call.1} parent=15 // pred_check
            _
          $region110: #{tpu_custom_call.1} parent=15 // pred_check_branch
            %481 = sbr.rel target = $region112
          $region111: #{tpu_custom_call.1} parent=15 // pred_region
            %482 = sst [smem:[#allocation10]] [#allocation57]
            %483 = sst [smem:[#allocation11]] [#allocation56]
          $region112: #{tpu_custom_call.1} parent=15 // pred_fallthru
            _
          %485 = shalt.err (0)
          %s487 = sshll.u32 %s478, 4
          %s488 = int_to_ptr.vmem [resolvable:$true] %s487
          %490 = dma.hbm_to_vmem [thread:$0]  %s477, 16, %s488, %s479
          %s491 = sadd.s32 %s85, 24
          %s492 = sld [smem:[#allocation5 + %s491]]
          %s493 = smul.addr %s492, 16
          %s494 = scalar_lea.hbm %s1, %s493
          %s495 = scalar_lea.vmem [#allocation2], 24
          %s496 = scalar_lea.sflag [#allocation3], 24
          // Predicated region
          $region113: #{tpu_custom_call.1} parent=15 // pred_check
            _
          $region114: #{tpu_custom_call.1} parent=15 // pred_check_branch
            %498 = sbr.rel target = $region116
          $region115: #{tpu_custom_call.1} parent=15 // pred_region
            %499 = sst [smem:[#allocation10]] [#allocation59]
            %500 = sst [smem:[#allocation11]] [#allocation58]
          $region116: #{tpu_custom_call.1} parent=15 // pred_fallthru
            _
          %502 = shalt.err (0)
          %s504 = sshll.u32 %s495, 4
          %s505 = int_to_ptr.vmem [resolvable:$true] %s504
          %507 = dma.hbm_to_vmem [thread:$0]  %s494, 16, %s505, %s496
          %s508 = sadd.s32 %s85, 25
          %s509 = sld [smem:[#allocation5 + %s508]]
          %s510 = smul.addr %s509, 16
          %s511 = scalar_lea.hbm %s1, %s510
          %s512 = scalar_lea.vmem [#allocation2], 25
          %s513 = scalar_lea.sflag [#allocation3], 25
          // Predicated region
          $region117: #{tpu_custom_call.1} parent=15 // pred_check
            _
          $region118: #{tpu_custom_call.1} parent=15 // pred_check_branch
            %515 = sbr.rel target = $region120
          $region119: #{tpu_custom_call.1} parent=15 // pred_region
            %516 = sst [smem:[#allocation10]] [#allocation61]
            %517 = sst [smem:[#allocation11]] [#allocation60]
          $region120: #{tpu_custom_call.1} parent=15 // pred_fallthru
            _
          %519 = shalt.err (0)
          %s521 = sshll.u32 %s512, 4
          %s522 = int_to_ptr.vmem [resolvable:$true] %s521
          %524 = dma.hbm_to_vmem [thread:$0]  %s511, 16, %s522, %s513
          %s525 = sadd.s32 %s85, 26
          %s526 = sld [smem:[#allocation5 + %s525]]
          %s527 = smul.addr %s526, 16
          %s528 = scalar_lea.hbm %s1, %s527
          %s529 = scalar_lea.vmem [#allocation2], 26
          %s530 = scalar_lea.sflag [#allocation3], 26
          // Predicated region
          $region121: #{tpu_custom_call.1} parent=15 // pred_check
            _
          $region122: #{tpu_custom_call.1} parent=15 // pred_check_branch
            %532 = sbr.rel target = $region124
          $region123: #{tpu_custom_call.1} parent=15 // pred_region
            %533 = sst [smem:[#allocation10]] [#allocation63]
            %534 = sst [smem:[#allocation11]] [#allocation62]
          $region124: #{tpu_custom_call.1} parent=15 // pred_fallthru
            _
          %536 = shalt.err (0)
          %s538 = sshll.u32 %s529, 4
          %s539 = int_to_ptr.vmem [resolvable:$true] %s538
          %541 = dma.hbm_to_vmem [thread:$0]  %s528, 16, %s539, %s530
          %s542 = sadd.s32 %s85, 27
          %s543 = sld [smem:[#allocation5 + %s542]]
          %s544 = smul.addr %s543, 16
          %s545 = scalar_lea.hbm %s1, %s544
          %s546 = scalar_lea.vmem [#allocation2], 27
          %s547 = scalar_lea.sflag [#allocation3], 27
          // Predicated region
          $region125: #{tpu_custom_call.1} parent=15 // pred_check
            _
          $region126: #{tpu_custom_call.1} parent=15 // pred_check_branch
            %549 = sbr.rel target = $region128
          $region127: #{tpu_custom_call.1} parent=15 // pred_region
            %550 = sst [smem:[#allocation10]] [#allocation65]
            %551 = sst [smem:[#allocation11]] [#allocation64]
          $region128: #{tpu_custom_call.1} parent=15 // pred_fallthru
            _
          %553 = shalt.err (0)
          %s555 = sshll.u32 %s546, 4
          %s556 = int_to_ptr.vmem [resolvable:$true] %s555
          %558 = dma.hbm_to_vmem [thread:$0]  %s545, 16, %s556, %s547
          %s559 = sadd.s32 %s85, 28
          %s560 = sld [smem:[#allocation5 + %s559]]
          %s561 = smul.addr %s560, 16
          %s562 = scalar_lea.hbm %s1, %s561
          %s563 = scalar_lea.vmem [#allocation2], 28
          %s564 = scalar_lea.sflag [#allocation3], 28
          // Predicated region
          $region129: #{tpu_custom_call.1} parent=15 // pred_check
            _
          $region130: #{tpu_custom_call.1} parent=15 // pred_check_branch
            %566 = sbr.rel target = $region132
          $region131: #{tpu_custom_call.1} parent=15 // pred_region
            %567 = sst [smem:[#allocation10]] [#allocation67]
            %568 = sst [smem:[#allocation11]] [#allocation66]
          $region132: #{tpu_custom_call.1} parent=15 // pred_fallthru
            _
          %570 = shalt.err (0)
          %s572 = sshll.u32 %s563, 4
          %s573 = int_to_ptr.vmem [resolvable:$true] %s572
          %575 = dma.hbm_to_vmem [thread:$0]  %s562, 16, %s573, %s564
          %s576 = sadd.s32 %s85, 29
          %s577 = sld [smem:[#allocation5 + %s576]]
          %s578 = smul.addr %s577, 16
          %s579 = scalar_lea.hbm %s1, %s578
          %s580 = scalar_lea.vmem [#allocation2], 29
          %s581 = scalar_lea.sflag [#allocation3], 29
          // Predicated region
          $region133: #{tpu_custom_call.1} parent=15 // pred_check
            _
          $region134: #{tpu_custom_call.1} parent=15 // pred_check_branch
            %583 = sbr.rel target = $region136
          $region135: #{tpu_custom_call.1} parent=15 // pred_region
            %584 = sst [smem:[#allocation10]] [#allocation69]
            %585 = sst [smem:[#allocation11]] [#allocation68]
          $region136: #{tpu_custom_call.1} parent=15 // pred_fallthru
            _
          %587 = shalt.err (0)
          %s589 = sshll.u32 %s580, 4
          %s590 = int_to_ptr.vmem [resolvable:$true] %s589
          %592 = dma.hbm_to_vmem [thread:$0]  %s579, 16, %s590, %s581
          %s593 = sadd.s32 %s85, 30
          %s594 = sld [smem:[#allocation5 + %s593]]
          %s595 = smul.addr %s594, 16
          %s596 = scalar_lea.hbm %s1, %s595
          %s597 = scalar_lea.vmem [#allocation2], 30
          %s598 = scalar_lea.sflag [#allocation3], 30
          // Predicated region
          $region137: #{tpu_custom_call.1} parent=15 // pred_check
            _
          $region138: #{tpu_custom_call.1} parent=15 // pred_check_branch
            %600 = sbr.rel target = $region140
          $region139: #{tpu_custom_call.1} parent=15 // pred_region
            %601 = sst [smem:[#allocation10]] [#allocation71]
            %602 = sst [smem:[#allocation11]] [#allocation70]
          $region140: #{tpu_custom_call.1} parent=15 // pred_fallthru
            _
          %604 = shalt.err (0)
          %s606 = sshll.u32 %s597, 4
          %s607 = int_to_ptr.vmem [resolvable:$true] %s606
          %609 = dma.hbm_to_vmem [thread:$0]  %s596, 16, %s607, %s598
          %s610 = sadd.s32 %s85, 31
          %s611 = sld [smem:[#allocation5 + %s610]]
          %s612 = smul.addr %s611, 16
          %s613 = scalar_lea.hbm %s1, %s612
          %s614 = scalar_lea.vmem [#allocation2], 31
          %s615 = scalar_lea.sflag [#allocation3], 31
          // Predicated region
          $region141: #{tpu_custom_call.1} parent=15 // pred_check
            _
          $region142: #{tpu_custom_call.1} parent=15 // pred_check_branch
            %617 = sbr.rel target = $region144
          $region143: #{tpu_custom_call.1} parent=15 // pred_region
            %618 = sst [smem:[#allocation10]] [#allocation73]
            %619 = sst [smem:[#allocation11]] [#allocation72]
          $region144: #{tpu_custom_call.1} parent=15 // pred_fallthru
            _
          %621 = shalt.err (0)
          %s623 = sshll.u32 %s614, 4
          %s624 = int_to_ptr.vmem [resolvable:$true] %s623
          %626 = dma.hbm_to_vmem [thread:$0]  %s613, 16, %s624, %s615
        $region16: #{tpu_custom_call.1} parent=11 // pred_fallthru
          _
        %s627 = sadd.s32 %s22, 1
        %p628 = scmp.lt.s32.totalorder %s627, 3
        // Predicated region
        $region145: #{tpu_custom_call.1} parent=11 // pred_check
          %p629 = pneg %p628
        $region146: #{tpu_custom_call.1} parent=11 // pred_check_branch
          %631 = sbr.rel (%p629) target = $region148
        $region147: #{tpu_custom_call.1} parent=11 // pred_region
          %s632 = ssub.s32 1, %s80
          %s633 = smul.u32 %s21, 3
          %s634 = sadd.s32 %s633, %s627
          %s635 = smul.u32 %s634, 32
          %s636 = sld [smem:[#allocation5 + %s635]]
          %s637 = smul.addr %s636, 16
          %s638 = scalar_lea.hbm %s1, %s637
          %s639 = smul.u32 %s632, 32
          %s640 = scalar_lea.vmem [#allocation2], %s639
          %s641 = scalar_lea.sflag [#allocation3], %s639
          // Predicated region
          $region149: #{tpu_custom_call.1} parent=147 // pred_check
            _
          $region150: #{tpu_custom_call.1} parent=147 // pred_check_branch
            %643 = sbr.rel target = $region152
          $region151: #{tpu_custom_call.1} parent=147 // pred_region
            %644 = sst [smem:[#allocation10]] [#allocation75]
            %645 = sst [smem:[#allocation11]] [#allocation74]
          $region152: #{tpu_custom_call.1} parent=147 // pred_fallthru
            _
          %647 = shalt.err (0)
          %s649 = sshll.u32 %s640, 4
          %s650 = int_to_ptr.vmem [resolvable:$true] %s649
          %652 = dma.hbm_to_vmem [thread:$0]  %s638, 16, %s650, %s641
          %s653 = sadd.s32 %s635, 1
          %s654 = sld [smem:[#allocation5 + %s653]]
          %s655 = smul.addr %s654, 16
          %s656 = scalar_lea.hbm %s1, %s655
          %s657 = sadd.s32 1, %s639
          %s658 = scalar_lea.vmem [#allocation2], %s657
          %s659 = scalar_lea.sflag [#allocation3], %s657
          // Predicated region
          $region153: #{tpu_custom_call.1} parent=147 // pred_check
            _
          $region154: #{tpu_custom_call.1} parent=147 // pred_check_branch
            %661 = sbr.rel target = $region156
          $region155: #{tpu_custom_call.1} parent=147 // pred_region
            %662 = sst [smem:[#allocation10]] [#allocation77]
            %663 = sst [smem:[#allocation11]] [#allocation76]
          $region156: #{tpu_custom_call.1} parent=147 // pred_fallthru
            _
          %665 = shalt.err (0)
          %s667 = sshll.u32 %s658, 4
          %s668 = int_to_ptr.vmem [resolvable:$true] %s667
          %670 = dma.hbm_to_vmem [thread:$0]  %s656, 16, %s668, %s659
          %s671 = sadd.s32 %s635, 2
          %s672 = sld [smem:[#allocation5 + %s671]]
          %s673 = smul.addr %s672, 16
          %s674 = scalar_lea.hbm %s1, %s673
          %s675 = sadd.s32 2, %s639
          %s676 = scalar_lea.vmem [#allocation2], %s675
          %s677 = scalar_lea.sflag [#allocation3], %s675
          // Predicated region
          $region157: #{tpu_custom_call.1} parent=147 // pred_check
            _
          $region158: #{tpu_custom_call.1} parent=147 // pred_check_branch
            %679 = sbr.rel target = $region160
          $region159: #{tpu_custom_call.1} parent=147 // pred_region
            %680 = sst [smem:[#allocation10]] [#allocation79]
            %681 = sst [smem:[#allocation11]] [#allocation78]
          $region160: #{tpu_custom_call.1} parent=147 // pred_fallthru
            _
          %683 = shalt.err (0)
          %s685 = sshll.u32 %s676, 4
          %s686 = int_to_ptr.vmem [resolvable:$true] %s685
          %688 = dma.hbm_to_vmem [thread:$0]  %s674, 16, %s686, %s677
          %s689 = sadd.s32 %s635, 3
          %s690 = sld [smem:[#allocation5 + %s689]]
          %s691 = smul.addr %s690, 16
          %s692 = scalar_lea.hbm %s1, %s691
          %s693 = sadd.s32 3, %s639
          %s694 = scalar_lea.vmem [#allocation2], %s693
          %s695 = scalar_lea.sflag [#allocation3], %s693
          // Predicated region
          $region161: #{tpu_custom_call.1} parent=147 // pred_check
            _
          $region162: #{tpu_custom_call.1} parent=147 // pred_check_branch
            %697 = sbr.rel target = $region164
          $region163: #{tpu_custom_call.1} parent=147 // pred_region
            %698 = sst [smem:[#allocation10]] [#allocation81]
            %699 = sst [smem:[#allocation11]] [#allocation80]
          $region164: #{tpu_custom_call.1} parent=147 // pred_fallthru
            _
          %701 = shalt.err (0)
          %s703 = sshll.u32 %s694, 4
          %s704 = int_to_ptr.vmem [resolvable:$true] %s703
          %706 = dma.hbm_to_vmem [thread:$0]  %s692, 16, %s704, %s695
          %s707 = sadd.s32 %s635, 4
          %s708 = sld [smem:[#allocation5 + %s707]]
          %s709 = smul.addr %s708, 16
          %s710 = scalar_lea.hbm %s1, %s709
          %s711 = sadd.s32 4, %s639
          %s712 = scalar_lea.vmem [#allocation2], %s711
          %s713 = scalar_lea.sflag [#allocation3], %s711
          // Predicated region
          $region165: #{tpu_custom_call.1} parent=147 // pred_check
            _
          $region166: #{tpu_custom_call.1} parent=147 // pred_check_branch
            %715 = sbr.rel target = $region168
          $region167: #{tpu_custom_call.1} parent=147 // pred_region
            %716 = sst [smem:[#allocation10]] [#allocation83]
            %717 = sst [smem:[#allocation11]] [#allocation82]
          $region168: #{tpu_custom_call.1} parent=147 // pred_fallthru
            _
          %719 = shalt.err (0)
          %s721 = sshll.u32 %s712, 4
          %s722 = int_to_ptr.vmem [resolvable:$true] %s721
          %724 = dma.hbm_to_vmem [thread:$0]  %s710, 16, %s722, %s713
          %s725 = sadd.s32 %s635, 5
          %s726 = sld [smem:[#allocation5 + %s725]]
          %s727 = smul.addr %s726, 16
          %s728 = scalar_lea.hbm %s1, %s727
          %s729 = sadd.s32 5, %s639
          %s730 = scalar_lea.vmem [#allocation2], %s729
          %s731 = scalar_lea.sflag [#allocation3], %s729
          // Predicated region
          $region169: #{tpu_custom_call.1} parent=147 // pred_check
            _
          $region170: #{tpu_custom_call.1} parent=147 // pred_check_branch
            %733 = sbr.rel target = $region172
          $region171: #{tpu_custom_call.1} parent=147 // pred_region
            %734 = sst [smem:[#allocation10]] [#allocation85]
            %735 = sst [smem:[#allocation11]] [#allocation84]
          $region172: #{tpu_custom_call.1} parent=147 // pred_fallthru
            _
          %737 = shalt.err (0)
          %s739 = sshll.u32 %s730, 4
          %s740 = int_to_ptr.vmem [resolvable:$true] %s739
          %742 = dma.hbm_to_vmem [thread:$0]  %s728, 16, %s740, %s731
          %s743 = sadd.s32 %s635, 6
          %s744 = sld [smem:[#allocation5 + %s743]]
          %s745 = smul.addr %s744, 16
          %s746 = scalar_lea.hbm %s1, %s745
          %s747 = sadd.s32 6, %s639
          %s748 = scalar_lea.vmem [#allocation2], %s747
          %s749 = scalar_lea.sflag [#allocation3], %s747
          // Predicated region
          $region173: #{tpu_custom_call.1} parent=147 // pred_check
            _
          $region174: #{tpu_custom_call.1} parent=147 // pred_check_branch
            %751 = sbr.rel target = $region176
          $region175: #{tpu_custom_call.1} parent=147 // pred_region
            %752 = sst [smem:[#allocation10]] [#allocation87]
            %753 = sst [smem:[#allocation11]] [#allocation86]
          $region176: #{tpu_custom_call.1} parent=147 // pred_fallthru
            _
          %755 = shalt.err (0)
          %s757 = sshll.u32 %s748, 4
          %s758 = int_to_ptr.vmem [resolvable:$true] %s757
          %760 = dma.hbm_to_vmem [thread:$0]  %s746, 16, %s758, %s749
          %s761 = sadd.s32 %s635, 7
          %s762 = sld [smem:[#allocation5 + %s761]]
          %s763 = smul.addr %s762, 16
          %s764 = scalar_lea.hbm %s1, %s763
          %s765 = sadd.s32 7, %s639
          %s766 = scalar_lea.vmem [#allocation2], %s765
          %s767 = scalar_lea.sflag [#allocation3], %s765
          // Predicated region
          $region177: #{tpu_custom_call.1} parent=147 // pred_check
            _
          $region178: #{tpu_custom_call.1} parent=147 // pred_check_branch
            %769 = sbr.rel target = $region180
          $region179: #{tpu_custom_call.1} parent=147 // pred_region
            %770 = sst [smem:[#allocation10]] [#allocation89]
            %771 = sst [smem:[#allocation11]] [#allocation88]
          $region180: #{tpu_custom_call.1} parent=147 // pred_fallthru
            _
          %773 = shalt.err (0)
          %s775 = sshll.u32 %s766, 4
          %s776 = int_to_ptr.vmem [resolvable:$true] %s775
          %778 = dma.hbm_to_vmem [thread:$0]  %s764, 16, %s776, %s767
          %s779 = sadd.s32 %s635, 8
          %s780 = sld [smem:[#allocation5 + %s779]]
          %s781 = smul.addr %s780, 16
          %s782 = scalar_lea.hbm %s1, %s781
          %s783 = sadd.s32 8, %s639
          %s784 = scalar_lea.vmem [#allocation2], %s783
          %s785 = scalar_lea.sflag [#allocation3], %s783
          // Predicated region
          $region181: #{tpu_custom_call.1} parent=147 // pred_check
            _
          $region182: #{tpu_custom_call.1} parent=147 // pred_check_branch
            %787 = sbr.rel target = $region184
          $region183: #{tpu_custom_call.1} parent=147 // pred_region
            %788 = sst [smem:[#allocation10]] [#allocation91]
            %789 = sst [smem:[#allocation11]] [#allocation90]
          $region184: #{tpu_custom_call.1} parent=147 // pred_fallthru
            _
          %791 = shalt.err (0)
          %s793 = sshll.u32 %s784, 4
          %s794 = int_to_ptr.vmem [resolvable:$true] %s793
          %796 = dma.hbm_to_vmem [thread:$0]  %s782, 16, %s794, %s785
          %s797 = sadd.s32 %s635, 9
          %s798 = sld [smem:[#allocation5 + %s797]]
          %s799 = smul.addr %s798, 16
          %s800 = scalar_lea.hbm %s1, %s799
          %s801 = sadd.s32 9, %s639
          %s802 = scalar_lea.vmem [#allocation2], %s801
          %s803 = scalar_lea.sflag [#allocation3], %s801
          // Predicated region
          $region185: #{tpu_custom_call.1} parent=147 // pred_check
            _
          $region186: #{tpu_custom_call.1} parent=147 // pred_check_branch
            %805 = sbr.rel target = $region188
          $region187: #{tpu_custom_call.1} parent=147 // pred_region
            %806 = sst [smem:[#allocation10]] [#allocation93]
            %807 = sst [smem:[#allocation11]] [#allocation92]
          $region188: #{tpu_custom_call.1} parent=147 // pred_fallthru
            _
          %809 = shalt.err (0)
          %s811 = sshll.u32 %s802, 4
          %s812 = int_to_ptr.vmem [resolvable:$true] %s811
          %814 = dma.hbm_to_vmem [thread:$0]  %s800, 16, %s812, %s803
          %s815 = sadd.s32 %s635, 10
          %s816 = sld [smem:[#allocation5 + %s815]]
          %s817 = smul.addr %s816, 16
          %s818 = scalar_lea.hbm %s1, %s817
          %s819 = sadd.s32 10, %s639
          %s820 = scalar_lea.vmem [#allocation2], %s819
          %s821 = scalar_lea.sflag [#allocation3], %s819
          // Predicated region
          $region189: #{tpu_custom_call.1} parent=147 // pred_check
            _
          $region190: #{tpu_custom_call.1} parent=147 // pred_check_branch
            %823 = sbr.rel target = $region192
          $region191: #{tpu_custom_call.1} parent=147 // pred_region
            %824 = sst [smem:[#allocation10]] [#allocation95]
            %825 = sst [smem:[#allocation11]] [#allocation94]
          $region192: #{tpu_custom_call.1} parent=147 // pred_fallthru
            _
          %827 = shalt.err (0)
          %s829 = sshll.u32 %s820, 4
          %s830 = int_to_ptr.vmem [resolvable:$true] %s829
          %832 = dma.hbm_to_vmem [thread:$0]  %s818, 16, %s830, %s821
          %s833 = sadd.s32 %s635, 11
          %s834 = sld [smem:[#allocation5 + %s833]]
          %s835 = smul.addr %s834, 16
          %s836 = scalar_lea.hbm %s1, %s835
          %s837 = sadd.s32 11, %s639
          %s838 = scalar_lea.vmem [#allocation2], %s837
          %s839 = scalar_lea.sflag [#allocation3], %s837
          // Predicated region
          $region193: #{tpu_custom_call.1} parent=147 // pred_check
            _
          $region194: #{tpu_custom_call.1} parent=147 // pred_check_branch
            %841 = sbr.rel target = $region196
          $region195: #{tpu_custom_call.1} parent=147 // pred_region
            %842 = sst [smem:[#allocation10]] [#allocation97]
            %843 = sst [smem:[#allocation11]] [#allocation96]
          $region196: #{tpu_custom_call.1} parent=147 // pred_fallthru
            _
          %845 = shalt.err (0)
          %s847 = sshll.u32 %s838, 4
          %s848 = int_to_ptr.vmem [resolvable:$true] %s847
          %850 = dma.hbm_to_vmem [thread:$0]  %s836, 16, %s848, %s839
          %s851 = sadd.s32 %s635, 12
          %s852 = sld [smem:[#allocation5 + %s851]]
          %s853 = smul.addr %s852, 16
          %s854 = scalar_lea.hbm %s1, %s853
          %s855 = sadd.s32 12, %s639
          %s856 = scalar_lea.vmem [#allocation2], %s855
          %s857 = scalar_lea.sflag [#allocation3], %s855
          // Predicated region
          $region197: #{tpu_custom_call.1} parent=147 // pred_check
            _
          $region198: #{tpu_custom_call.1} parent=147 // pred_check_branch
            %859 = sbr.rel target = $region200
          $region199: #{tpu_custom_call.1} parent=147 // pred_region
            %860 = sst [smem:[#allocation10]] [#allocation99]
            %861 = sst [smem:[#allocation11]] [#allocation98]
          $region200: #{tpu_custom_call.1} parent=147 // pred_fallthru
            _
          %863 = shalt.err (0)
          %s865 = sshll.u32 %s856, 4
          %s866 = int_to_ptr.vmem [resolvable:$true] %s865
          %868 = dma.hbm_to_vmem [thread:$0]  %s854, 16, %s866, %s857
          %s869 = sadd.s32 %s635, 13
          %s870 = sld [smem:[#allocation5 + %s869]]
          %s871 = smul.addr %s870, 16
          %s872 = scalar_lea.hbm %s1, %s871
          %s873 = sadd.s32 13, %s639
          %s874 = scalar_lea.vmem [#allocation2], %s873
          %s875 = scalar_lea.sflag [#allocation3], %s873
          // Predicated region
          $region201: #{tpu_custom_call.1} parent=147 // pred_check
            _
          $region202: #{tpu_custom_call.1} parent=147 // pred_check_branch
            %877 = sbr.rel target = $region204
          $region203: #{tpu_custom_call.1} parent=147 // pred_region
            %878 = sst [smem:[#allocation10]] [#allocation101]
            %879 = sst [smem:[#allocation11]] [#allocation100]
          $region204: #{tpu_custom_call.1} parent=147 // pred_fallthru
            _
          %881 = shalt.err (0)
          %s883 = sshll.u32 %s874, 4
          %s884 = int_to_ptr.vmem [resolvable:$true] %s883
          %886 = dma.hbm_to_vmem [thread:$0]  %s872, 16, %s884, %s875
          %s887 = sadd.s32 %s635, 14
          %s888 = sld [smem:[#allocation5 + %s887]]
          %s889 = smul.addr %s888, 16
          %s890 = scalar_lea.hbm %s1, %s889
          %s891 = sadd.s32 14, %s639
          %s892 = scalar_lea.vmem [#allocation2], %s891
          %s893 = scalar_lea.sflag [#allocation3], %s891
          // Predicated region
          $region205: #{tpu_custom_call.1} parent=147 // pred_check
            _
          $region206: #{tpu_custom_call.1} parent=147 // pred_check_branch
            %895 = sbr.rel target = $region208
          $region207: #{tpu_custom_call.1} parent=147 // pred_region
            %896 = sst [smem:[#allocation10]] [#allocation103]
            %897 = sst [smem:[#allocation11]] [#allocation102]
          $region208: #{tpu_custom_call.1} parent=147 // pred_fallthru
            _
          %899 = shalt.err (0)
          %s901 = sshll.u32 %s892, 4
          %s902 = int_to_ptr.vmem [resolvable:$true] %s901
          %904 = dma.hbm_to_vmem [thread:$0]  %s890, 16, %s902, %s893
          %s905 = sadd.s32 %s635, 15
          %s906 = sld [smem:[#allocation5 + %s905]]
          %s907 = smul.addr %s906, 16
          %s908 = scalar_lea.hbm %s1, %s907
          %s909 = sadd.s32 15, %s639
          %s910 = scalar_lea.vmem [#allocation2], %s909
          %s911 = scalar_lea.sflag [#allocation3], %s909
          // Predicated region
          $region209: #{tpu_custom_call.1} parent=147 // pred_check
            _
          $region210: #{tpu_custom_call.1} parent=147 // pred_check_branch
            %913 = sbr.rel target = $region212
          $region211: #{tpu_custom_call.1} parent=147 // pred_region
            %914 = sst [smem:[#allocation10]] [#allocation105]
            %915 = sst [smem:[#allocation11]] [#allocation104]
          $region212: #{tpu_custom_call.1} parent=147 // pred_fallthru
            _
          %917 = shalt.err (0)
          %s919 = sshll.u32 %s910, 4
          %s920 = int_to_ptr.vmem [resolvable:$true] %s919
          %922 = dma.hbm_to_vmem [thread:$0]  %s908, 16, %s920, %s911
          %s923 = sadd.s32 %s635, 16
          %s924 = sld [smem:[#allocation5 + %s923]]
          %s925 = smul.addr %s924, 16
          %s926 = scalar_lea.hbm %s1, %s925
          %s927 = sadd.s32 16, %s639
          %s928 = scalar_lea.vmem [#allocation2], %s927
          %s929 = scalar_lea.sflag [#allocation3], %s927
          // Predicated region
          $region213: #{tpu_custom_call.1} parent=147 // pred_check
            _
          $region214: #{tpu_custom_call.1} parent=147 // pred_check_branch
            %931 = sbr.rel target = $region216
          $region215: #{tpu_custom_call.1} parent=147 // pred_region
            %932 = sst [smem:[#allocation10]] [#allocation107]
            %933 = sst [smem:[#allocation11]] [#allocation106]
          $region216: #{tpu_custom_call.1} parent=147 // pred_fallthru
            _
          %935 = shalt.err (0)
          %s937 = sshll.u32 %s928, 4
          %s938 = int_to_ptr.vmem [resolvable:$true] %s937
          %940 = dma.hbm_to_vmem [thread:$0]  %s926, 16, %s938, %s929
          %s941 = sadd.s32 %s635, 17
          %s942 = sld [smem:[#allocation5 + %s941]]
          %s943 = smul.addr %s942, 16
          %s944 = scalar_lea.hbm %s1, %s943
          %s945 = sadd.s32 17, %s639
          %s946 = scalar_lea.vmem [#allocation2], %s945
          %s947 = scalar_lea.sflag [#allocation3], %s945
          // Predicated region
          $region217: #{tpu_custom_call.1} parent=147 // pred_check
            _
          $region218: #{tpu_custom_call.1} parent=147 // pred_check_branch
            %949 = sbr.rel target = $region220
          $region219: #{tpu_custom_call.1} parent=147 // pred_region
            %950 = sst [smem:[#allocation10]] [#allocation109]
            %951 = sst [smem:[#allocation11]] [#allocation108]
          $region220: #{tpu_custom_call.1} parent=147 // pred_fallthru
            _
          %953 = shalt.err (0)
          %s955 = sshll.u32 %s946, 4
          %s956 = int_to_ptr.vmem [resolvable:$true] %s955
          %958 = dma.hbm_to_vmem [thread:$0]  %s944, 16, %s956, %s947
          %s959 = sadd.s32 %s635, 18
          %s960 = sld [smem:[#allocation5 + %s959]]
          %s961 = smul.addr %s960, 16
          %s962 = scalar_lea.hbm %s1, %s961
          %s963 = sadd.s32 18, %s639
          %s964 = scalar_lea.vmem [#allocation2], %s963
          %s965 = scalar_lea.sflag [#allocation3], %s963
          // Predicated region
          $region221: #{tpu_custom_call.1} parent=147 // pred_check
            _
          $region222: #{tpu_custom_call.1} parent=147 // pred_check_branch
            %967 = sbr.rel target = $region224
          $region223: #{tpu_custom_call.1} parent=147 // pred_region
            %968 = sst [smem:[#allocation10]] [#allocation111]
            %969 = sst [smem:[#allocation11]] [#allocation110]
          $region224: #{tpu_custom_call.1} parent=147 // pred_fallthru
            _
          %971 = shalt.err (0)
          %s973 = sshll.u32 %s964, 4
          %s974 = int_to_ptr.vmem [resolvable:$true] %s973
          %976 = dma.hbm_to_vmem [thread:$0]  %s962, 16, %s974, %s965
          %s977 = sadd.s32 %s635, 19
          %s978 = sld [smem:[#allocation5 + %s977]]
          %s979 = smul.addr %s978, 16
          %s980 = scalar_lea.hbm %s1, %s979
          %s981 = sadd.s32 19, %s639
          %s982 = scalar_lea.vmem [#allocation2], %s981
          %s983 = scalar_lea.sflag [#allocation3], %s981
          // Predicated region
          $region225: #{tpu_custom_call.1} parent=147 // pred_check
            _
          $region226: #{tpu_custom_call.1} parent=147 // pred_check_branch
            %985 = sbr.rel target = $region228
          $region227: #{tpu_custom_call.1} parent=147 // pred_region
            %986 = sst [smem:[#allocation10]] [#allocation113]
            %987 = sst [smem:[#allocation11]] [#allocation112]
          $region228: #{tpu_custom_call.1} parent=147 // pred_fallthru
            _
          %989 = shalt.err (0)
          %s991 = sshll.u32 %s982, 4
          %s992 = int_to_ptr.vmem [resolvable:$true] %s991
          %994 = dma.hbm_to_vmem [thread:$0]  %s980, 16, %s992, %s983
          %s995 = sadd.s32 %s635, 20
          %s996 = sld [smem:[#allocation5 + %s995]]
          %s997 = smul.addr %s996, 16
          %s998 = scalar_lea.hbm %s1, %s997
          %s999 = sadd.s32 20, %s639
          %s1000 = scalar_lea.vmem [#allocation2], %s999
          %s1001 = scalar_lea.sflag [#allocation3], %s999
          // Predicated region
          $region229: #{tpu_custom_call.1} parent=147 // pred_check
            _
          $region230: #{tpu_custom_call.1} parent=147 // pred_check_branch
            %1003 = sbr.rel target = $region232
          $region231: #{tpu_custom_call.1} parent=147 // pred_region
            %1004 = sst [smem:[#allocation10]] [#allocation115]
            %1005 = sst [smem:[#allocation11]] [#allocation114]
          $region232: #{tpu_custom_call.1} parent=147 // pred_fallthru
            _
          %1007 = shalt.err (0)
          %s1009 = sshll.u32 %s1000, 4
          %s1010 = int_to_ptr.vmem [resolvable:$true] %s1009
          %1012 = dma.hbm_to_vmem [thread:$0]  %s998, 16, %s1010, %s1001
          %s1013 = sadd.s32 %s635, 21
          %s1014 = sld [smem:[#allocation5 + %s1013]]
          %s1015 = smul.addr %s1014, 16
          %s1016 = scalar_lea.hbm %s1, %s1015
          %s1017 = sadd.s32 21, %s639
          %s1018 = scalar_lea.vmem [#allocation2], %s1017
          %s1019 = scalar_lea.sflag [#allocation3], %s1017
          // Predicated region
          $region233: #{tpu_custom_call.1} parent=147 // pred_check
            _
          $region234: #{tpu_custom_call.1} parent=147 // pred_check_branch
            %1021 = sbr.rel target = $region236
          $region235: #{tpu_custom_call.1} parent=147 // pred_region
            %1022 = sst [smem:[#allocation10]] [#allocation117]
            %1023 = sst [smem:[#allocation11]] [#allocation116]
          $region236: #{tpu_custom_call.1} parent=147 // pred_fallthru
            _
          %1025 = shalt.err (0)
          %s1027 = sshll.u32 %s1018, 4
          %s1028 = int_to_ptr.vmem [resolvable:$true] %s1027
          %1030 = dma.hbm_to_vmem [thread:$0]  %s1016, 16, %s1028, %s1019
          %s1031 = sadd.s32 %s635, 22
          %s1032 = sld [smem:[#allocation5 + %s1031]]
          %s1033 = smul.addr %s1032, 16
          %s1034 = scalar_lea.hbm %s1, %s1033
          %s1035 = sadd.s32 22, %s639
          %s1036 = scalar_lea.vmem [#allocation2], %s1035
          %s1037 = scalar_lea.sflag [#allocation3], %s1035
          // Predicated region
          $region237: #{tpu_custom_call.1} parent=147 // pred_check
            _
          $region238: #{tpu_custom_call.1} parent=147 // pred_check_branch
            %1039 = sbr.rel target = $region240
          $region239: #{tpu_custom_call.1} parent=147 // pred_region
            %1040 = sst [smem:[#allocation10]] [#allocation119]
            %1041 = sst [smem:[#allocation11]] [#allocation118]
          $region240: #{tpu_custom_call.1} parent=147 // pred_fallthru
            _
          %1043 = shalt.err (0)
          %s1045 = sshll.u32 %s1036, 4
          %s1046 = int_to_ptr.vmem [resolvable:$true] %s1045
          %1048 = dma.hbm_to_vmem [thread:$0]  %s1034, 16, %s1046, %s1037
          %s1049 = sadd.s32 %s635, 23
          %s1050 = sld [smem:[#allocation5 + %s1049]]
          %s1051 = smul.addr %s1050, 16
          %s1052 = scalar_lea.hbm %s1, %s1051
          %s1053 = sadd.s32 23, %s639
          %s1054 = scalar_lea.vmem [#allocation2], %s1053
          %s1055 = scalar_lea.sflag [#allocation3], %s1053
          // Predicated region
          $region241: #{tpu_custom_call.1} parent=147 // pred_check
            _
          $region242: #{tpu_custom_call.1} parent=147 // pred_check_branch
            %1057 = sbr.rel target = $region244
          $region243: #{tpu_custom_call.1} parent=147 // pred_region
            %1058 = sst [smem:[#allocation10]] [#allocation121]
            %1059 = sst [smem:[#allocation11]] [#allocation120]
          $region244: #{tpu_custom_call.1} parent=147 // pred_fallthru
            _
          %1061 = shalt.err (0)
          %s1063 = sshll.u32 %s1054, 4
          %s1064 = int_to_ptr.vmem [resolvable:$true] %s1063
          %1066 = dma.hbm_to_vmem [thread:$0]  %s1052, 16, %s1064, %s1055
          %s1067 = sadd.s32 %s635, 24
          %s1068 = sld [smem:[#allocation5 + %s1067]]
          %s1069 = smul.addr %s1068, 16
          %s1070 = scalar_lea.hbm %s1, %s1069
          %s1071 = sadd.s32 24, %s639
          %s1072 = scalar_lea.vmem [#allocation2], %s1071
          %s1073 = scalar_lea.sflag [#allocation3], %s1071
          // Predicated region
          $region245: #{tpu_custom_call.1} parent=147 // pred_check
            _
          $region246: #{tpu_custom_call.1} parent=147 // pred_check_branch
            %1075 = sbr.rel target = $region248
          $region247: #{tpu_custom_call.1} parent=147 // pred_region
            %1076 = sst [smem:[#allocation10]] [#allocation123]
            %1077 = sst [smem:[#allocation11]] [#allocation122]
          $region248: #{tpu_custom_call.1} parent=147 // pred_fallthru
            _
          %1079 = shalt.err (0)
          %s1081 = sshll.u32 %s1072, 4
          %s1082 = int_to_ptr.vmem [resolvable:$true] %s1081
          %1084 = dma.hbm_to_vmem [thread:$0]  %s1070, 16, %s1082, %s1073
          %s1085 = sadd.s32 %s635, 25
          %s1086 = sld [smem:[#allocation5 + %s1085]]
          %s1087 = smul.addr %s1086, 16
          %s1088 = scalar_lea.hbm %s1, %s1087
          %s1089 = sadd.s32 25, %s639
          %s1090 = scalar_lea.vmem [#allocation2], %s1089
          %s1091 = scalar_lea.sflag [#allocation3], %s1089
          // Predicated region
          $region249: #{tpu_custom_call.1} parent=147 // pred_check
            _
          $region250: #{tpu_custom_call.1} parent=147 // pred_check_branch
            %1093 = sbr.rel target = $region252
          $region251: #{tpu_custom_call.1} parent=147 // pred_region
            %1094 = sst [smem:[#allocation10]] [#allocation125]
            %1095 = sst [smem:[#allocation11]] [#allocation124]
          $region252: #{tpu_custom_call.1} parent=147 // pred_fallthru
            _
          %1097 = shalt.err (0)
          %s1099 = sshll.u32 %s1090, 4
          %s1100 = int_to_ptr.vmem [resolvable:$true] %s1099
          %1102 = dma.hbm_to_vmem [thread:$0]  %s1088, 16, %s1100, %s1091
          %s1103 = sadd.s32 %s635, 26
          %s1104 = sld [smem:[#allocation5 + %s1103]]
          %s1105 = smul.addr %s1104, 16
          %s1106 = scalar_lea.hbm %s1, %s1105
          %s1107 = sadd.s32 26, %s639
          %s1108 = scalar_lea.vmem [#allocation2], %s1107
          %s1109 = scalar_lea.sflag [#allocation3], %s1107
          // Predicated region
          $region253: #{tpu_custom_call.1} parent=147 // pred_check
            _
          $region254: #{tpu_custom_call.1} parent=147 // pred_check_branch
            %1111 = sbr.rel target = $region256
          $region255: #{tpu_custom_call.1} parent=147 // pred_region
            %1112 = sst [smem:[#allocation10]] [#allocation127]
            %1113 = sst [smem:[#allocation11]] [#allocation126]
          $region256: #{tpu_custom_call.1} parent=147 // pred_fallthru
            _
          %1115 = shalt.err (0)
          %s1117 = sshll.u32 %s1108, 4
          %s1118 = int_to_ptr.vmem [resolvable:$true] %s1117
          %1120 = dma.hbm_to_vmem [thread:$0]  %s1106, 16, %s1118, %s1109
          %s1121 = sadd.s32 %s635, 27
          %s1122 = sld [smem:[#allocation5 + %s1121]]
          %s1123 = smul.addr %s1122, 16
          %s1124 = scalar_lea.hbm %s1, %s1123
          %s1125 = sadd.s32 27, %s639
          %s1126 = scalar_lea.vmem [#allocation2], %s1125
          %s1127 = scalar_lea.sflag [#allocation3], %s1125
          // Predicated region
          $region257: #{tpu_custom_call.1} parent=147 // pred_check
            _
          $region258: #{tpu_custom_call.1} parent=147 // pred_check_branch
            %1129 = sbr.rel target = $region260
          $region259: #{tpu_custom_call.1} parent=147 // pred_region
            %1130 = sst [smem:[#allocation10]] [#allocation129]
            %1131 = sst [smem:[#allocation11]] [#allocation128]
          $region260: #{tpu_custom_call.1} parent=147 // pred_fallthru
            _
          %1133 = shalt.err (0)
          %s1135 = sshll.u32 %s1126, 4
          %s1136 = int_to_ptr.vmem [resolvable:$true] %s1135
          %1138 = dma.hbm_to_vmem [thread:$0]  %s1124, 16, %s1136, %s1127
          %s1139 = sadd.s32 %s635, 28
          %s1140 = sld [smem:[#allocation5 + %s1139]]
          %s1141 = smul.addr %s1140, 16
          %s1142 = scalar_lea.hbm %s1, %s1141
          %s1143 = sadd.s32 28, %s639
          %s1144 = scalar_lea.vmem [#allocation2], %s1143
          %s1145 = scalar_lea.sflag [#allocation3], %s1143
          // Predicated region
          $region261: #{tpu_custom_call.1} parent=147 // pred_check
            _
          $region262: #{tpu_custom_call.1} parent=147 // pred_check_branch
            %1147 = sbr.rel target = $region264
          $region263: #{tpu_custom_call.1} parent=147 // pred_region
            %1148 = sst [smem:[#allocation10]] [#allocation131]
            %1149 = sst [smem:[#allocation11]] [#allocation130]
          $region264: #{tpu_custom_call.1} parent=147 // pred_fallthru
            _
          %1151 = shalt.err (0)
          %s1153 = sshll.u32 %s1144, 4
          %s1154 = int_to_ptr.vmem [resolvable:$true] %s1153
          %1156 = dma.hbm_to_vmem [thread:$0]  %s1142, 16, %s1154, %s1145
          %s1157 = sadd.s32 %s635, 29
          %s1158 = sld [smem:[#allocation5 + %s1157]]
          %s1159 = smul.addr %s1158, 16
          %s1160 = scalar_lea.hbm %s1, %s1159
          %s1161 = sadd.s32 29, %s639
          %s1162 = scalar_lea.vmem [#allocation2], %s1161
          %s1163 = scalar_lea.sflag [#allocation3], %s1161
          // Predicated region
          $region265: #{tpu_custom_call.1} parent=147 // pred_check
            _
          $region266: #{tpu_custom_call.1} parent=147 // pred_check_branch
            %1165 = sbr.rel target = $region268
          $region267: #{tpu_custom_call.1} parent=147 // pred_region
            %1166 = sst [smem:[#allocation10]] [#allocation133]
            %1167 = sst [smem:[#allocation11]] [#allocation132]
          $region268: #{tpu_custom_call.1} parent=147 // pred_fallthru
            _
          %1169 = shalt.err (0)
          %s1171 = sshll.u32 %s1162, 4
          %s1172 = int_to_ptr.vmem [resolvable:$true] %s1171
          %1174 = dma.hbm_to_vmem [thread:$0]  %s1160, 16, %s1172, %s1163
          %s1175 = sadd.s32 %s635, 30
          %s1176 = sld [smem:[#allocation5 + %s1175]]
          %s1177 = smul.addr %s1176, 16
          %s1178 = scalar_lea.hbm %s1, %s1177
          %s1179 = sadd.s32 30, %s639
          %s1180 = scalar_lea.vmem [#allocation2], %s1179
          %s1181 = scalar_lea.sflag [#allocation3], %s1179
          // Predicated region
          $region269: #{tpu_custom_call.1} parent=147 // pred_check
            _
          $region270: #{tpu_custom_call.1} parent=147 // pred_check_branch
            %1183 = sbr.rel target = $region272
          $region271: #{tpu_custom_call.1} parent=147 // pred_region
            %1184 = sst [smem:[#allocation10]] [#allocation135]
            %1185 = sst [smem:[#allocation11]] [#allocation134]
          $region272: #{tpu_custom_call.1} parent=147 // pred_fallthru
            _
          %1187 = shalt.err (0)
          %s1189 = sshll.u32 %s1180, 4
          %s1190 = int_to_ptr.vmem [resolvable:$true] %s1189
          %1192 = dma.hbm_to_vmem [thread:$0]  %s1178, 16, %s1190, %s1181
          %s1193 = sadd.s32 %s635, 31
          %s1194 = sld [smem:[#allocation5 + %s1193]]
          %s1195 = smul.addr %s1194, 16
          %s1196 = scalar_lea.hbm %s1, %s1195
          %s1197 = sadd.s32 31, %s639
          %s1198 = scalar_lea.vmem [#allocation2], %s1197
          %s1199 = scalar_lea.sflag [#allocation3], %s1197
          // Predicated region
          $region273: #{tpu_custom_call.1} parent=147 // pred_check
            _
          $region274: #{tpu_custom_call.1} parent=147 // pred_check_branch
            %1201 = sbr.rel target = $region276
          $region275: #{tpu_custom_call.1} parent=147 // pred_region
            %1202 = sst [smem:[#allocation10]] [#allocation137]
            %1203 = sst [smem:[#allocation11]] [#allocation136]
          $region276: #{tpu_custom_call.1} parent=147 // pred_fallthru
            _
          %1205 = shalt.err (0)
          %s1207 = sshll.u32 %s1198, 4
          %s1208 = int_to_ptr.vmem [resolvable:$true] %s1207
          %1210 = dma.hbm_to_vmem [thread:$0]  %s1196, 16, %s1208, %s1199
        $region148: #{tpu_custom_call.1} parent=11 // pred_fallthru
          _
        %s1211 = smul.u32 %s80, 32
        %s1212 = scalar_lea.sflag [#allocation3], %s1211
        %1214 = dma.done %s1212, 16
        %s1215 = sadd.s32 1, %s1211
        %s1216 = scalar_lea.sflag [#allocation3], %s1215
        %1218 = dma.done %s1216, 16
        %s1219 = sadd.s32 2, %s1211
        %s1220 = scalar_lea.sflag [#allocation3], %s1219
        %1222 = dma.done %s1220, 16
        %s1223 = sadd.s32 3, %s1211
        %s1224 = scalar_lea.sflag [#allocation3], %s1223
        %1226 = dma.done %s1224, 16
        %s1227 = sadd.s32 4, %s1211
        %s1228 = scalar_lea.sflag [#allocation3], %s1227
        %1230 = dma.done %s1228, 16
        %s1231 = sadd.s32 5, %s1211
        %s1232 = scalar_lea.sflag [#allocation3], %s1231
        %1234 = dma.done %s1232, 16
        %s1235 = sadd.s32 6, %s1211
        %s1236 = scalar_lea.sflag [#allocation3], %s1235
        %1238 = dma.done %s1236, 16
        %s1239 = sadd.s32 7, %s1211
        %s1240 = scalar_lea.sflag [#allocation3], %s1239
        %1242 = dma.done %s1240, 16
        %s1243 = sadd.s32 8, %s1211
        %s1244 = scalar_lea.sflag [#allocation3], %s1243
        %1246 = dma.done %s1244, 16
        %s1247 = sadd.s32 9, %s1211
        %s1248 = scalar_lea.sflag [#allocation3], %s1247
        %1250 = dma.done %s1248, 16
        %s1251 = sadd.s32 10, %s1211
        %s1252 = scalar_lea.sflag [#allocation3], %s1251
        %1254 = dma.done %s1252, 16
        %s1255 = sadd.s32 11, %s1211
        %s1256 = scalar_lea.sflag [#allocation3], %s1255
        %1258 = dma.done %s1256, 16
        %s1259 = sadd.s32 12, %s1211
        %s1260 = scalar_lea.sflag [#allocation3], %s1259
        %1262 = dma.done %s1260, 16
        %s1263 = sadd.s32 13, %s1211
        %s1264 = scalar_lea.sflag [#allocation3], %s1263
        %1266 = dma.done %s1264, 16
        %s1267 = sadd.s32 14, %s1211
        %s1268 = scalar_lea.sflag [#allocation3], %s1267
        %1270 = dma.done %s1268, 16
        %s1271 = sadd.s32 15, %s1211
        %s1272 = scalar_lea.sflag [#allocation3], %s1271
        %1274 = dma.done %s1272, 16
        %s1275 = sadd.s32 16, %s1211
        %s1276 = scalar_lea.sflag [#allocation3], %s1275
        %1278 = dma.done %s1276, 16
        %s1279 = sadd.s32 17, %s1211
        %s1280 = scalar_lea.sflag [#allocation3], %s1279
        %1282 = dma.done %s1280, 16
        %s1283 = sadd.s32 18, %s1211
        %s1284 = scalar_lea.sflag [#allocation3], %s1283
        %1286 = dma.done %s1284, 16
        %s1287 = sadd.s32 19, %s1211
        %s1288 = scalar_lea.sflag [#allocation3], %s1287
        %1290 = dma.done %s1288, 16
        %s1291 = sadd.s32 20, %s1211
        %s1292 = scalar_lea.sflag [#allocation3], %s1291
        %1294 = dma.done %s1292, 16
        %s1295 = sadd.s32 21, %s1211
        %s1296 = scalar_lea.sflag [#allocation3], %s1295
        %1298 = dma.done %s1296, 16
        %s1299 = sadd.s32 22, %s1211
        %s1300 = scalar_lea.sflag [#allocation3], %s1299
        %1302 = dma.done %s1300, 16
        %s1303 = sadd.s32 23, %s1211
        %s1304 = scalar_lea.sflag [#allocation3], %s1303
        %1306 = dma.done %s1304, 16
        %s1307 = sadd.s32 24, %s1211
        %s1308 = scalar_lea.sflag [#allocation3], %s1307
        %1310 = dma.done %s1308, 16
        %s1311 = sadd.s32 25, %s1211
        %s1312 = scalar_lea.sflag [#allocation3], %s1311
        %1314 = dma.done %s1312, 16
        %s1315 = sadd.s32 26, %s1211
        %s1316 = scalar_lea.sflag [#allocation3], %s1315
        %1318 = dma.done %s1316, 16
        %s1319 = sadd.s32 27, %s1211
        %s1320 = scalar_lea.sflag [#allocation3], %s1319
        %1322 = dma.done %s1320, 16
        %s1323 = sadd.s32 28, %s1211
        %s1324 = scalar_lea.sflag [#allocation3], %s1323
        %1326 = dma.done %s1324, 16
        %s1327 = sadd.s32 29, %s1211
        %s1328 = scalar_lea.sflag [#allocation3], %s1327
        %1330 = dma.done %s1328, 16
        %s1331 = sadd.s32 30, %s1211
        %s1332 = scalar_lea.sflag [#allocation3], %s1331
        %1334 = dma.done %s1332, 16
        %s1335 = sadd.s32 31, %s1211
        %s1336 = scalar_lea.sflag [#allocation3], %s1335
        %1338 = dma.done %s1336, 16
        %s1339 = scalar_lea.vmem [#allocation2], %s1211
        %v1340 = vld [vmem:[%s1339] sm:$0xff]
        %v1341 = vld [vmem:[%s1339 + $0x8] sm:$0xff]
        %v1342 = vld [vmem:[%s1339 + $0x10] sm:$0xff]
        %v1343 = vld [vmem:[%s1339 + $0x18] sm:$0xff]
        %1344 = vst [vmem:[%s65] sm:$0xff] %v1340
        %1345 = vst [vmem:[%s65 + $0x8] sm:$0xff] %v1341
        %1346 = vst [vmem:[%s65 + $0x10] sm:$0xff] %v1342
        %1347 = vst [vmem:[%s65 + $0x18] sm:$0xff] %v1343
        %s1348 = sand.u32 %s38, 1
        %s1349 = scalar_lea.sflag [#allocation7], %s1348
        %s1350 = sand.u32 %s38, 1
        %s1351 = smul.addr %s1350, 32
        %s1352 = scalar_lea.vmem [#allocation6], %s1351
        // Predicated region
        $region277: #{tpu_custom_call.1} parent=11 // pred_check
          %p1353 = pneg %p44
        $region278: #{tpu_custom_call.1} parent=11 // pred_check_branch
          %1355 = sbr.rel (%p1353) target = $region280
        $region279: #{tpu_custom_call.1} parent=11 // pred_region
          %s1356 = smul.u32 %s21, 3
          %s1357 = sadd.s32 %s1356, %s22
          %s1358 = smul.u32 4, %s1357
          %s1360 = ssub.s32 512, 512
          %1361 = vsyncadd %s1349, %s1360
          %s1362 = smul.addr %s1358, 128
          %s1363 = scalar_lea.hbm %s2, %s1362
          %s1364 = sshll.u32 %s1352, 4
          %s1365 = int_to_ptr.vmem [resolvable:$true] %s1364
          %1370 = dma.vmem_to_hbm [thread:$0]  %s1365, 512, %s1363, %s1349, 128, 128, 8
        $region280: #{tpu_custom_call.1} parent=11 // pred_fallthru
          _
      $region12: #{tpu_custom_call.1} parent=5 // pred_fallthru
        _
      %p1371 = scmp.le.s32.totalorder 1, %s15
      // Predicated region
      $region281: #{tpu_custom_call.1} parent=5 // pred_check
        %p1372 = pneg %p1371
      $region282: #{tpu_custom_call.1} parent=5 // pred_check_branch
        %1374 = sbr.rel (%p1372) target = $region284
      $region283: #{tpu_custom_call.1} parent=5 // pred_region
        %s1375 = ssub.s32 %s15, 1
        // Predicated region
        $region285: #{tpu_custom_call.1} parent=283 // pred_check
          %p1376 = pneg %p50
        $region286: #{tpu_custom_call.1} parent=283 // pred_check_branch
          %1378 = sbr.rel (%p1376) target = $region288
        $region287: #{tpu_custom_call.1} parent=283 // pred_region
          %s1379 = sand.u32 %s41, 1
          %s1380 = scalar_lea.sflag [#allocation7], %s1379
          %s1381 = sand.u32 %s41, 1
          %s1382 = smul.addr %s1381, 32
          %s1383 = scalar_lea.vmem [#allocation6], %s1382
          %1384 = dma.done %s1380, 512
        $region288: #{tpu_custom_call.1} parent=283 // pred_fallthru
          _
      $region284: #{tpu_custom_call.1} parent=5 // pred_fallthru
        _
    $region6: #{tpu_custom_call.1} parent=1 // loop_footer
      %s19 = sadd.s32 1, %s15
    $region7: #{tpu_custom_call.1} parent=1 // loop_footer_branch
      %14 = sbr.rel target = $region3
    $region8: #{tpu_custom_call.1} parent=1 // loop_exit
      _
    %1385 = vsyncpa [#allocation7], 1
    %s1386 = scalar_lea.sflag [#allocation7], 1
    %1387 = vsyncpa %s1386, 1
  %1388 = vsyncmov [#allocation3]
  %s1389 = vpop.sfrf %1388
  %p1390 = scmp.eq.s32.totalorder %s1389, 0
  %p1391 = pneg %p1390
  %1393 = shalt.err (%p1391)
  %s1394 = scalar_lea.sflag [#allocation3], 1
  %1395 = vsyncmov %s1394
  %s1396 = vpop.sfrf %1395
  %p1397 = scmp.eq.s32.totalorder %s1396, 0
  %p1398 = pneg %p1397
  %1400 = shalt.err (%p1398)
  %s1401 = scalar_lea.sflag [#allocation3], 2
  %1402 = vsyncmov %s1401
  %s1403 = vpop.sfrf %1402
  %p1404 = scmp.eq.s32.totalorder %s1403, 0
  %p1405 = pneg %p1404
  %1407 = shalt.err (%p1405)
  %s1408 = scalar_lea.sflag [#allocation3], 3
  %1409 = vsyncmov %s1408
  %s1410 = vpop.sfrf %1409
  %p1411 = scmp.eq.s32.totalorder %s1410, 0
  %p1412 = pneg %p1411
  %1414 = shalt.err (%p1412)
  %s1415 = scalar_lea.sflag [#allocation3], 4
  %1416 = vsyncmov %s1415
  %s1417 = vpop.sfrf %1416
  %p1418 = scmp.eq.s32.totalorder %s1417, 0
  %p1419 = pneg %p1418
  %1421 = shalt.err (%p1419)
  %s1422 = scalar_lea.sflag [#allocation3], 5
  %1423 = vsyncmov %s1422
  %s1424 = vpop.sfrf %1423
  %p1425 = scmp.eq.s32.totalorder %s1424, 0
  %p1426 = pneg %p1425
  %1428 = shalt.err (%p1426)
  %s1429 = scalar_lea.sflag [#allocation3], 6
  %1430 = vsyncmov %s1429
  %s1431 = vpop.sfrf %1430
  %p1432 = scmp.eq.s32.totalorder %s1431, 0
  %p1433 = pneg %p1432
  %1435 = shalt.err (%p1433)
  %s1436 = scalar_lea.sflag [#allocation3], 7
  %1437 = vsyncmov %s1436
  %s1438 = vpop.sfrf %1437
  %p1439 = scmp.eq.s32.totalorder %s1438, 0
  %p1440 = pneg %p1439
  %1442 = shalt.err (%p1440)
  %s1443 = scalar_lea.sflag [#allocation3], 8
  %1444 = vsyncmov %s1443
  %s1445 = vpop.sfrf %1444
  %p1446 = scmp.eq.s32.totalorder %s1445, 0
  %p1447 = pneg %p1446
  %1449 = shalt.err (%p1447)
  %s1450 = scalar_lea.sflag [#allocation3], 9
  %1451 = vsyncmov %s1450
  %s1452 = vpop.sfrf %1451
  %p1453 = scmp.eq.s32.totalorder %s1452, 0
  %p1454 = pneg %p1453
  %1456 = shalt.err (%p1454)
  %s1457 = scalar_lea.sflag [#allocation3], 10
  %1458 = vsyncmov %s1457
  %s1459 = vpop.sfrf %1458
  %p1460 = scmp.eq.s32.totalorder %s1459, 0
  %p1461 = pneg %p1460
  %1463 = shalt.err (%p1461)
  %s1464 = scalar_lea.sflag [#allocation3], 11
  %1465 = vsyncmov %s1464
  %s1466 = vpop.sfrf %1465
  %p1467 = scmp.eq.s32.totalorder %s1466, 0
  %p1468 = pneg %p1467
  %1470 = shalt.err (%p1468)
  %s1471 = scalar_lea.sflag [#allocation3], 12
  %1472 = vsyncmov %s1471
  %s1473 = vpop.sfrf %1472
  %p1474 = scmp.eq.s32.totalorder %s1473, 0
  %p1475 = pneg %p1474
  %1477 = shalt.err (%p1475)
  %s1478 = scalar_lea.sflag [#allocation3], 13
  %1479 = vsyncmov %s1478
  %s1480 = vpop.sfrf %1479
  %p1481 = scmp.eq.s32.totalorder %s1480, 0
  %p1482 = pneg %p1481
  %1484 = shalt.err (%p1482)
  %s1485 = scalar_lea.sflag [#allocation3], 14
  %1486 = vsyncmov %s1485
  %s1487 = vpop.sfrf %1486
  %p1488 = scmp.eq.s32.totalorder %s1487, 0
  %p1489 = pneg %p1488
  %1491 = shalt.err (%p1489)
  %s1492 = scalar_lea.sflag [#allocation3], 15
  %1493 = vsyncmov %s1492
  %s1494 = vpop.sfrf %1493
  %p1495 = scmp.eq.s32.totalorder %s1494, 0
  %p1496 = pneg %p1495
  %1498 = shalt.err (%p1496)
  %s1499 = scalar_lea.sflag [#allocation3], 16
  %1500 = vsyncmov %s1499
  %s1501 = vpop.sfrf %1500
  %p1502 = scmp.eq.s32.totalorder %s1501, 0
  %p1503 = pneg %p1502
  %1505 = shalt.err (%p1503)
  %s1506 = scalar_lea.sflag [#allocation3], 17
  %1507 = vsyncmov %s1506
  %s1508 = vpop.sfrf %1507
  %p1509 = scmp.eq.s32.totalorder %s1508, 0
  %p1510 = pneg %p1509
  %1512 = shalt.err (%p1510)
  %s1513 = scalar_lea.sflag [#allocation3], 18
  %1514 = vsyncmov %s1513
  %s1515 = vpop.sfrf %1514
  %p1516 = scmp.eq.s32.totalorder %s1515, 0
  %p1517 = pneg %p1516
  %1519 = shalt.err (%p1517)
  %s1520 = scalar_lea.sflag [#allocation3], 19
  %1521 = vsyncmov %s1520
  %s1522 = vpop.sfrf %1521
  %p1523 = scmp.eq.s32.totalorder %s1522, 0
  %p1524 = pneg %p1523
  %1526 = shalt.err (%p1524)
  %s1527 = scalar_lea.sflag [#allocation3], 20
  %1528 = vsyncmov %s1527
  %s1529 = vpop.sfrf %1528
  %p1530 = scmp.eq.s32.totalorder %s1529, 0
  %p1531 = pneg %p1530
  %1533 = shalt.err (%p1531)
  %s1534 = scalar_lea.sflag [#allocation3], 21
  %1535 = vsyncmov %s1534
  %s1536 = vpop.sfrf %1535
  %p1537 = scmp.eq.s32.totalorder %s1536, 0
  %p1538 = pneg %p1537
  %1540 = shalt.err (%p1538)
  %s1541 = scalar_lea.sflag [#allocation3], 22
  %1542 = vsyncmov %s1541
  %s1543 = vpop.sfrf %1542
  %p1544 = scmp.eq.s32.totalorder %s1543, 0
  %p1545 = pneg %p1544
  %1547 = shalt.err (%p1545)
  %s1548 = scalar_lea.sflag [#allocation3], 23
  %1549 = vsyncmov %s1548
  %s1550 = vpop.sfrf %1549
  %p1551 = scmp.eq.s32.totalorder %s1550, 0
  %p1552 = pneg %p1551
  %1554 = shalt.err (%p1552)
  %s1555 = scalar_lea.sflag [#allocation3], 24
  %1556 = vsyncmov %s1555
  %s1557 = vpop.sfrf %1556
  %p1558 = scmp.eq.s32.totalorder %s1557, 0
  %p1559 = pneg %p1558
  %1561 = shalt.err (%p1559)
  %s1562 = scalar_lea.sflag [#allocation3], 25
  %1563 = vsyncmov %s1562
  %s1564 = vpop.sfrf %1563
  %p1565 = scmp.eq.s32.totalorder %s1564, 0
  %p1566 = pneg %p1565
  %1568 = shalt.err (%p1566)
  %s1569 = scalar_lea.sflag [#allocation3], 26
  %1570 = vsyncmov %s1569
  %s1571 = vpop.sfrf %1570
  %p1572 = scmp.eq.s32.totalorder %s1571, 0
  %p1573 = pneg %p1572
  %1575 = shalt.err (%p1573)
  %s1576 = scalar_lea.sflag [#allocation3], 27
  %1577 = vsyncmov %s1576
  %s1578 = vpop.sfrf %1577
  %p1579 = scmp.eq.s32.totalorder %s1578, 0
  %p1580 = pneg %p1579
  %1582 = shalt.err (%p1580)
  %s1583 = scalar_lea.sflag [#allocation3], 28
  %1584 = vsyncmov %s1583
  %s1585 = vpop.sfrf %1584
  %p1586 = scmp.eq.s32.totalorder %s1585, 0
  %p1587 = pneg %p1586
  %1589 = shalt.err (%p1587)
  %s1590 = scalar_lea.sflag [#allocation3], 29
  %1591 = vsyncmov %s1590
  %s1592 = vpop.sfrf %1591
  %p1593 = scmp.eq.s32.totalorder %s1592, 0
  %p1594 = pneg %p1593
  %1596 = shalt.err (%p1594)
  %s1597 = scalar_lea.sflag [#allocation3], 30
  %1598 = vsyncmov %s1597
  %s1599 = vpop.sfrf %1598
  %p1600 = scmp.eq.s32.totalorder %s1599, 0
  %p1601 = pneg %p1600
  %1603 = shalt.err (%p1601)
  %s1604 = scalar_lea.sflag [#allocation3], 31
  %1605 = vsyncmov %s1604
  %s1606 = vpop.sfrf %1605
  %p1607 = scmp.eq.s32.totalorder %s1606, 0
  %p1608 = pneg %p1607
  %1610 = shalt.err (%p1608)
  %s1611 = scalar_lea.sflag [#allocation3], 32
  %1612 = vsyncmov %s1611
  %s1613 = vpop.sfrf %1612
  %p1614 = scmp.eq.s32.totalorder %s1613, 0
  %p1615 = pneg %p1614
  %1617 = shalt.err (%p1615)
  %s1618 = scalar_lea.sflag [#allocation3], 33
  %1619 = vsyncmov %s1618
  %s1620 = vpop.sfrf %1619
  %p1621 = scmp.eq.s32.totalorder %s1620, 0
  %p1622 = pneg %p1621
  %1624 = shalt.err (%p1622)
  %s1625 = scalar_lea.sflag [#allocation3], 34
  %1626 = vsyncmov %s1625
  %s1627 = vpop.sfrf %1626
  %p1628 = scmp.eq.s32.totalorder %s1627, 0
  %p1629 = pneg %p1628
  %1631 = shalt.err (%p1629)
  %s1632 = scalar_lea.sflag [#allocation3], 35
  %1633 = vsyncmov %s1632
  %s1634 = vpop.sfrf %1633
  %p1635 = scmp.eq.s32.totalorder %s1634, 0
  %p1636 = pneg %p1635
  %1638 = shalt.err (%p1636)
  %s1639 = scalar_lea.sflag [#allocation3], 36
  %1640 = vsyncmov %s1639
  %s1641 = vpop.sfrf %1640
  %p1642 = scmp.eq.s32.totalorder %s1641, 0
  %p1643 = pneg %p1642
  %1645 = shalt.err (%p1643)
  %s1646 = scalar_lea.sflag [#allocation3], 37
  %1647 = vsyncmov %s1646
  %s1648 = vpop.sfrf %1647
  %p1649 = scmp.eq.s32.totalorder %s1648, 0
  %p1650 = pneg %p1649
  %1652 = shalt.err (%p1650)
  %s1653 = scalar_lea.sflag [#allocation3], 38
  %1654 = vsyncmov %s1653
  %s1655 = vpop.sfrf %1654
  %p1656 = scmp.eq.s32.totalorder %s1655, 0
  %p1657 = pneg %p1656
  %1659 = shalt.err (%p1657)
  %s1660 = scalar_lea.sflag [#allocation3], 39
  %1661 = vsyncmov %s1660
  %s1662 = vpop.sfrf %1661
  %p1663 = scmp.eq.s32.totalorder %s1662, 0
  %p1664 = pneg %p1663
  %1666 = shalt.err (%p1664)
  %s1667 = scalar_lea.sflag [#allocation3], 40
  %1668 = vsyncmov %s1667
  %s1669 = vpop.sfrf %1668
  %p1670 = scmp.eq.s32.totalorder %s1669, 0
  %p1671 = pneg %p1670
  %1673 = shalt.err (%p1671)
  %s1674 = scalar_lea.sflag [#allocation3], 41
  %1675 = vsyncmov %s1674
  %s1676 = vpop.sfrf %1675
  %p1677 = scmp.eq.s32.totalorder %s1676, 0
  %p1678 = pneg %p1677
  %1680 = shalt.err (%p1678)
  %s1681 = scalar_lea.sflag [#allocation3], 42
  %1682 = vsyncmov %s1681
  %s1683 = vpop.sfrf %1682
  %p1684 = scmp.eq.s32.totalorder %s1683, 0
  %p1685 = pneg %p1684
  %1687 = shalt.err (%p1685)
  %s1688 = scalar_lea.sflag [#allocation3], 43
  %1689 = vsyncmov %s1688
  %s1690 = vpop.sfrf %1689
  %p1691 = scmp.eq.s32.totalorder %s1690, 0
  %p1692 = pneg %p1691
  %1694 = shalt.err (%p1692)
  %s1695 = scalar_lea.sflag [#allocation3], 44
  %1696 = vsyncmov %s1695
  %s1697 = vpop.sfrf %1696
  %p1698 = scmp.eq.s32.totalorder %s1697, 0
  %p1699 = pneg %p1698
  %1701 = shalt.err (%p1699)
  %s1702 = scalar_lea.sflag [#allocation3], 45
  %1703 = vsyncmov %s1702
  %s1704 = vpop.sfrf %1703
  %p1705 = scmp.eq.s32.totalorder %s1704, 0
  %p1706 = pneg %p1705
  %1708 = shalt.err (%p1706)
  %s1709 = scalar_lea.sflag [#allocation3], 46
  %1710 = vsyncmov %s1709
  %s1711 = vpop.sfrf %1710
  %p1712 = scmp.eq.s32.totalorder %s1711, 0
  %p1713 = pneg %p1712
  %1715 = shalt.err (%p1713)
  %s1716 = scalar_lea.sflag [#allocation3], 47
  %1717 = vsyncmov %s1716
  %s1718 = vpop.sfrf %1717
  %p1719 = scmp.eq.s32.totalorder %s1718, 0
  %p1720 = pneg %p1719
  %1722 = shalt.err (%p1720)
  %s1723 = scalar_lea.sflag [#allocation3], 48
  %1724 = vsyncmov %s1723
  %s1725 = vpop.sfrf %1724
  %p1726 = scmp.eq.s32.totalorder %s1725, 0
  %p1727 = pneg %p1726
  %1729 = shalt.err (%p1727)
  %s1730 = scalar_lea.sflag [#allocation3], 49
  %1731 = vsyncmov %s1730
  %s1732 = vpop.sfrf %1731
  %p1733 = scmp.eq.s32.totalorder %s1732, 0
  %p1734 = pneg %p1733
  %1736 = shalt.err (%p1734)
  %s1737 = scalar_lea.sflag [#allocation3], 50
  %1738 = vsyncmov %s1737
  %s1739 = vpop.sfrf %1738
  %p1740 = scmp.eq.s32.totalorder %s1739, 0
  %p1741 = pneg %p1740
  %1743 = shalt.err (%p1741)
  %s1744 = scalar_lea.sflag [#allocation3], 51
  %1745 = vsyncmov %s1744
  %s1746 = vpop.sfrf %1745
  %p1747 = scmp.eq.s32.totalorder %s1746, 0
  %p1748 = pneg %p1747
  %1750 = shalt.err (%p1748)
  %s1751 = scalar_lea.sflag [#allocation3], 52
  %1752 = vsyncmov %s1751
  %s1753 = vpop.sfrf %1752
  %p1754 = scmp.eq.s32.totalorder %s1753, 0
  %p1755 = pneg %p1754
  %1757 = shalt.err (%p1755)
  %s1758 = scalar_lea.sflag [#allocation3], 53
  %1759 = vsyncmov %s1758
  %s1760 = vpop.sfrf %1759
  %p1761 = scmp.eq.s32.totalorder %s1760, 0
  %p1762 = pneg %p1761
  %1764 = shalt.err (%p1762)
  %s1765 = scalar_lea.sflag [#allocation3], 54
  %1766 = vsyncmov %s1765
  %s1767 = vpop.sfrf %1766
  %p1768 = scmp.eq.s32.totalorder %s1767, 0
  %p1769 = pneg %p1768
  %1771 = shalt.err (%p1769)
  %s1772 = scalar_lea.sflag [#allocation3], 55
  %1773 = vsyncmov %s1772
  %s1774 = vpop.sfrf %1773
  %p1775 = scmp.eq.s32.totalorder %s1774, 0
  %p1776 = pneg %p1775
  %1778 = shalt.err (%p1776)
  %s1779 = scalar_lea.sflag [#allocation3], 56
  %1780 = vsyncmov %s1779
  %s1781 = vpop.sfrf %1780
  %p1782 = scmp.eq.s32.totalorder %s1781, 0
  %p1783 = pneg %p1782
  %1785 = shalt.err (%p1783)
  %s1786 = scalar_lea.sflag [#allocation3], 57
  %1787 = vsyncmov %s1786
  %s1788 = vpop.sfrf %1787
  %p1789 = scmp.eq.s32.totalorder %s1788, 0
  %p1790 = pneg %p1789
  %1792 = shalt.err (%p1790)
  %s1793 = scalar_lea.sflag [#allocation3], 58
  %1794 = vsyncmov %s1793
  %s1795 = vpop.sfrf %1794
  %p1796 = scmp.eq.s32.totalorder %s1795, 0
  %p1797 = pneg %p1796
  %1799 = shalt.err (%p1797)
  %s1800 = scalar_lea.sflag [#allocation3], 59
  %1801 = vsyncmov %s1800
  %s1802 = vpop.sfrf %1801
  %p1803 = scmp.eq.s32.totalorder %s1802, 0
  %p1804 = pneg %p1803
  %1806 = shalt.err (%p1804)
  %s1807 = scalar_lea.sflag [#allocation3], 60
  %1808 = vsyncmov %s1807
  %s1809 = vpop.sfrf %1808
  %p1810 = scmp.eq.s32.totalorder %s1809, 0
  %p1811 = pneg %p1810
  %1813 = shalt.err (%p1811)
  %s1814 = scalar_lea.sflag [#allocation3], 61
  %1815 = vsyncmov %s1814
  %s1816 = vpop.sfrf %1815
  %p1817 = scmp.eq.s32.totalorder %s1816, 0
  %p1818 = pneg %p1817
  %1820 = shalt.err (%p1818)
  %s1821 = scalar_lea.sflag [#allocation3], 62
  %1822 = vsyncmov %s1821
  %s1823 = vpop.sfrf %1822
  %p1824 = scmp.eq.s32.totalorder %s1823, 0
  %p1825 = pneg %p1824
  %1827 = shalt.err (%p1825)
  %s1828 = scalar_lea.sflag [#allocation3], 63
  %1829 = vsyncmov %s1828
  %s1830 = vpop.sfrf %1829
  %p1831 = scmp.eq.s32.totalorder %s1830, 0
  %p1832 = pneg %p1831
  %1834 = shalt.err (%p1832)

</llo_original>
